<compile_context>
chip_gen: v6e
topology: v6e:2x2x1
jax: 0.10.0
libtpu: 0.0.40
codegen_flags: <defaults>
</compile_context>

<pallas_src>
import numpy as np
import jax
import jax.numpy as jnp
from jax.experimental import pallas as pl
from jax.experimental.pallas import tpu as pltpu

EPS = 1e-5


# ---------------------------------------------------------------------------
# Fused Pallas kernel: whole LeNet forward, all intermediates stay in VMEM/vregs
# ---------------------------------------------------------------------------
def lenet_fused_kernel(x1_ref, c1_ref, c1t_ref, gb1_ref,
                       rsel_ref, wband_ref, bn2_ref, c2_ref, c2t_ref,
                       ep_ref, pp_ref, ssel_ref, w1_ref, fb1_ref,
                       w2_ref, fb2_ref, w3_ref, fb3_ref, o_ref):
    f32 = jnp.float32

    # ---- Stage 1: BN1 (batch stats) -> ReLU -> 2x2 max-pool -----------------
    # x1: (4, N*14, 14*8); axis0 = 2x2 window elem, rows = (n, y_pool), lanes = (x_pool, c)
    x1 = x1_ref[...]
    c1 = c1_ref[...]        # (112, 8)  one-hot: lane -> channel (reduce direction)
    c1t = c1t_ref[...]      # (8, 112)  one-hot: channel -> lane (broadcast direction)
    gb1 = gb1_ref[...]      # (2, 112)  [gamma, beta] pre-broadcast to lanes
    cnt1 = float(x1.shape[0] * x1.shape[1] * (x1.shape[2] // 8))   # = N*28*28 per channel
    s1 = jnp.sum(jnp.sum(x1, axis=0), axis=0, keepdims=True)                   # (1, 112)
    mean1 = jnp.dot(s1, c1, preferred_element_type=f32) / cnt1                 # (1, 8)
    mean1_l = jnp.dot(mean1, c1t, preferred_element_type=f32)                  # (1, 112)
    d1 = x1 - mean1_l
    ss1 = jnp.sum(jnp.sum(d1 * d1, axis=0), axis=0, keepdims=True)             # centered var
    var1 = jnp.dot(ss1, c1, preferred_element_type=f32) / cnt1
    var1_l = jnp.dot(var1, c1t, preferred_element_type=f32)
    y1 = jnp.maximum(d1 * jax.lax.rsqrt(var1_l + EPS) * gb1[0:1, :] + gb1[1:2, :], 0.0)
    h1 = jnp.max(y1, axis=0)                                                   # (N*14, 112)

    # ---- Stage 2: Conv2d(8->16, 5x5) as banded matmuls + bias + BN2 + ReLU ---
    # rsel[ky]: (N*10, N*14) row selector (y shift), wband[ky]: (112, 160) banded weights
    n_ky = rsel_ref.shape[0]
    rows_out = rsel_ref.shape[1]                       # N*10
    acc = jnp.zeros((rows_out, wband_ref.shape[2]), f32)
    for ky in range(n_ky):
        rows = jnp.dot(rsel_ref[ky], h1, preferred_element_type=f32)           # (N*10, 112)
        acc = acc + jnp.dot(rows, wband_ref[ky], preferred_element_type=f32)   # (N*10, 160)
    bn2 = bn2_ref[...]                                 # (3, 160) [conv bias, gamma2, beta2]
    acc = acc + bn2[0:1, :]
    c2 = c2_ref[...]                                   # (160, 16)
    c2t = c2t_ref[...]                                 # (16, 160)
    cnt2 = float(rows_out * 10)                        # = N*10*10 per channel
    s2 = jnp.sum(acc, axis=0, keepdims=True)
    mean2 = jnp.dot(s2, c2, preferred_element_type=f32) / cnt2
    mean2_l = jnp.dot(mean2, c2t, preferred_element_type=f32)
    d2 = acc - mean2_l
    var2 = jnp.dot(jnp.sum(d2 * d2, axis=0, keepdims=True), c2,
                   preferred_element_type=f32) / cnt2
    var2_l = jnp.dot(var2, c2t, preferred_element_type=f32)
    h2 = jnp.maximum(d2 * jax.lax.rsqrt(var2_l + EPS) * bn2[1:2, :] + bn2[2:3, :], 0.0)

    # ---- Stage 3: 2x2 max-pool via constant selector matmuls ----------------
    # y-pairs: rows 2yp / 2yp+1;  x-pairs: lane groups 2xp / 2xp+1 (16 lanes per x)
    ym = jnp.maximum(jnp.dot(ep_ref[0], h2, preferred_element_type=f32),
                     jnp.dot(ep_ref[1], h2, preferred_element_type=f32))       # (N*5, 160)
    xm = jnp.maximum(jnp.dot(ym, pp_ref[0], preferred_element_type=f32),
                     jnp.dot(ym, pp_ref[1], preferred_element_type=f32))       # (N*5, 80)

    # ---- Stage 4: FC1 (flatten folded into per-yp weights) -> FC2 -> FC3 -----
    n_batch = ssel_ref.shape[1]
    z1 = jnp.zeros((n_batch, w1_ref.shape[2]), f32)
    for yp in range(ssel_ref.shape[0]):
        rows = jnp.dot(ssel_ref[yp], xm, preferred_element_type=f32)           # (N, 80)
        z1 = z1 + jnp.dot(rows, w1_ref[yp], preferred_element_type=f32)        # (N, 120)
    hfc1 = jnp.maximum(z1 + fb1_ref[...], 0.0)
    hfc2 = jnp.maximum(jnp.dot(hfc1, w2_ref[...], preferred_element_type=f32)
                       + fb2_ref[...], 0.0)
    z = jnp.dot(hfc2, w3_ref[...], preferred_element_type=f32) + fb3_ref[...]  # (N, 10)
    m = jnp.max(z, axis=1, keepdims=True)
    sft = z - m
    lse = jnp.log(jnp.sum(jnp.exp(sft), axis=1, keepdims=True))
    o_ref[...] = sft - lse


# ---------------------------------------------------------------------------
# pallas_call wrapper (single grid step; whole-array blocks fit easily in VMEM)
# ---------------------------------------------------------------------------
def _zero_map(nd):
    return lambda i, _nd=nd: (0,) * _nd


def _call(kernel, out_shape, *args):
    in_specs = [pl.BlockSpec(a.shape, _zero_map(a.ndim)) for a in args]
    out_specs = pl.BlockSpec(out_shape.shape, _zero_map(len(out_shape.shape)))
    bytes_accessed = int(sum(int(np.prod(a.shape)) * a.dtype.itemsize for a in args)
                         + int(np.prod(out_shape.shape)) * np.dtype(out_shape.dtype).itemsize)
    return pl.pallas_call(
        kernel,
        out_shape=out_shape,
        grid=(1,),
        in_specs=in_specs,
        out_specs=out_specs,
        compiler_params=pltpu.CompilerParams(dimension_semantics=("arbitrary",)),
        cost_estimate=pl.CostEstimate(flops=6_000_000, transcendentals=600,
                                      bytes_accessed=bytes_accessed),
    )(*args)


# ---------------------------------------------------------------------------
# Host-side constant selector / band matrices (built once; 0/1 one-hots)
# ---------------------------------------------------------------------------
def _selectors(N):
    C1 = np.tile(np.eye(8, dtype=np.float32), (14, 1))      # (112, 8)  lane -> channel
    C2 = np.tile(np.eye(16, dtype=np.float32), (10, 1))     # (160, 16)
    Tband = np.zeros((5, 14, 10), np.float32)                # kx band indicator
    for kx in range(5):
        Tband[kx, np.arange(10) + kx, np.arange(10)] = 1.0
    rsel = np.zeros((5, N * 10, N * 14), np.float32)         # conv y-shift row selectors
    for ky in range(5):
        for n in range(N):
            rsel[ky, n * 10 + np.arange(10), n * 14 + np.arange(10) + ky] = 1.0
    ep = np.zeros((2, N * 5, N * 10), np.float32)            # pool2 y-pair row selectors
    for dy in range(2):
        for n in range(N):
            ep[dy, n * 5 + np.arange(5), n * 10 + 2 * np.arange(5) + dy] = 1.0
    pp = np.zeros((2, 160, 80), np.float32)                  # pool2 x-pair lane selectors
    for dx in range(2):
        for xp in range(5):
            pp[dx, (2 * xp + dx) * 16 + np.arange(16), xp * 16 + np.arange(16)] = 1.0
    ssel = np.zeros((5, N, N * 5), np.float32)               # fc1 yp-row gather selectors
    for yp in range(5):
        ssel[yp, np.arange(N), np.arange(N) * 5 + yp] = 1.0
    return C1, C2, Tband, rsel, ep, pp, ssel


# ---------------------------------------------------------------------------
# Parameters (deterministic synthetic init, PyTorch shapes)
# ---------------------------------------------------------------------------
def init_params(key):
    ks = jax.random.split(key, 12)
    p = {}
    p["bn1_g"] = 1.0 + 0.1 * jax.random.normal(ks[0], (8,), jnp.float32)
    p["bn1_b"] = 0.1 * jax.random.normal(ks[1], (8,), jnp.float32)
    p["conv2_w"] = 0.1 * jax.random.normal(ks[2], (16, 8, 5, 5), jnp.float32)   # OIHW
    p["conv2_b"] = 0.1 * jax.random.normal(ks[3], (16,), jnp.float32)
    p["bn2_g"] = 1.0 + 0.1 * jax.random.normal(ks[4], (16,), jnp.float32)
    p["bn2_b"] = 0.1 * jax.random.normal(ks[5], (16,), jnp.float32)
    p["fc1_w"] = 0.05 * jax.random.normal(ks[6], (120, 400), jnp.float32)       # (out, in)
    p["fc1_b"] = 0.05 * jax.random.normal(ks[7], (120,), jnp.float32)
    p["fc2_w"] = 0.05 * jax.random.normal(ks[8], (84, 120), jnp.float32)
    p["fc2_b"] = 0.05 * jax.random.normal(ks[9], (84,), jnp.float32)
    p["fc3_w"] = 0.05 * jax.random.normal(ks[10], (10, 84), jnp.float32)
    p["fc3_b"] = 0.05 * jax.random.normal(ks[11], (10,), jnp.float32)
    return p


# ---------------------------------------------------------------------------
# Forward pass: one transpose of the input + tiny parameter prep, then one kernel
# ---------------------------------------------------------------------------
def lenet_forward(x_nchw, p):
    N = x_nchw.shape[0]
    C1, C2, Tband, rsel, ep, pp, ssel = _selectors(N)

    # Input layout: (window elem, n*14+y, x*8+c)  -- 112 real lanes.
    x = x_nchw.astype(jnp.float32)
    x1 = x.reshape(N, 8, 14, 2, 14, 2).transpose(3, 5, 0, 2, 4, 1).reshape(4, N * 14, 112)

    # Parameter prep (tiny, hoistable): lane-broadcast BN params, banded conv weights,
    # fc1 weights re-indexed so the PyTorch NCHW flatten order needs no runtime transpose.
    gb1 = jnp.stack([jnp.tile(p["bn1_g"], 14), jnp.tile(p["bn1_b"], 14)])        # (2, 112)
    Wc = jnp.transpose(p["conv2_w"], (2, 3, 1, 0))                               # (ky,kx,c,co)
    wband = jnp.einsum("bio,abcd->aicod", jnp.asarray(Tband), Wc).reshape(5, 112, 160)
    bn2 = jnp.stack([jnp.tile(p["conv2_b"], 10),
                     jnp.tile(p["bn2_g"], 10),
                     jnp.tile(p["bn2_b"], 10)])                                  # (3, 160)
    w1sel = p["fc1_w"].reshape(120, 16, 5, 5).transpose(2, 3, 1, 0).reshape(5, 80, 120)

    args = (x1,
            jnp.asarray(C1), jnp.asarray(np.ascontiguousarray(C1.T)), gb1,
            jnp.asarray(rsel), wband, bn2,
            jnp.asarray(C2), jnp.asarray(np.ascontiguousarray(C2.T)),
            jnp.asarray(ep), jnp.asarray(pp), jnp.asarray(ssel),
            w1sel, p["fc1_b"].reshape(1, 120),
            p["fc2_w"].T, p["fc2_b"].reshape(1, 84),
            p["fc3_w"].T, p["fc3_b"].reshape(1, 10))
    return _call(lenet_fused_kernel, jax.ShapeDtypeStruct((N, 10), jnp.float32), *args)


# ---------------------------------------------------------------------------
# Pure-JAX reference (for correctness check)
# ---------------------------------------------------------------------------
def lenet_reference(x_nchw, p):
    hp = jax.lax.Precision.HIGHEST

    def bn(x, g, b):  # training-mode batch stats, NCHW
        mean = jnp.mean(x, axis=(0, 2, 3), keepdims=True)
        var = jnp.mean((x - mean) ** 2, axis=(0, 2, 3), keepdims=True)
        return (x - mean) * jax.lax.rsqrt(var + EPS) * g.reshape(1, -1, 1, 1) \
            + b.reshape(1, -1, 1, 1)

    def maxpool2x2(x):  # NCHW
        N, C, H, W = x.shape
        return jnp.max(x.reshape(N, C, H // 2, 2, W // 2, 2), axis=(3, 5))

    x = maxpool2x2(jnp.maximum(bn(x_nchw, p["bn1_g"], p["bn1_b"]), 0.0))
    x = jax.lax.conv_general_dilated(x, p["conv2_w"], (1, 1), "VALID",
                                     dimension_numbers=("NCHW", "OIHW", "NCHW"),
                                     precision=hp) + p["conv2_b"].reshape(1, -1, 1, 1)
    x = maxpool2x2(jnp.maximum(bn(x, p["bn2_g"], p["bn2_b"]), 0.0))
    x = x.reshape(x.shape[0], -1)
    x = jnp.maximum(jnp.dot(x, p["fc1_w"].T, precision=hp) + p["fc1_b"], 0.0)
    x = jnp.maximum(jnp.dot(x, p["fc2_w"].T, precision=hp) + p["fc2_b"], 0.0)
    x = jnp.dot(x, p["fc3_w"].T, precision=hp) + p["fc3_b"]
    return jax.nn.log_softmax(x, axis=1)


if __name__ == "__main__":
    key = jax.random.PRNGKey(0)
    kx, kp = jax.random.split(key)
    # Input implied by conv2(8->16) and fc1 (16*5*5 = 400): (N, 8, 28, 28); N = 2.
    x = jax.random.normal(kx, (2, 8, 28, 28), jnp.float32)
    params = init_params(kp)

    fwd = jax.jit(lenet_forward)
    out = jax.block_until_ready(fwd(x, params))
    ref = jax.block_until_ready(lenet_reference(x, params))

    assert out.shape == (2, 10), out.shape
    assert bool(jnp.all(jnp.isfinite(out)))
    assert bool(jnp.allclose(out, ref, atol=2e-3, rtol=2e-3)), (out, ref)
    print("KERNEL_OK")
</pallas_src>

<mosaic_0001>
module attributes {stable_mosaic.version = 11 : i64} {
  func.func @lenet_fused_kernel(%arg0: i32, %arg1: memref<4x28x112xf32, #tpu.memory_space<vmem>>, %arg2: memref<112x8xf32, #tpu.memory_space<vmem>>, %arg3: memref<8x112xf32, #tpu.memory_space<vmem>>, %arg4: memref<2x112xf32, #tpu.memory_space<vmem>>, %arg5: memref<5x20x28xf32, #tpu.memory_space<vmem>>, %arg6: memref<5x112x160xf32, #tpu.memory_space<vmem>>, %arg7: memref<3x160xf32, #tpu.memory_space<vmem>>, %arg8: memref<160x16xf32, #tpu.memory_space<vmem>>, %arg9: memref<16x160xf32, #tpu.memory_space<vmem>>, %arg10: memref<2x10x20xf32, #tpu.memory_space<vmem>>, %arg11: memref<2x160x80xf32, #tpu.memory_space<vmem>>, %arg12: memref<5x2x10xf32, #tpu.memory_space<vmem>>, %arg13: memref<5x80x120xf32, #tpu.memory_space<vmem>>, %arg14: memref<1x120xf32, #tpu.memory_space<vmem>>, %arg15: memref<120x84xf32, #tpu.memory_space<vmem>>, %arg16: memref<1x84xf32, #tpu.memory_space<vmem>>, %arg17: memref<84x10xf32, #tpu.memory_space<vmem>>, %arg18: memref<1x10xf32, #tpu.memory_space<vmem>>, %arg19: memref<2x10xf32, #tpu.memory_space<vmem>>) attributes {dimension_semantics = [#tpu.dimension_semantics<arbitrary>], iteration_bounds = array<i64: 1>, scalar_prefetch = 0 : i64, scratch_operands = 0 : i64, tpu.core_type = #tpu.core_type<tc>, window_params = [{pipeline_mode = #tpu.pipeline_mode<synchronous>, transform_indices = @transform_0, window_bounds = array<i64: 4, 28, 112>}, {pipeline_mode = #tpu.pipeline_mode<synchronous>, transform_indices = @transform_1, window_bounds = array<i64: 112, 8>}, {pipeline_mode = #tpu.pipeline_mode<synchronous>, transform_indices = @transform_2, window_bounds = array<i64: 8, 112>}, {pipeline_mode = #tpu.pipeline_mode<synchronous>, transform_indices = @transform_3, window_bounds = array<i64: 2, 112>}, {pipeline_mode = #tpu.pipeline_mode<synchronous>, transform_indices = @transform_4, window_bounds = array<i64: 5, 20, 28>}, {pipeline_mode = #tpu.pipeline_mode<synchronous>, transform_indices = @transform_5, window_bounds = array<i64: 5, 112, 160>}, {pipeline_mode = #tpu.pipeline_mode<synchronous>, transform_indices = @transform_6, window_bounds = array<i64: 3, 160>}, {pipeline_mode = #tpu.pipeline_mode<synchronous>, transform_indices = @transform_7, window_bounds = array<i64: 160, 16>}, {pipeline_mode = #tpu.pipeline_mode<synchronous>, transform_indices = @transform_8, window_bounds = array<i64: 16, 160>}, {pipeline_mode = #tpu.pipeline_mode<synchronous>, transform_indices = @transform_9, window_bounds = array<i64: 2, 10, 20>}, {pipeline_mode = #tpu.pipeline_mode<synchronous>, transform_indices = @transform_10, window_bounds = array<i64: 2, 160, 80>}, {pipeline_mode = #tpu.pipeline_mode<synchronous>, transform_indices = @transform_11, window_bounds = array<i64: 5, 2, 10>}, {pipeline_mode = #tpu.pipeline_mode<synchronous>, transform_indices = @transform_12, window_bounds = array<i64: 5, 80, 120>}, {pipeline_mode = #tpu.pipeline_mode<synchronous>, transform_indices = @transform_13, window_bounds = array<i64: 1, 120>}, {pipeline_mode = #tpu.pipeline_mode<synchronous>, transform_indices = @transform_14, window_bounds = array<i64: 120, 84>}, {pipeline_mode = #tpu.pipeline_mode<synchronous>, transform_indices = @transform_15, window_bounds = array<i64: 1, 84>}, {pipeline_mode = #tpu.pipeline_mode<synchronous>, transform_indices = @transform_16, window_bounds = array<i64: 84, 10>}, {pipeline_mode = #tpu.pipeline_mode<synchronous>, transform_indices = @transform_17, window_bounds = array<i64: 1, 10>}, {pipeline_mode = #tpu.pipeline_mode<synchronous>, transform_indices = @transform_18, window_bounds = array<i64: 2, 10>}]} {
    %c0 = arith.constant 0 : index
    %c0_0 = arith.constant 0 : index
    %c0_1 = arith.constant 0 : index
    %0 = vector.load %arg1[%c0, %c0_0, %c0_1] : memref<4x28x112xf32, #tpu.memory_space<vmem>>, vector<4x28x112xf32>
    %c0_2 = arith.constant 0 : index
    %c0_3 = arith.constant 0 : index
    %1 = vector.load %arg2[%c0_2, %c0_3] : memref<112x8xf32, #tpu.memory_space<vmem>>, vector<112x8xf32>
    %c0_4 = arith.constant 0 : index
    %c0_5 = arith.constant 0 : index
    %2 = vector.load %arg3[%c0_4, %c0_5] : memref<8x112xf32, #tpu.memory_space<vmem>>, vector<8x112xf32>
    %c0_6 = arith.constant 0 : index
    %c0_7 = arith.constant 0 : index
    %3 = vector.load %arg4[%c0_6, %c0_7] : memref<2x112xf32, #tpu.memory_space<vmem>>, vector<2x112xf32>
    %cst = arith.constant dense<0.000000e+00> : vector<28x112xf32>
    %4 = vector.multi_reduction <add>, %0, %cst [0] : vector<4x28x112xf32> to vector<28x112xf32>
    %cst_8 = arith.constant dense<0.000000e+00> : vector<112xf32>
    %5 = vector.multi_reduction <add>, %4, %cst_8 [0] : vector<28x112xf32> to vector<112xf32>
    %6 = vector.shape_cast %5 : vector<112xf32> to vector<1x112xf32>
    %cst_9 = arith.constant dense<0.000000e+00> : vector<1x8xf32>
    %7 = tpu.matmul %6, %1, %cst_9 {dimension_numbers = #tpu.dot_dimension_numbers<[1], [0], [0], [1], [0, 0, 1, 1], [], []>} : vector<1x112xf32>, vector<112x8xf32>, vector<1x8xf32> -> vector<1x8xf32>
    %cst_10 = arith.constant 1.568000e+03 : f32
    %8 = vector.broadcast %cst_10 : f32 to vector<1x8xf32>
    %9 = arith.divf %7, %8 : vector<1x8xf32>
    %cst_11 = arith.constant dense<0.000000e+00> : vector<1x112xf32>
    %10 = tpu.matmul %9, %2, %cst_11 {dimension_numbers = #tpu.dot_dimension_numbers<[1], [0], [0], [1], [0, 0, 1, 1], [], []>} : vector<1x8xf32>, vector<8x112xf32>, vector<1x112xf32> -> vector<1x112xf32>
    %11 = vector.shape_cast %10 : vector<1x112xf32> to vector<1x1x112xf32>
    %12 = vector.broadcast %11 : vector<1x1x112xf32> to vector<4x28x112xf32>
    %13 = arith.subf %0, %12 : vector<4x28x112xf32>
    %14 = arith.mulf %13, %13 : vector<4x28x112xf32>
    %cst_12 = arith.constant dense<0.000000e+00> : vector<28x112xf32>
    %15 = vector.multi_reduction <add>, %14, %cst_12 [0] : vector<4x28x112xf32> to vector<28x112xf32>
    %cst_13 = arith.constant dense<0.000000e+00> : vector<112xf32>
    %16 = vector.multi_reduction <add>, %15, %cst_13 [0] : vector<28x112xf32> to vector<112xf32>
    %17 = vector.shape_cast %16 : vector<112xf32> to vector<1x112xf32>
    %cst_14 = arith.constant dense<0.000000e+00> : vector<1x8xf32>
    %18 = tpu.matmul %17, %1, %cst_14 {dimension_numbers = #tpu.dot_dimension_numbers<[1], [0], [0], [1], [0, 0, 1, 1], [], []>} : vector<1x112xf32>, vector<112x8xf32>, vector<1x8xf32> -> vector<1x8xf32>
    %cst_15 = arith.constant 1.568000e+03 : f32
    %19 = vector.broadcast %cst_15 : f32 to vector<1x8xf32>
    %20 = arith.divf %18, %19 : vector<1x8xf32>
    %cst_16 = arith.constant dense<0.000000e+00> : vector<1x112xf32>
    %21 = tpu.matmul %20, %2, %cst_16 {dimension_numbers = #tpu.dot_dimension_numbers<[1], [0], [0], [1], [0, 0, 1, 1], [], []>} : vector<1x8xf32>, vector<8x112xf32>, vector<1x112xf32> -> vector<1x112xf32>
    %cst_17 = arith.constant 9.99999974E-6 : f32
    %22 = vector.broadcast %cst_17 : f32 to vector<1x112xf32>
    %23 = arith.addf %21, %22 : vector<1x112xf32>
    %24 = math.rsqrt %23 : vector<1x112xf32>
    %25 = vector.shape_cast %24 : vector<1x112xf32> to vector<1x1x112xf32>
    %26 = vector.broadcast %25 : vector<1x1x112xf32> to vector<4x28x112xf32>
    %27 = arith.mulf %13, %26 : vector<4x28x112xf32>
    %28 = vector.extract_strided_slice %3 {offsets = [0, 0], sizes = [1, 112], strides = [1, 1]} : vector<2x112xf32> to vector<1x112xf32>
    %29 = vector.shape_cast %28 : vector<1x112xf32> to vector<1x1x112xf32>
    %30 = vector.broadcast %29 : vector<1x1x112xf32> to vector<4x28x112xf32>
    %31 = arith.mulf %27, %30 : vector<4x28x112xf32>
    %32 = vector.extract_strided_slice %3 {offsets = [1, 0], sizes = [1, 112], strides = [1, 1]} : vector<2x112xf32> to vector<1x112xf32>
    %33 = vector.shape_cast %32 : vector<1x112xf32> to vector<1x1x112xf32>
    %34 = vector.broadcast %33 : vector<1x1x112xf32> to vector<4x28x112xf32>
    %35 = arith.addf %31, %34 : vector<4x28x112xf32>
    %cst_18 = arith.constant 0.000000e+00 : f32
    %36 = vector.broadcast %cst_18 : f32 to vector<4x28x112xf32>
    %37 = arith.maximumf %35, %36 : vector<4x28x112xf32>
    %cst_19 = arith.constant dense<0xFF800000> : vector<28x112xf32>
    %38 = vector.multi_reduction <maximumf>, %37, %cst_19 [0] : vector<4x28x112xf32> to vector<28x112xf32>
    %cst_20 = arith.constant 0.000000e+00 : f32
    %39 = vector.broadcast %cst_20 : f32 to vector<20x160xf32>
    %c0_21 = arith.constant 0 : index
    %c0_22 = arith.constant 0 : index
    %c0_23 = arith.constant 0 : index
    %40 = vector.load %arg5[%c0_21, %c0_22, %c0_23] : memref<5x20x28xf32, #tpu.memory_space<vmem>>, vector<1x20x28xf32>
    %41 = vector.shape_cast %40 : vector<1x20x28xf32> to vector<20x28xf32>
    %cst_24 = arith.constant dense<0.000000e+00> : vector<20x112xf32>
    %42 = tpu.matmul %41, %38, %cst_24 {dimension_numbers = #tpu.dot_dimension_numbers<[1], [0], [0], [1], [0, 0, 1, 1], [], []>} : vector<20x28xf32>, vector<28x112xf32>, vector<20x112xf32> -> vector<20x112xf32>
    %c0_25 = arith.constant 0 : index
    %c0_26 = arith.constant 0 : index
    %c0_27 = arith.constant 0 : index
    %43 = vector.load %arg6[%c0_25, %c0_26, %c0_27] : memref<5x112x160xf32, #tpu.memory_space<vmem>>, vector<1x112x160xf32>
    %44 = vector.shape_cast %43 : vector<1x112x160xf32> to vector<112x160xf32>
    %cst_28 = arith.constant dense<0.000000e+00> : vector<20x160xf32>
    %45 = tpu.matmul %42, %44, %cst_28 {dimension_numbers = #tpu.dot_dimension_numbers<[1], [0], [0], [1], [0, 0, 1, 1], [], []>} : vector<20x112xf32>, vector<112x160xf32>, vector<20x160xf32> -> vector<20x160xf32>
    %46 = arith.addf %39, %45 : vector<20x160xf32>
    %c1 = arith.constant 1 : index
    %c0_29 = arith.constant 0 : index
    %c0_30 = arith.constant 0 : index
    %47 = vector.load %arg5[%c1, %c0_29, %c0_30] : memref<5x20x28xf32, #tpu.memory_space<vmem>>, vector<1x20x28xf32>
    %48 = vector.shape_cast %47 : vector<1x20x28xf32> to vector<20x28xf32>
    %cst_31 = arith.constant dense<0.000000e+00> : vector<20x112xf32>
    %49 = tpu.matmul %48, %38, %cst_31 {dimension_numbers = #tpu.dot_dimension_numbers<[1], [0], [0], [1], [0, 0, 1, 1], [], []>} : vector<20x28xf32>, vector<28x112xf32>, vector<20x112xf32> -> vector<20x112xf32>
    %c1_32 = arith.constant 1 : index
    %c0_33 = arith.constant 0 : index
    %c0_34 = arith.constant 0 : index
    %50 = vector.load %arg6[%c1_32, %c0_33, %c0_34] : memref<5x112x160xf32, #tpu.memory_space<vmem>>, vector<1x112x160xf32>
    %51 = vector.shape_cast %50 : vector<1x112x160xf32> to vector<112x160xf32>
    %cst_35 = arith.constant dense<0.000000e+00> : vector<20x160xf32>
    %52 = tpu.matmul %49, %51, %cst_35 {dimension_numbers = #tpu.dot_dimension_numbers<[1], [0], [0], [1], [0, 0, 1, 1], [], []>} : vector<20x112xf32>, vector<112x160xf32>, vector<20x160xf32> -> vector<20x160xf32>
    %53 = arith.addf %46, %52 : vector<20x160xf32>
    %c2 = arith.constant 2 : index
    %c0_36 = arith.constant 0 : index
    %c0_37 = arith.constant 0 : index
    %54 = vector.load %arg5[%c2, %c0_36, %c0_37] : memref<5x20x28xf32, #tpu.memory_space<vmem>>, vector<1x20x28xf32>
    %55 = vector.shape_cast %54 : vector<1x20x28xf32> to vector<20x28xf32>
    %cst_38 = arith.constant dense<0.000000e+00> : vector<20x112xf32>
    %56 = tpu.matmul %55, %38, %cst_38 {dimension_numbers = #tpu.dot_dimension_numbers<[1], [0], [0], [1], [0, 0, 1, 1], [], []>} : vector<20x28xf32>, vector<28x112xf32>, vector<20x112xf32> -> vector<20x112xf32>
    %c2_39 = arith.constant 2 : index
    %c0_40 = arith.constant 0 : index
    %c0_41 = arith.constant 0 : index
    %57 = vector.load %arg6[%c2_39, %c0_40, %c0_41] : memref<5x112x160xf32, #tpu.memory_space<vmem>>, vector<1x112x160xf32>
    %58 = vector.shape_cast %57 : vector<1x112x160xf32> to vector<112x160xf32>
    %cst_42 = arith.constant dense<0.000000e+00> : vector<20x160xf32>
    %59 = tpu.matmul %56, %58, %cst_42 {dimension_numbers = #tpu.dot_dimension_numbers<[1], [0], [0], [1], [0, 0, 1, 1], [], []>} : vector<20x112xf32>, vector<112x160xf32>, vector<20x160xf32> -> vector<20x160xf32>
    %60 = arith.addf %53, %59 : vector<20x160xf32>
    %c3 = arith.constant 3 : index
    %c0_43 = arith.constant 0 : index
    %c0_44 = arith.constant 0 : index
    %61 = vector.load %arg5[%c3, %c0_43, %c0_44] : memref<5x20x28xf32, #tpu.memory_space<vmem>>, vector<1x20x28xf32>
    %62 = vector.shape_cast %61 : vector<1x20x28xf32> to vector<20x28xf32>
    %cst_45 = arith.constant dense<0.000000e+00> : vector<20x112xf32>
    %63 = tpu.matmul %62, %38, %cst_45 {dimension_numbers = #tpu.dot_dimension_numbers<[1], [0], [0], [1], [0, 0, 1, 1], [], []>} : vector<20x28xf32>, vector<28x112xf32>, vector<20x112xf32> -> vector<20x112xf32>
    %c3_46 = arith.constant 3 : index
    %c0_47 = arith.constant 0 : index
    %c0_48 = arith.constant 0 : index
    %64 = vector.load %arg6[%c3_46, %c0_47, %c0_48] : memref<5x112x160xf32, #tpu.memory_space<vmem>>, vector<1x112x160xf32>
    %65 = vector.shape_cast %64 : vector<1x112x160xf32> to vector<112x160xf32>
    %cst_49 = arith.constant dense<0.000000e+00> : vector<20x160xf32>
    %66 = tpu.matmul %63, %65, %cst_49 {dimension_numbers = #tpu.dot_dimension_numbers<[1], [0], [0], [1], [0, 0, 1, 1], [], []>} : vector<20x112xf32>, vector<112x160xf32>, vector<20x160xf32> -> vector<20x160xf32>
    %67 = arith.addf %60, %66 : vector<20x160xf32>
    %c4 = arith.constant 4 : index
    %c0_50 = arith.constant 0 : index
    %c0_51 = arith.constant 0 : index
    %68 = vector.load %arg5[%c4, %c0_50, %c0_51] : memref<5x20x28xf32, #tpu.memory_space<vmem>>, vector<1x20x28xf32>
    %69 = vector.shape_cast %68 : vector<1x20x28xf32> to vector<20x28xf32>
    %cst_52 = arith.constant dense<0.000000e+00> : vector<20x112xf32>
    %70 = tpu.matmul %69, %38, %cst_52 {dimension_numbers = #tpu.dot_dimension_numbers<[1], [0], [0], [1], [0, 0, 1, 1], [], []>} : vector<20x28xf32>, vector<28x112xf32>, vector<20x112xf32> -> vector<20x112xf32>
    %c4_53 = arith.constant 4 : index
    %c0_54 = arith.constant 0 : index
    %c0_55 = arith.constant 0 : index
    %71 = vector.load %arg6[%c4_53, %c0_54, %c0_55] : memref<5x112x160xf32, #tpu.memory_space<vmem>>, vector<1x112x160xf32>
    %72 = vector.shape_cast %71 : vector<1x112x160xf32> to vector<112x160xf32>
    %cst_56 = arith.constant dense<0.000000e+00> : vector<20x160xf32>
    %73 = tpu.matmul %70, %72, %cst_56 {dimension_numbers = #tpu.dot_dimension_numbers<[1], [0], [0], [1], [0, 0, 1, 1], [], []>} : vector<20x112xf32>, vector<112x160xf32>, vector<20x160xf32> -> vector<20x160xf32>
    %74 = arith.addf %67, %73 : vector<20x160xf32>
    %c0_57 = arith.constant 0 : index
    %c0_58 = arith.constant 0 : index
    %75 = vector.load %arg7[%c0_57, %c0_58] : memref<3x160xf32, #tpu.memory_space<vmem>>, vector<3x160xf32>
    %76 = vector.extract_strided_slice %75 {offsets = [0, 0], sizes = [1, 160], strides = [1, 1]} : vector<3x160xf32> to vector<1x160xf32>
    %77 = vector.broadcast %76 : vector<1x160xf32> to vector<20x160xf32>
    %78 = arith.addf %74, %77 : vector<20x160xf32>
    %c0_59 = arith.constant 0 : index
    %c0_60 = arith.constant 0 : index
    %79 = vector.load %arg8[%c0_59, %c0_60] : memref<160x16xf32, #tpu.memory_space<vmem>>, vector<160x16xf32>
    %c0_61 = arith.constant 0 : index
    %c0_62 = arith.constant 0 : index
    %80 = vector.load %arg9[%c0_61, %c0_62] : memref<16x160xf32, #tpu.memory_space<vmem>>, vector<16x160xf32>
    %cst_63 = arith.constant dense<0.000000e+00> : vector<160xf32>
    %81 = vector.multi_reduction <add>, %78, %cst_63 [0] : vector<20x160xf32> to vector<160xf32>
    %82 = vector.shape_cast %81 : vector<160xf32> to vector<1x160xf32>
    %cst_64 = arith.constant dense<0.000000e+00> : vector<1x16xf32>
    %83 = tpu.matmul %82, %79, %cst_64 {dimension_numbers = #tpu.dot_dimension_numbers<[1], [0], [0], [1], [0, 0, 1, 1], [], []>} : vector<1x160xf32>, vector<160x16xf32>, vector<1x16xf32> -> vector<1x16xf32>
    %cst_65 = arith.constant 2.000000e+02 : f32
    %84 = vector.broadcast %cst_65 : f32 to vector<1x16xf32>
    %85 = arith.divf %83, %84 : vector<1x16xf32>
    %cst_66 = arith.constant dense<0.000000e+00> : vector<1x160xf32>
    %86 = tpu.matmul %85, %80, %cst_66 {dimension_numbers = #tpu.dot_dimension_numbers<[1], [0], [0], [1], [0, 0, 1, 1], [], []>} : vector<1x16xf32>, vector<16x160xf32>, vector<1x160xf32> -> vector<1x160xf32>
    %87 = vector.broadcast %86 : vector<1x160xf32> to vector<20x160xf32>
    %88 = arith.subf %78, %87 : vector<20x160xf32>
    %89 = arith.mulf %88, %88 : vector<20x160xf32>
    %cst_67 = arith.constant dense<0.000000e+00> : vector<160xf32>
    %90 = vector.multi_reduction <add>, %89, %cst_67 [0] : vector<20x160xf32> to vector<160xf32>
    %91 = vector.shape_cast %90 : vector<160xf32> to vector<1x160xf32>
    %cst_68 = arith.constant dense<0.000000e+00> : vector<1x16xf32>
    %92 = tpu.matmul %91, %79, %cst_68 {dimension_numbers = #tpu.dot_dimension_numbers<[1], [0], [0], [1], [0, 0, 1, 1], [], []>} : vector<1x160xf32>, vector<160x16xf32>, vector<1x16xf32> -> vector<1x16xf32>
    %cst_69 = arith.constant 2.000000e+02 : f32
    %93 = vector.broadcast %cst_69 : f32 to vector<1x16xf32>
    %94 = arith.divf %92, %93 : vector<1x16xf32>
    %cst_70 = arith.constant dense<0.000000e+00> : vector<1x160xf32>
    %95 = tpu.matmul %94, %80, %cst_70 {dimension_numbers = #tpu.dot_dimension_numbers<[1], [0], [0], [1], [0, 0, 1, 1], [], []>} : vector<1x16xf32>, vector<16x160xf32>, vector<1x160xf32> -> vector<1x160xf32>
    %cst_71 = arith.constant 9.99999974E-6 : f32
    %96 = vector.broadcast %cst_71 : f32 to vector<1x160xf32>
    %97 = arith.addf %95, %96 : vector<1x160xf32>
    %98 = math.rsqrt %97 : vector<1x160xf32>
    %99 = vector.broadcast %98 : vector<1x160xf32> to vector<20x160xf32>
    %100 = arith.mulf %88, %99 : vector<20x160xf32>
    %101 = vector.extract_strided_slice %75 {offsets = [1, 0], sizes = [1, 160], strides = [1, 1]} : vector<3x160xf32> to vector<1x160xf32>
    %102 = vector.broadcast %101 : vector<1x160xf32> to vector<20x160xf32>
    %103 = arith.mulf %100, %102 : vector<20x160xf32>
    %104 = vector.extract_strided_slice %75 {offsets = [2, 0], sizes = [1, 160], strides = [1, 1]} : vector<3x160xf32> to vector<1x160xf32>
    %105 = vector.broadcast %104 : vector<1x160xf32> to vector<20x160xf32>
    %106 = arith.addf %103, %105 : vector<20x160xf32>
    %cst_72 = arith.constant 0.000000e+00 : f32
    %107 = vector.broadcast %cst_72 : f32 to vector<20x160xf32>
    %108 = arith.maximumf %106, %107 : vector<20x160xf32>
    %c0_73 = arith.constant 0 : index
    %c0_74 = arith.constant 0 : index
    %c0_75 = arith.constant 0 : index
    %109 = vector.load %arg10[%c0_73, %c0_74, %c0_75] : memref<2x10x20xf32, #tpu.memory_space<vmem>>, vector<1x10x20xf32>
    %110 = vector.shape_cast %109 : vector<1x10x20xf32> to vector<10x20xf32>
    %cst_76 = arith.constant dense<0.000000e+00> : vector<10x160xf32>
    %111 = tpu.matmul %110, %108, %cst_76 {dimension_numbers = #tpu.dot_dimension_numbers<[1], [0], [0], [1], [0, 0, 1, 1], [], []>} : vector<10x20xf32>, vector<20x160xf32>, vector<10x160xf32> -> vector<10x160xf32>
    %c1_77 = arith.constant 1 : index
    %c0_78 = arith.constant 0 : index
    %c0_79 = arith.constant 0 : index
    %112 = vector.load %arg10[%c1_77, %c0_78, %c0_79] : memref<2x10x20xf32, #tpu.memory_space<vmem>>, vector<1x10x20xf32>
    %113 = vector.shape_cast %112 : vector<1x10x20xf32> to vector<10x20xf32>
    %cst_80 = arith.constant dense<0.000000e+00> : vector<10x160xf32>
    %114 = tpu.matmul %113, %108, %cst_80 {dimension_numbers = #tpu.dot_dimension_numbers<[1], [0], [0], [1], [0, 0, 1, 1], [], []>} : vector<10x20xf32>, vector<20x160xf32>, vector<10x160xf32> -> vector<10x160xf32>
    %115 = arith.maximumf %111, %114 : vector<10x160xf32>
    %c0_81 = arith.constant 0 : index
    %c0_82 = arith.constant 0 : index
    %c0_83 = arith.constant 0 : index
    %116 = vector.load %arg11[%c0_81, %c0_82, %c0_83] : memref<2x160x80xf32, #tpu.memory_space<vmem>>, vector<1x160x80xf32>
    %117 = vector.shape_cast %116 : vector<1x160x80xf32> to vector<160x80xf32>
    %cst_84 = arith.constant dense<0.000000e+00> : vector<10x80xf32>
    %118 = tpu.matmul %115, %117, %cst_84 {dimension_numbers = #tpu.dot_dimension_numbers<[1], [0], [0], [1], [0, 0, 1, 1], [], []>} : vector<10x160xf32>, vector<160x80xf32>, vector<10x80xf32> -> vector<10x80xf32>
    %c1_85 = arith.constant 1 : index
    %c0_86 = arith.constant 0 : index
    %c0_87 = arith.constant 0 : index
    %119 = vector.load %arg11[%c1_85, %c0_86, %c0_87] : memref<2x160x80xf32, #tpu.memory_space<vmem>>, vector<1x160x80xf32>
    %120 = vector.shape_cast %119 : vector<1x160x80xf32> to vector<160x80xf32>
    %cst_88 = arith.constant dense<0.000000e+00> : vector<10x80xf32>
    %121 = tpu.matmul %115, %120, %cst_88 {dimension_numbers = #tpu.dot_dimension_numbers<[1], [0], [0], [1], [0, 0, 1, 1], [], []>} : vector<10x160xf32>, vector<160x80xf32>, vector<10x80xf32> -> vector<10x80xf32>
    %122 = arith.maximumf %118, %121 : vector<10x80xf32>
    %cst_89 = arith.constant 0.000000e+00 : f32
    %123 = vector.broadcast %cst_89 : f32 to vector<2x120xf32>
    %c0_90 = arith.constant 0 : index
    %c0_91 = arith.constant 0 : index
    %c0_92 = arith.constant 0 : index
    %124 = vector.load %arg12[%c0_90, %c0_91, %c0_92] : memref<5x2x10xf32, #tpu.memory_space<vmem>>, vector<1x2x10xf32>
    %125 = vector.shape_cast %124 : vector<1x2x10xf32> to vector<2x10xf32>
    %cst_93 = arith.constant dense<0.000000e+00> : vector<2x80xf32>
    %126 = tpu.matmul %125, %122, %cst_93 {dimension_numbers = #tpu.dot_dimension_numbers<[1], [0], [0], [1], [0, 0, 1, 1], [], []>} : vector<2x10xf32>, vector<10x80xf32>, vector<2x80xf32> -> vector<2x80xf32>
    %c0_94 = arith.constant 0 : index
    %c0_95 = arith.constant 0 : index
    %c0_96 = arith.constant 0 : index
    %127 = vector.load %arg13[%c0_94, %c0_95, %c0_96] : memref<5x80x120xf32, #tpu.memory_space<vmem>>, vector<1x80x120xf32>
    %128 = vector.shape_cast %127 : vector<1x80x120xf32> to vector<80x120xf32>
    %cst_97 = arith.constant dense<0.000000e+00> : vector<2x120xf32>
    %129 = tpu.matmul %126, %128, %cst_97 {dimension_numbers = #tpu.dot_dimension_numbers<[1], [0], [0], [1], [0, 0, 1, 1], [], []>} : vector<2x80xf32>, vector<80x120xf32>, vector<2x120xf32> -> vector<2x120xf32>
    %130 = arith.addf %123, %129 : vector<2x120xf32>
    %c1_98 = arith.constant 1 : index
    %c0_99 = arith.constant 0 : index
    %c0_100 = arith.constant 0 : index
    %131 = vector.load %arg12[%c1_98, %c0_99, %c0_100] : memref<5x2x10xf32, #tpu.memory_space<vmem>>, vector<1x2x10xf32>
    %132 = vector.shape_cast %131 : vector<1x2x10xf32> to vector<2x10xf32>
    %cst_101 = arith.constant dense<0.000000e+00> : vector<2x80xf32>
    %133 = tpu.matmul %132, %122, %cst_101 {dimension_numbers = #tpu.dot_dimension_numbers<[1], [0], [0], [1], [0, 0, 1, 1], [], []>} : vector<2x10xf32>, vector<10x80xf32>, vector<2x80xf32> -> vector<2x80xf32>
    %c1_102 = arith.constant 1 : index
    %c0_103 = arith.constant 0 : index
    %c0_104 = arith.constant 0 : index
    %134 = vector.load %arg13[%c1_102, %c0_103, %c0_104] : memref<5x80x120xf32, #tpu.memory_space<vmem>>, vector<1x80x120xf32>
    %135 = vector.shape_cast %134 : vector<1x80x120xf32> to vector<80x120xf32>
    %cst_105 = arith.constant dense<0.000000e+00> : vector<2x120xf32>
    %136 = tpu.matmul %133, %135, %cst_105 {dimension_numbers = #tpu.dot_dimension_numbers<[1], [0], [0], [1], [0, 0, 1, 1], [], []>} : vector<2x80xf32>, vector<80x120xf32>, vector<2x120xf32> -> vector<2x120xf32>
    %137 = arith.addf %130, %136 : vector<2x120xf32>
    %c2_106 = arith.constant 2 : index
    %c0_107 = arith.constant 0 : index
    %c0_108 = arith.constant 0 : index
    %138 = vector.load %arg12[%c2_106, %c0_107, %c0_108] : memref<5x2x10xf32, #tpu.memory_space<vmem>>, vector<1x2x10xf32>
    %139 = vector.shape_cast %138 : vector<1x2x10xf32> to vector<2x10xf32>
    %cst_109 = arith.constant dense<0.000000e+00> : vector<2x80xf32>
    %140 = tpu.matmul %139, %122, %cst_109 {dimension_numbers = #tpu.dot_dimension_numbers<[1], [0], [0], [1], [0, 0, 1, 1], [], []>} : vector<2x10xf32>, vector<10x80xf32>, vector<2x80xf32> -> vector<2x80xf32>
    %c2_110 = arith.constant 2 : index
    %c0_111 = arith.constant 0 : index
    %c0_112 = arith.constant 0 : index
    %141 = vector.load %arg13[%c2_110, %c0_111, %c0_112] : memref<5x80x120xf32, #tpu.memory_space<vmem>>, vector<1x80x120xf32>
    %142 = vector.shape_cast %141 : vector<1x80x120xf32> to vector<80x120xf32>
    %cst_113 = arith.constant dense<0.000000e+00> : vector<2x120xf32>
    %143 = tpu.matmul %140, %142, %cst_113 {dimension_numbers = #tpu.dot_dimension_numbers<[1], [0], [0], [1], [0, 0, 1, 1], [], []>} : vector<2x80xf32>, vector<80x120xf32>, vector<2x120xf32> -> vector<2x120xf32>
    %144 = arith.addf %137, %143 : vector<2x120xf32>
    %c3_114 = arith.constant 3 : index
    %c0_115 = arith.constant 0 : index
    %c0_116 = arith.constant 0 : index
    %145 = vector.load %arg12[%c3_114, %c0_115, %c0_116] : memref<5x2x10xf32, #tpu.memory_space<vmem>>, vector<1x2x10xf32>
    %146 = vector.shape_cast %145 : vector<1x2x10xf32> to vector<2x10xf32>
    %cst_117 = arith.constant dense<0.000000e+00> : vector<2x80xf32>
    %147 = tpu.matmul %146, %122, %cst_117 {dimension_numbers = #tpu.dot_dimension_numbers<[1], [0], [0], [1], [0, 0, 1, 1], [], []>} : vector<2x10xf32>, vector<10x80xf32>, vector<2x80xf32> -> vector<2x80xf32>
    %c3_118 = arith.constant 3 : index
    %c0_119 = arith.constant 0 : index
    %c0_120 = arith.constant 0 : index
    %148 = vector.load %arg13[%c3_118, %c0_119, %c0_120] : memref<5x80x120xf32, #tpu.memory_space<vmem>>, vector<1x80x120xf32>
    %149 = vector.shape_cast %148 : vector<1x80x120xf32> to vector<80x120xf32>
    %cst_121 = arith.constant dense<0.000000e+00> : vector<2x120xf32>
    %150 = tpu.matmul %147, %149, %cst_121 {dimension_numbers = #tpu.dot_dimension_numbers<[1], [0], [0], [1], [0, 0, 1, 1], [], []>} : vector<2x80xf32>, vector<80x120xf32>, vector<2x120xf32> -> vector<2x120xf32>
    %151 = arith.addf %144, %150 : vector<2x120xf32>
    %c4_122 = arith.constant 4 : index
    %c0_123 = arith.constant 0 : index
    %c0_124 = arith.constant 0 : index
    %152 = vector.load %arg12[%c4_122, %c0_123, %c0_124] : memref<5x2x10xf32, #tpu.memory_space<vmem>>, vector<1x2x10xf32>
    %153 = vector.shape_cast %152 : vector<1x2x10xf32> to vector<2x10xf32>
    %cst_125 = arith.constant dense<0.000000e+00> : vector<2x80xf32>
    %154 = tpu.matmul %153, %122, %cst_125 {dimension_numbers = #tpu.dot_dimension_numbers<[1], [0], [0], [1], [0, 0, 1, 1], [], []>} : vector<2x10xf32>, vector<10x80xf32>, vector<2x80xf32> -> vector<2x80xf32>
    %c4_126 = arith.constant 4 : index
    %c0_127 = arith.constant 0 : index
    %c0_128 = arith.constant 0 : index
    %155 = vector.load %arg13[%c4_126, %c0_127, %c0_128] : memref<5x80x120xf32, #tpu.memory_space<vmem>>, vector<1x80x120xf32>
    %156 = vector.shape_cast %155 : vector<1x80x120xf32> to vector<80x120xf32>
    %cst_129 = arith.constant dense<0.000000e+00> : vector<2x120xf32>
    %157 = tpu.matmul %154, %156, %cst_129 {dimension_numbers = #tpu.dot_dimension_numbers<[1], [0], [0], [1], [0, 0, 1, 1], [], []>} : vector<2x80xf32>, vector<80x120xf32>, vector<2x120xf32> -> vector<2x120xf32>
    %158 = arith.addf %151, %157 : vector<2x120xf32>
    %c0_130 = arith.constant 0 : index
    %c0_131 = arith.constant 0 : index
    %159 = vector.load %arg14[%c0_130, %c0_131] : memref<1x120xf32, #tpu.memory_space<vmem>>, vector<1x120xf32>
    %160 = vector.broadcast %159 : vector<1x120xf32> to vector<2x120xf32>
    %161 = arith.addf %158, %160 : vector<2x120xf32>
    %cst_132 = arith.constant 0.000000e+00 : f32
    %162 = vector.broadcast %cst_132 : f32 to vector<2x120xf32>
    %163 = arith.maximumf %161, %162 : vector<2x120xf32>
    %c0_133 = arith.constant 0 : index
    %c0_134 = arith.constant 0 : index
    %164 = vector.load %arg15[%c0_133, %c0_134] : memref<120x84xf32, #tpu.memory_space<vmem>>, vector<120x84xf32>
    %cst_135 = arith.constant dense<0.000000e+00> : vector<2x84xf32>
    %165 = tpu.matmul %163, %164, %cst_135 {dimension_numbers = #tpu.dot_dimension_numbers<[1], [0], [0], [1], [0, 0, 1, 1], [], []>} : vector<2x120xf32>, vector<120x84xf32>, vector<2x84xf32> -> vector<2x84xf32>
    %c0_136 = arith.constant 0 : index
    %c0_137 = arith.constant 0 : index
    %166 = vector.load %arg16[%c0_136, %c0_137] : memref<1x84xf32, #tpu.memory_space<vmem>>, vector<1x84xf32>
    %167 = vector.broadcast %166 : vector<1x84xf32> to vector<2x84xf32>
    %168 = arith.addf %165, %167 : vector<2x84xf32>
    %cst_138 = arith.constant 0.000000e+00 : f32
    %169 = vector.broadcast %cst_138 : f32 to vector<2x84xf32>
    %170 = arith.maximumf %168, %169 : vector<2x84xf32>
    %c0_139 = arith.constant 0 : index
    %c0_140 = arith.constant 0 : index
    %171 = vector.load %arg17[%c0_139, %c0_140] : memref<84x10xf32, #tpu.memory_space<vmem>>, vector<84x10xf32>
    %cst_141 = arith.constant dense<0.000000e+00> : vector<2x10xf32>
    %172 = tpu.matmul %170, %171, %cst_141 {dimension_numbers = #tpu.dot_dimension_numbers<[1], [0], [0], [1], [0, 0, 1, 1], [], []>} : vector<2x84xf32>, vector<84x10xf32>, vector<2x10xf32> -> vector<2x10xf32>
    %c0_142 = arith.constant 0 : index
    %c0_143 = arith.constant 0 : index
    %173 = vector.load %arg18[%c0_142, %c0_143] : memref<1x10xf32, #tpu.memory_space<vmem>>, vector<1x10xf32>
    %174 = vector.broadcast %173 : vector<1x10xf32> to vector<2x10xf32>
    %175 = arith.addf %172, %174 : vector<2x10xf32>
    %cst_144 = arith.constant dense<0xFF800000> : vector<2xf32>
    %176 = vector.multi_reduction <maximumf>, %175, %cst_144 [1] : vector<2x10xf32> to vector<2xf32>
    %177 = vector.shape_cast %176 : vector<2xf32> to vector<2x1xf32>
    %178 = vector.broadcast %177 : vector<2x1xf32> to vector<2x10xf32>
    %179 = arith.subf %175, %178 : vector<2x10xf32>
    %180 = math.exp %179 : vector<2x10xf32>
    %cst_145 = arith.constant dense<0.000000e+00> : vector<2xf32>
    %181 = vector.multi_reduction <add>, %180, %cst_145 [1] : vector<2x10xf32> to vector<2xf32>
    %182 = vector.shape_cast %181 : vector<2xf32> to vector<2x1xf32>
    %183 = math.log %182 : vector<2x1xf32>
    %184 = vector.broadcast %183 : vector<2x1xf32> to vector<2x10xf32>
    %185 = arith.subf %179, %184 : vector<2x10xf32>
    %c0_146 = arith.constant 0 : index
    %c0_147 = arith.constant 0 : index
    %186 = vector.load %arg19[%c0_146, %c0_147] : memref<2x10xf32, #tpu.memory_space<vmem>>, vector<2x10xf32>
    tpu.vector_store %arg19[%c0_146, %c0_147], %185 {strides = array<i32>} : memref<2x10xf32, #tpu.memory_space<vmem>>, vector<2x10xf32>,
    return
  }
  func.func @transform_0(%arg0: i32) -> (i32, i32, i32) {
    %c0_i32 = arith.constant 0 : i32
    %c0_i32_0 = arith.constant 0 : i32
    %c0_i32_1 = arith.constant 0 : i32
    %c0_i32_2 = arith.constant 0 : i32
    return %c0_i32, %c0_i32_0, %c0_i32_1 : i32, i32, i32
  }
  func.func @transform_1(%arg0: i32) -> (i32, i32) {
    %c0_i32 = arith.constant 0 : i32
    %c0_i32_0 = arith.constant 0 : i32
    %c0_i32_1 = arith.constant 0 : i32
    return %c0_i32, %c0_i32_0 : i32, i32
  }
  func.func @transform_2(%arg0: i32) -> (i32, i32) {
    %c0_i32 = arith.constant 0 : i32
    %c0_i32_0 = arith.constant 0 : i32
    %c0_i32_1 = arith.constant 0 : i32
    return %c0_i32, %c0_i32_0 : i32, i32
  }
  func.func @transform_3(%arg0: i32) -> (i32, i32) {
    %c0_i32 = arith.constant 0 : i32
    %c0_i32_0 = arith.constant 0 : i32
    %c0_i32_1 = arith.constant 0 : i32
    return %c0_i32, %c0_i32_0 : i32, i32
  }
  func.func @transform_4(%arg0: i32) -> (i32, i32, i32) {
    %c0_i32 = arith.constant 0 : i32
    %c0_i32_0 = arith.constant 0 : i32
    %c0_i32_1 = arith.constant 0 : i32
    %c0_i32_2 = arith.constant 0 : i32
    return %c0_i32, %c0_i32_0, %c0_i32_1 : i32, i32, i32
  }
  func.func @transform_5(%arg0: i32) -> (i32, i32, i32) {
    %c0_i32 = arith.constant 0 : i32
    %c0_i32_0 = arith.constant 0 : i32
    %c0_i32_1 = arith.constant 0 : i32
    %c0_i32_2 = arith.constant 0 : i32
    return %c0_i32, %c0_i32_0, %c0_i32_1 : i32, i32, i32
  }
  func.func @transform_6(%arg0: i32) -> (i32, i32) {
    %c0_i32 = arith.constant 0 : i32
    %c0_i32_0 = arith.constant 0 : i32
    %c0_i32_1 = arith.constant 0 : i32
    return %c0_i32, %c0_i32_0 : i32, i32
  }
  func.func @transform_7(%arg0: i32) -> (i32, i32) {
    %c0_i32 = arith.constant 0 : i32
    %c0_i32_0 = arith.constant 0 : i32
    %c0_i32_1 = arith.constant 0 : i32
    return %c0_i32, %c0_i32_0 : i32, i32
  }
  func.func @transform_8(%arg0: i32) -> (i32, i32) {
    %c0_i32 = arith.constant 0 : i32
    %c0_i32_0 = arith.constant 0 : i32
    %c0_i32_1 = arith.constant 0 : i32
    return %c0_i32, %c0_i32_0 : i32, i32
  }
  func.func @transform_9(%arg0: i32) -> (i32, i32, i32) {
    %c0_i32 = arith.constant 0 : i32
    %c0_i32_0 = arith.constant 0 : i32
    %c0_i32_1 = arith.constant 0 : i32
    %c0_i32_2 = arith.constant 0 : i32
    return %c0_i32, %c0_i32_0, %c0_i32_1 : i32, i32, i32
  }
  func.func @transform_10(%arg0: i32) -> (i32, i32, i32) {
    %c0_i32 = arith.constant 0 : i32
    %c0_i32_0 = arith.constant 0 : i32
    %c0_i32_1 = arith.constant 0 : i32
    %c0_i32_2 = arith.constant 0 : i32
    return %c0_i32, %c0_i32_0, %c0_i32_1 : i32, i32, i32
  }
  func.func @transform_11(%arg0: i32) -> (i32, i32, i32) {
    %c0_i32 = arith.constant 0 : i32
    %c0_i32_0 = arith.constant 0 : i32
    %c0_i32_1 = arith.constant 0 : i32
    %c0_i32_2 = arith.constant 0 : i32
    return %c0_i32, %c0_i32_0, %c0_i32_1 : i32, i32, i32
  }
  func.func @transform_12(%arg0: i32) -> (i32, i32, i32) {
    %c0_i32 = arith.constant 0 : i32
    %c0_i32_0 = arith.constant 0 : i32
    %c0_i32_1 = arith.constant 0 : i32
    %c0_i32_2 = arith.constant 0 : i32
    return %c0_i32, %c0_i32_0, %c0_i32_1 : i32, i32, i32
  }
  func.func @transform_13(%arg0: i32) -> (i32, i32) {
    %c0_i32 = arith.constant 0 : i32
    %c0_i32_0 = arith.constant 0 : i32
    %c0_i32_1 = arith.constant 0 : i32
    return %c0_i32, %c0_i32_0 : i32, i32
  }
  func.func @transform_14(%arg0: i32) -> (i32, i32) {
    %c0_i32 = arith.constant 0 : i32
    %c0_i32_0 = arith.constant 0 : i32
    %c0_i32_1 = arith.constant 0 : i32
    return %c0_i32, %c0_i32_0 : i32, i32
  }
  func.func @transform_15(%arg0: i32) -> (i32, i32) {
    %c0_i32 = arith.constant 0 : i32
    %c0_i32_0 = arith.constant 0 : i32
    %c0_i32_1 = arith.constant 0 : i32
    return %c0_i32, %c0_i32_0 : i32, i32
  }
  func.func @transform_16(%arg0: i32) -> (i32, i32) {
    %c0_i32 = arith.constant 0 : i32
    %c0_i32_0 = arith.constant 0 : i32
    %c0_i32_1 = arith.constant 0 : i32
    return %c0_i32, %c0_i32_0 : i32, i32
  }
  func.func @transform_17(%arg0: i32) -> (i32, i32) {
    %c0_i32 = arith.constant 0 : i32
    %c0_i32_0 = arith.constant 0 : i32
    %c0_i32_1 = arith.constant 0 : i32
    return %c0_i32, %c0_i32_0 : i32, i32
  }
  func.func @transform_18(%arg0: i32) -> (i32, i32) {
    %c0_i32 = arith.constant 0 : i32
    %c0_i32_0 = arith.constant 0 : i32
    %c0_i32_1 = arith.constant 0 : i32
    return %c0_i32, %c0_i32_0 : i32, i32
  }
}

</mosaic_0001>

<llo_original>
// kernel: tile.38
$region0: #{tile.38}
  #allocation0 [shape = 's32[1]{0}', space=sflag, size = 0x4, scoped, tag = 'scoped memory for tile.38']
  %s0 = inlined_call_operand.vmem [shape: f32[16], index: 0, kind: input, shape index: {}]
  %s1 = inlined_call_operand.vmem [shape: f32[10,16], index: 1, kind: output, shape index: {}]
  // Predicated region
  $region2: #{tile.38} parent=0 // pred_check
    _
  $region3: #{tile.38} parent=0 // pred_check_branch
    %3 = sbr.rel (0) target = $region5
  $region4: #{tile.38} parent=0 // pred_region
    _
  $region5: #{tile.38} parent=0 // pred_fallthru
    _
  %v4 = vld [vmem:[%s0] ss:$0 sm:$0xff]
  %5 = vst [vmem:[%s1] sm:$0xff] %v4
  %s6 = scalar_lea.vmem %s1, 8
  %7 = vst [vmem:[%s6] sm:$0xff] %v4

// kernel: tile.47
$region0: #{tile.47}
  %s0 = inlined_call_operand.vmem [shape: f32[10,16], index: 0, kind: input, shape index: {}]
  %s1 = inlined_call_operand.vmem [shape: f32[1,160], index: 1, kind: output, shape index: {}]
  $region1: #{tile.47} parent=0
    #allocation0 [shape = 'u8[8192]{0}', space=vmem, size = 0x2000, scoped, tag = 'scoped mem for output reshape']
    %s2 = smov 3
    %v3 = vld [vmem:[%s0] ss:$8 sm:%s2]
    %vm4 = vcmask 130048
    %5 = vst.msk [vmem:[#allocation0] ss:$8 sm:$0x3] %vm4, %v3
    %s6 = scalar_lea.vmem %s0, 7
    %v7 = vld [vmem:[%s6] sm:$0x1]
    %8 = vrot.lane.b32.xlu0 %v7, 112
    %v9 = vpop.permute.xlu0 %8
    %vm10 = vcmask 1048448
    %11 = vst.msk [vmem:[#allocation0] sm:$0x1] %vm10, %v9
    %s12 = scalar_lea.vmem %s0, 6
    %v13 = vld [vmem:[%s12] sm:$0x1]
    %14 = vrot.lane.b32.xlu0 %v13, 96
    %v15 = vpop.permute.xlu0 %14
    %vm16 = vcmask 917248
    %17 = vst.msk [vmem:[#allocation0] sm:$0x1] %vm16, %v15
    %s18 = scalar_lea.vmem %s0, 5
    %v19 = vld [vmem:[%s18] sm:$0x1]
    %20 = vrot.lane.b32.xlu0 %v19, 80
    %v21 = vpop.permute.xlu0 %20
    %vm22 = vcmask 786048
    %23 = vst.msk [vmem:[#allocation0] sm:$0x1] %vm22, %v21
    %s24 = scalar_lea.vmem %s0, 4
    %v25 = vld [vmem:[%s24] sm:$0x1]
    %26 = vrot.lane.b32.xlu0 %v25, 64
    %v27 = vpop.permute.xlu0 %26
    %vm28 = vcmask 654848
    %29 = vst.msk [vmem:[#allocation0] sm:$0x1] %vm28, %v27
    %s30 = scalar_lea.vmem %s0, 3
    %v31 = vld [vmem:[%s30] sm:$0x1]
    %32 = vrot.lane.b32.xlu0 %v31, 48
    %v33 = vpop.permute.xlu0 %32
    %vm34 = vcmask 523648
    %35 = vst.msk [vmem:[#allocation0] sm:$0x1] %vm34, %v33
    %s36 = scalar_lea.vmem %s0, 2
    %v37 = vld [vmem:[%s36] sm:$0x1]
    %38 = vrot.lane.b32.xlu0 %v37, 32
    %v39 = vpop.permute.xlu0 %38
    %vm40 = vcmask 392448
    %41 = vst.msk [vmem:[#allocation0] sm:$0x1] %vm40, %v39
    %s42 = scalar_lea.vmem %s0, 1
    %s43 = smov 3
    %v44 = vld [vmem:[%s42] ss:$8 sm:%s43]
    %45 = vrot.lane.b32.xlu0 %v44, 16
    %v46 = vpop.permute.xlu0 %45
    %vm47 = vcmask 261248
    %48 = vst.msk [vmem:[#allocation0] ss:$8 sm:$0x3] %vm47, %v46
    %s50 = sshll.u32 1, 1
    %s51 = ssub.s32 %s50, 1
    %v53 = vld [vmem:[#allocation0] sm:%s51]
    %s54 = sshll.u32 1, 1
    %s55 = ssub.s32 %s54, 1
    %56 = vst [vmem:[%s1] sm:%s55] %v53
    %s57 = scalar_lea.vmem [#allocation0], 8
    %v58 = vld [vmem:[%s57] sm:%s51]
    %s59 = sshll.u32 1, 1
    %s60 = ssub.s32 %s59, 1
    %s61 = scalar_lea.vmem %s1, 1
    %62 = vst [vmem:[%s61] sm:%s60] %v58

// kernel: tile.28
$region0: #{tile.28}
  #allocation0 [shape = 's32[1]{0}', space=sflag, size = 0x4, scoped, tag = 'scoped memory for tile.28']
  %s0 = inlined_call_operand.vmem [shape: f32[8], index: 0, kind: input, shape index: {}]
  %s1 = inlined_call_operand.vmem [shape: f32[14,8], index: 1, kind: output, shape index: {}]
  // Predicated region
  $region2: #{tile.28} parent=0 // pred_check
    _
  $region3: #{tile.28} parent=0 // pred_check_branch
    %3 = sbr.rel (0) target = $region5
  $region4: #{tile.28} parent=0 // pred_region
    _
  $region5: #{tile.28} parent=0 // pred_fallthru
    _
  %v4 = vld [vmem:[%s0] ss:$0 sm:$0xff]
  %5 = vst [vmem:[%s1] sm:$0xff] %v4
  %s6 = scalar_lea.vmem %s1, 8
  %7 = vst [vmem:[%s6] sm:$0xff] %v4

// kernel: tile.33
$region0: #{tile.33}
  %s0 = inlined_call_operand.vmem [shape: f32[14,8], index: 0, kind: input, shape index: {}]
  %s1 = inlined_call_operand.vmem [shape: f32[1,112], index: 1, kind: output, shape index: {}]
  $region1: #{tile.33} parent=0
    #allocation0 [shape = 'u8[4096]{0}', space=vmem, size = 0x1000, scoped, tag = 'scoped mem for output reshape']
    %v2 = vld [vmem:[%s0] sm:$0x1]
    %vm3 = vcmask 64512
    %4 = vst.msk [vmem:[#allocation0] sm:$0x1] %vm3, %v2
    %s5 = scalar_lea.vmem %s0, 13
    %v6 = vld [vmem:[%s5] sm:$0x1]
    %7 = vrot.lane.b32.xlu0 %v6, 104
    %v8 = vpop.permute.xlu0 %7
    %vm9 = vcmask 917312
    %10 = vst.msk [vmem:[#allocation0] sm:$0x1] %vm9, %v8
    %s11 = scalar_lea.vmem %s0, 12
    %v12 = vld [vmem:[%s11] sm:$0x1]
    %13 = vrot.lane.b32.xlu0 %v12, 96
    %v14 = vpop.permute.xlu0 %13
    %vm15 = vcmask 851712
    %16 = vst.msk [vmem:[#allocation0] sm:$0x1] %vm15, %v14
    %s17 = scalar_lea.vmem %s0, 11
    %v18 = vld [vmem:[%s17] sm:$0x1]
    %19 = vrot.lane.b32.xlu0 %v18, 88
    %v20 = vpop.permute.xlu0 %19
    %vm21 = vcmask 786112
    %22 = vst.msk [vmem:[#allocation0] sm:$0x1] %vm21, %v20
    %s23 = scalar_lea.vmem %s0, 10
    %v24 = vld [vmem:[%s23] sm:$0x1]
    %25 = vrot.lane.b32.xlu0 %v24, 80
    %v26 = vpop.permute.xlu0 %25
    %vm27 = vcmask 720512
    %28 = vst.msk [vmem:[#allocation0] sm:$0x1] %vm27, %v26
    %s29 = scalar_lea.vmem %s0, 9
    %v30 = vld [vmem:[%s29] sm:$0x1]
    %31 = vrot.lane.b32.xlu0 %v30, 72
    %v32 = vpop.permute.xlu0 %31
    %vm33 = vcmask 654912
    %34 = vst.msk [vmem:[#allocation0] sm:$0x1] %vm33, %v32
    %s35 = scalar_lea.vmem %s0, 8
    %v36 = vld [vmem:[%s35] sm:$0x1]
    %37 = vrot.lane.b32.xlu0 %v36, 64
    %v38 = vpop.permute.xlu0 %37
    %vm39 = vcmask 589312
    %40 = vst.msk [vmem:[#allocation0] sm:$0x1] %vm39, %v38
    %s41 = scalar_lea.vmem %s0, 7
    %v42 = vld [vmem:[%s41] sm:$0x1]
    %43 = vrot.lane.b32.xlu0 %v42, 56
    %v44 = vpop.permute.xlu0 %43
    %vm45 = vcmask 523712
    %46 = vst.msk [vmem:[#allocation0] sm:$0x1] %vm45, %v44
    %s47 = scalar_lea.vmem %s0, 6
    %v48 = vld [vmem:[%s47] sm:$0x1]
    %49 = vrot.lane.b32.xlu0 %v48, 48
    %v50 = vpop.permute.xlu0 %49
    %vm51 = vcmask 458112
    %52 = vst.msk [vmem:[#allocation0] sm:$0x1] %vm51, %v50
    %s53 = scalar_lea.vmem %s0, 5
    %v54 = vld [vmem:[%s53] sm:$0x1]
    %55 = vrot.lane.b32.xlu0 %v54, 40
    %v56 = vpop.permute.xlu0 %55
    %vm57 = vcmask 392512
    %58 = vst.msk [vmem:[#allocation0] sm:$0x1] %vm57, %v56
    %s59 = scalar_lea.vmem %s0, 4
    %v60 = vld [vmem:[%s59] sm:$0x1]
    %61 = vrot.lane.b32.xlu0 %v60, 32
    %v62 = vpop.permute.xlu0 %61
    %vm63 = vcmask 326912
    %64 = vst.msk [vmem:[#allocation0] sm:$0x1] %vm63, %v62
    %s65 = scalar_lea.vmem %s0, 3
    %v66 = vld [vmem:[%s65] sm:$0x1]
    %67 = vrot.lane.b32.xlu0 %v66, 24
    %v68 = vpop.permute.xlu0 %67
    %vm69 = vcmask 261312
    %70 = vst.msk [vmem:[#allocation0] sm:$0x1] %vm69, %v68
    %s71 = scalar_lea.vmem %s0, 2
    %v72 = vld [vmem:[%s71] sm:$0x1]
    %73 = vrot.lane.b32.xlu0 %v72, 16
    %v74 = vpop.permute.xlu0 %73
    %vm75 = vcmask 195712
    %76 = vst.msk [vmem:[#allocation0] sm:$0x1] %vm75, %v74
    %s77 = scalar_lea.vmem %s0, 1
    %v78 = vld [vmem:[%s77] sm:$0x1]
    %79 = vrot.lane.b32.xlu0 %v78, 8
    %v80 = vpop.permute.xlu0 %79
    %vm81 = vcmask 130112
    %82 = vst.msk [vmem:[#allocation0] sm:$0x1] %vm81, %v80
    %s84 = sshll.u32 1, 1
    %s85 = ssub.s32 %s84, 1
    %v87 = vld [vmem:[#allocation0] sm:%s85]
    %s88 = sshll.u32 1, 1
    %s89 = ssub.s32 %s88, 1
    %90 = vst [vmem:[%s1] sm:%s89] %v87

// kernel: lenet_forward.1
$region0: #{lenet_forward.1}
  #allocation0 [shape = 'u32[]', space=smem, size = 0x4, offset = 0x4, fixed_abs, tag = 'smem constant byte address 0x4 - core index']
  #allocation1 [shape = 'u32[144,128]{1,0:T(1,128)}', space=vmem, size = 0x12000, scoped, tag = 'internal scratch']
  %s0 = inlined_call_operand.vmem [shape: f32[4,28,112], index: 0, kind: input, shape index: {}]
  %s1 = inlined_call_operand.vmem [shape: f32[112,8], index: 1, kind: input, shape index: {}]
  %s2 = inlined_call_operand.vmem [shape: f32[8,112], index: 2, kind: input, shape index: {}]
  %s3 = inlined_call_operand.vmem [shape: f32[2,112], index: 3, kind: input, shape index: {}]
  %s4 = inlined_call_operand.vmem [shape: f32[5,20,28], index: 4, kind: input, shape index: {}]
  %s5 = inlined_call_operand.vmem [shape: f32[5,112,160], index: 5, kind: input, shape index: {}]
  %s6 = inlined_call_operand.vmem [shape: f32[3,160], index: 6, kind: input, shape index: {}]
  %s7 = inlined_call_operand.vmem [shape: f32[160,16], index: 7, kind: input, shape index: {}]
  %s8 = inlined_call_operand.vmem [shape: f32[16,160], index: 8, kind: input, shape index: {}]
  %s9 = inlined_call_operand.vmem [shape: f32[2,10,20], index: 9, kind: input, shape index: {}]
  %s10 = inlined_call_operand.vmem [shape: f32[2,160,80], index: 10, kind: input, shape index: {}]
  %s11 = inlined_call_operand.vmem [shape: f32[5,2,10], index: 11, kind: input, shape index: {}]
  %s12 = inlined_call_operand.vmem [shape: f32[5,80,120], index: 12, kind: input, shape index: {}]
  %s13 = inlined_call_operand.vmem [shape: f32[1,120], index: 13, kind: input, shape index: {}]
  %s14 = inlined_call_operand.vmem [shape: f32[120,84], index: 14, kind: input, shape index: {}]
  %s15 = inlined_call_operand.vmem [shape: f32[1,84], index: 15, kind: input, shape index: {}]
  %s16 = inlined_call_operand.vmem [shape: f32[84,10], index: 16, kind: input, shape index: {}]
  %s17 = inlined_call_operand.vmem [shape: f32[1,10], index: 17, kind: input, shape index: {}]
  %s18 = inlined_call_operand.hbm [shape: f32[2,10], index: 18, kind: output, shape index: {}]
  %s19 = sld [smem:[#allocation0]]
  $region82: #{lenet_forward.1} parent=0
    _
  %s21 = ssub.s32 1, %s19
  %s22 = scalar_select 0, %s21, %s19
  $region1: #{lenet_forward.1} parent=0
    #allocation2 [shape = 'u8[1024]{0}', space=vmem, size = 0x400, scoped, tag = 'output window, operand 0, single buffered']
    #allocation3 [shape = 's32[1]{0}', space=sflag, size = 0x4, scoped, tag = 'scoped memory for lenet_forward.1']
    %23 = vsyncpa [#allocation3], 0
    // Predicated region
    $region2: #{lenet_forward.1} parent=1 // pred_check
      _
    $region3: #{lenet_forward.1} parent=1 // pred_check_branch
      %25 = sbr.rel (0) target = $region5
    $region4: #{lenet_forward.1} parent=1 // pred_region
      _
    $region5: #{lenet_forward.1} parent=1 // pred_fallthru
      _
    // Predicated region
    $region6: #{lenet_forward.1} parent=1 // pred_check
      _
    $region7: #{lenet_forward.1} parent=1 // pred_check_branch
      %27 = sbr.rel (0) target = $region9
    $region8: #{lenet_forward.1} parent=1 // pred_region
      _
    $region9: #{lenet_forward.1} parent=1 // pred_fallthru
      _
    // Predicated region
    $region10: #{lenet_forward.1} parent=1 // pred_check
      _
    $region11: #{lenet_forward.1} parent=1 // pred_check_branch
      %29 = sbr.rel (0) target = $region13
    $region12: #{lenet_forward.1} parent=1 // pred_region
      _
    $region13: #{lenet_forward.1} parent=1 // pred_fallthru
      _
    // Predicated region
    $region14: #{lenet_forward.1} parent=1 // pred_check
      _
    $region15: #{lenet_forward.1} parent=1 // pred_check_branch
      %31 = sbr.rel (0) target = $region17
    $region16: #{lenet_forward.1} parent=1 // pred_region
      _
    $region17: #{lenet_forward.1} parent=1 // pred_fallthru
      _
    // Predicated region
    $region18: #{lenet_forward.1} parent=1 // pred_check
      _
    $region19: #{lenet_forward.1} parent=1 // pred_check_branch
      %33 = sbr.rel (0) target = $region21
    $region20: #{lenet_forward.1} parent=1 // pred_region
      _
    $region21: #{lenet_forward.1} parent=1 // pred_fallthru
      _
    // Predicated region
    $region22: #{lenet_forward.1} parent=1 // pred_check
      _
    $region23: #{lenet_forward.1} parent=1 // pred_check_branch
      %35 = sbr.rel (0) target = $region25
    $region24: #{lenet_forward.1} parent=1 // pred_region
      _
    $region25: #{lenet_forward.1} parent=1 // pred_fallthru
      _
    // Predicated region
    $region26: #{lenet_forward.1} parent=1 // pred_check
      _
    $region27: #{lenet_forward.1} parent=1 // pred_check_branch
      %37 = sbr.rel (0) target = $region29
    $region28: #{lenet_forward.1} parent=1 // pred_region
      _
    $region29: #{lenet_forward.1} parent=1 // pred_fallthru
      _
    // Predicated region
    $region30: #{lenet_forward.1} parent=1 // pred_check
      _
    $region31: #{lenet_forward.1} parent=1 // pred_check_branch
      %39 = sbr.rel (0) target = $region33
    $region32: #{lenet_forward.1} parent=1 // pred_region
      _
    $region33: #{lenet_forward.1} parent=1 // pred_fallthru
      _
    // Predicated region
    $region34: #{lenet_forward.1} parent=1 // pred_check
      _
    $region35: #{lenet_forward.1} parent=1 // pred_check_branch
      %41 = sbr.rel (0) target = $region37
    $region36: #{lenet_forward.1} parent=1 // pred_region
      _
    $region37: #{lenet_forward.1} parent=1 // pred_fallthru
      _
    // Predicated region
    $region38: #{lenet_forward.1} parent=1 // pred_check
      _
    $region39: #{lenet_forward.1} parent=1 // pred_check_branch
      %43 = sbr.rel (0) target = $region41
    $region40: #{lenet_forward.1} parent=1 // pred_region
      _
    $region41: #{lenet_forward.1} parent=1 // pred_fallthru
      _
    // Predicated region
    $region42: #{lenet_forward.1} parent=1 // pred_check
      _
    $region43: #{lenet_forward.1} parent=1 // pred_check_branch
      %45 = sbr.rel (0) target = $region45
    $region44: #{lenet_forward.1} parent=1 // pred_region
      _
    $region45: #{lenet_forward.1} parent=1 // pred_fallthru
      _
    // Predicated region
    $region46: #{lenet_forward.1} parent=1 // pred_check
      _
    $region47: #{lenet_forward.1} parent=1 // pred_check_branch
      %47 = sbr.rel (0) target = $region49
    $region48: #{lenet_forward.1} parent=1 // pred_region
      _
    $region49: #{lenet_forward.1} parent=1 // pred_fallthru
      _
    // Predicated region
    $region50: #{lenet_forward.1} parent=1 // pred_check
      _
    $region51: #{lenet_forward.1} parent=1 // pred_check_branch
      %49 = sbr.rel (0) target = $region53
    $region52: #{lenet_forward.1} parent=1 // pred_region
      _
    $region53: #{lenet_forward.1} parent=1 // pred_fallthru
      _
    // Predicated region
    $region54: #{lenet_forward.1} parent=1 // pred_check
      _
    $region55: #{lenet_forward.1} parent=1 // pred_check_branch
      %51 = sbr.rel (0) target = $region57
    $region56: #{lenet_forward.1} parent=1 // pred_region
      _
    $region57: #{lenet_forward.1} parent=1 // pred_fallthru
      _
    // Predicated region
    $region58: #{lenet_forward.1} parent=1 // pred_check
      _
    $region59: #{lenet_forward.1} parent=1 // pred_check_branch
      %53 = sbr.rel (0) target = $region61
    $region60: #{lenet_forward.1} parent=1 // pred_region
      _
    $region61: #{lenet_forward.1} parent=1 // pred_fallthru
      _
    // Predicated region
    $region62: #{lenet_forward.1} parent=1 // pred_check
      _
    $region63: #{lenet_forward.1} parent=1 // pred_check_branch
      %55 = sbr.rel (0) target = $region65
    $region64: #{lenet_forward.1} parent=1 // pred_region
      _
    $region65: #{lenet_forward.1} parent=1 // pred_fallthru
      _
    // Predicated region
    $region66: #{lenet_forward.1} parent=1 // pred_check
      _
    $region67: #{lenet_forward.1} parent=1 // pred_check_branch
      %57 = sbr.rel (0) target = $region69
    $region68: #{lenet_forward.1} parent=1 // pred_region
      _
    $region69: #{lenet_forward.1} parent=1 // pred_fallthru
      _
    // Predicated region
    $region70: #{lenet_forward.1} parent=1 // pred_check
      _
    $region71: #{lenet_forward.1} parent=1 // pred_check_branch
      %59 = sbr.rel (0) target = $region73
    $region72: #{lenet_forward.1} parent=1 // pred_region
      _
    $region73: #{lenet_forward.1} parent=1 // pred_fallthru
      _
    %v60 = vld [vmem:[%s0] sm:$0xff]
    %v61 = vld [vmem:[%s0 + $0x8] sm:$0xff]
    %v62 = vld [vmem:[%s0 + $0x10] sm:$0xff]
    %v63 = vld [vmem:[%s0 + $0x18] sm:$0xf]
    %v64 = vld [vmem:[%s0 + $0x20] sm:$0xff]
    %v65 = vld [vmem:[%s0 + $0x28] sm:$0xff]
    %v66 = vld [vmem:[%s0 + $0x30] sm:$0xff]
    %v67 = vld [vmem:[%s0 + $0x38] sm:$0xf]
    %v68 = vld [vmem:[%s0 + $0x40] sm:$0xff]
    %v69 = vld [vmem:[%s0 + $0x48] sm:$0xff]
    %v70 = vld [vmem:[%s0 + $0x50] sm:$0xff]
    %v71 = vld [vmem:[%s0 + $0x58] sm:$0xf]
    %v72 = vld [vmem:[%s0 + $0x60] sm:$0xff]
    %v73 = vld [vmem:[%s0 + $0x68] sm:$0xff]
    %v74 = vld [vmem:[%s0 + $0x70] sm:$0xff]
    %v75 = vld [vmem:[%s0 + $0x78] sm:$0xf]
    %v76 = vld [vmem:[%s1] sm:$0xff]
    %v77 = vld [vmem:[%s1 + $0x8] sm:$0xff]
    %v78 = vld [vmem:[%s1 + $0x10] sm:$0xff]
    %v79 = vld [vmem:[%s1 + $0x18] sm:$0xff]
    %v80 = vld [vmem:[%s1 + $0x20] sm:$0xff]
    %v81 = vld [vmem:[%s1 + $0x28] sm:$0xff]
    %v82 = vld [vmem:[%s1 + $0x30] sm:$0xff]
    %v83 = vld [vmem:[%s1 + $0x38] sm:$0xff]
    %v84 = vld [vmem:[%s1 + $0x40] sm:$0xff]
    %v85 = vld [vmem:[%s1 + $0x48] sm:$0xff]
    %v86 = vld [vmem:[%s1 + $0x50] sm:$0xff]
    %v87 = vld [vmem:[%s1 + $0x58] sm:$0xff]
    %v88 = vld [vmem:[%s1 + $0x60] sm:$0xff]
    %v89 = vld [vmem:[%s1 + $0x68] sm:$0xff]
    %v90 = vld [vmem:[%s2] sm:$0xff]
    %v91 = vld [vmem:[%s3] sm:$0x3]
    %vm92 = vcmask 916480
    %v93 = vsel %vm92, %v60, 0.0
    %v94 = vsel %vm92, %v64, 0.0
    %v95 = vadd.f32 %v93, %v94
    %v96 = vsel %vm92, %v68, 0.0
    %v97 = vadd.f32 %v95, %v96
    %v98 = vsel %vm92, %v72, 0.0
    %v99 = vadd.f32 %v97, %v98
    %v100 = vsel %vm92, %v61, 0.0
    %v101 = vsel %vm92, %v65, 0.0
    %v102 = vadd.f32 %v100, %v101
    %v103 = vsel %vm92, %v69, 0.0
    %v104 = vadd.f32 %v102, %v103
    %v105 = vsel %vm92, %v73, 0.0
    %v106 = vadd.f32 %v104, %v105
    %v107 = vsel %vm92, %v62, 0.0
    %v108 = vsel %vm92, %v66, 0.0
    %v109 = vadd.f32 %v107, %v108
    %v110 = vsel %vm92, %v70, 0.0
    %v111 = vadd.f32 %v109, %v110
    %v112 = vsel %vm92, %v74, 0.0
    %v113 = vadd.f32 %v111, %v112
    %vm114 = vcmask 912384
    %v115 = vsel %vm114, %v63, 0.0
    %v116 = vsel %vm114, %v67, 0.0
    %v117 = vadd.f32 %v115, %v116
    %v118 = vsel %vm114, %v71, 0.0
    %v119 = vadd.f32 %v117, %v118
    %v120 = vsel %vm114, %v75, 0.0
    %v121 = vadd.f32 %v119, %v120
    %v122 = vsel %vm92, %v99, 0.0
    %v123 = vsel %vm92, %v106, 0.0
    %v124 = vadd.f32 %v122, %v123
    %v125 = vsel %vm92, %v113, 0.0
    %v126 = vadd.f32 %v124, %v125
    %v127 = vsel %vm114, %v121, 0.0
    %v128 = vadd.f32 %v126, %v127
    %v129 = vrot.slane %v128, 4
    %v130 = vadd.f32 %v128, %v129
    %v131 = vrot.slane %v130, 2
    %v132 = vadd.f32 %v130, %v131
    %v133 = vrot.slane %v132, 1
    %v134 = vadd.f32 %v132, %v133
    %v136 = vsel %vm92, %v134, 0
    %138 = vmatprep.subr.mxu0 0.0
    %139 = vmatpush1.msra.mxu0 0.0
    %140 = vmatprep.subr.mxu0 0.0
    %141 = vmatpush1.msra.mxu0 0.0
    %142 = vmatprep.subr.mxu0 0.0
    %143 = vmatpush1.msra.mxu0 %v89
    %144 = vmatprep.subr.mxu0 0.0
    %145 = vmatpush1.msra.mxu0 %v88
    %146 = vmatprep.subr.mxu0 0.0
    %147 = vmatpush1.msra.mxu0 %v87
    %148 = vmatprep.subr.mxu0 0.0
    %149 = vmatpush1.msra.mxu0 %v86
    %150 = vmatprep.subr.mxu0 0.0
    %151 = vmatpush1.msra.mxu0 %v85
    %152 = vmatprep.subr.mxu0 0.0
    %153 = vmatpush1.msra.mxu0 %v84
    %154 = vmatprep.subr.mxu0 0.0
    %155 = vmatpush1.msra.mxu0 %v83
    %156 = vmatprep.subr.mxu0 0.0
    %157 = vmatpush1.msra.mxu0 %v82
    %158 = vmatprep.subr.mxu0 0.0
    %159 = vmatpush1.msra.mxu0 %v81
    %160 = vmatprep.subr.mxu0 0.0
    %161 = vmatpush1.msra.mxu0 %v80
    %162 = vmatprep.subr.mxu0 0.0
    %163 = vmatpush1.msra.mxu0 %v79
    %164 = vmatprep.subr.mxu0 0.0
    %165 = vmatpush1.msra.mxu0 %v78
    %166 = vmatprep.subr.mxu0 0.0
    %167 = vmatpush1.msra.mxu0 %v77
    %168 = vmatprep.subr.mxu0 0.0
    %169 = vmatpush1.msra.mxu0 %v76
    %170 = vmatprep.subr.mxu0 0.0
    %171 = vmatpush2.msra.mxu0 0.0
    %172 = vmatprep.subr.mxu0 0.0
    %173 = vmatpush2.msra.mxu0 0.0
    %174 = vmatprep.subr.mxu0 0.0
    %175 = vmatpush2.msra.mxu0 0.0
    %176 = vmatprep.subr.mxu0 0.0
    %177 = vmatpush2.msra.mxu0 0.0
    %178 = vmatprep.subr.mxu0 0.0
    %179 = vmatpush2.msra.mxu0 0.0
    %180 = vmatprep.subr.mxu0 0.0
    %181 = vmatpush2.msra.mxu0 0.0
    %182 = vmatprep.subr.mxu0 0.0
    %183 = vmatpush2.msra.mxu0 0.0
    %184 = vmatprep.subr.mxu0 0.0
    %185 = vmatpush2.msra.mxu0 0.0
    %186 = vmatprep.subr.mxu0 0.0
    %187 = vmatpush2.msra.mxu0 0.0
    %188 = vmatprep.subr.mxu0 0.0
    %189 = vmatpush2.msra.mxu0 0.0
    %190 = vmatprep.subr.mxu0 0.0
    %191 = vmatpush2.msra.mxu0 0.0
    %192 = vmatprep.subr.mxu0 0.0
    %193 = vmatpush2.msra.mxu0 0.0
    %194 = vmatprep.subr.mxu0 0.0
    %195 = vmatpush2.msra.mxu0 0.0
    %196 = vmatprep.subr.mxu0 0.0
    %197 = vmatpush2.msra.mxu0 0.0
    %198 = vmatprep.subr.mxu0 0.0
    %199 = vmatpush2.msra.mxu0 0.0
    %200 = vmatprep.subr.mxu0 0.0
    %201 = vmatpush2.msra.mxu0 0.0
    %202 = vmatprep.mubr.f32.mxu0 0.0
    %203 = vmatmul.mubr.f32.gmra.mxu0 %v136
    %v204 = vpop.f32.mrf.mxu0
    %v205 = vadd.f32 0.0, %v204
    %v206 = vpop.f32.mrf.mxu0
    %207 = vdwg.mxu0
    %v208 = vrcp.pop 1568.0
    %v209 = vmul.f32 %v205, %v208
    %vm210 = vcmask 64512
    %v212 = vsel %vm210, %v209, 0
    %214 = vmatprep.subr.mxu0 0.0
    %215 = vmatpush1.msra.mxu0 0.0
    %216 = vmatprep.subr.mxu0 0.0
    %217 = vmatpush1.msra.mxu0 0.0
    %218 = vmatprep.subr.mxu0 0.0
    %219 = vmatpush1.msra.mxu0 0.0
    %220 = vmatprep.subr.mxu0 0.0
    %221 = vmatpush1.msra.mxu0 0.0
    %222 = vmatprep.subr.mxu0 0.0
    %223 = vmatpush1.msra.mxu0 0.0
    %224 = vmatprep.subr.mxu0 0.0
    %225 = vmatpush1.msra.mxu0 0.0
    %226 = vmatprep.subr.mxu0 0.0
    %227 = vmatpush1.msra.mxu0 0.0
    %228 = vmatprep.subr.mxu0 0.0
    %229 = vmatpush1.msra.mxu0 0.0
    %230 = vmatprep.subr.mxu0 0.0
    %231 = vmatpush1.msra.mxu0 0.0
    %232 = vmatprep.subr.mxu0 0.0
    %233 = vmatpush1.msra.mxu0 0.0
    %234 = vmatprep.subr.mxu0 0.0
    %235 = vmatpush1.msra.mxu0 0.0
    %236 = vmatprep.subr.mxu0 0.0
    %237 = vmatpush1.msra.mxu0 0.0
    %238 = vmatprep.subr.mxu0 0.0
    %239 = vmatpush1.msra.mxu0 0.0
    %240 = vmatprep.subr.mxu0 0.0
    %241 = vmatpush1.msra.mxu0 0.0
    %242 = vmatprep.subr.mxu0 0.0
    %243 = vmatpush1.msra.mxu0 0.0
    %244 = vmatprep.subr.mxu0 0.0
    %245 = vmatpush1.msra.mxu0 %v90
    %246 = vmatprep.subr.mxu0 0.0
    %247 = vmatpush2.msra.mxu0 0.0
    %248 = vmatprep.subr.mxu0 0.0
    %249 = vmatpush2.msra.mxu0 0.0
    %250 = vmatprep.subr.mxu0 0.0
    %251 = vmatpush2.msra.mxu0 0.0
    %252 = vmatprep.subr.mxu0 0.0
    %253 = vmatpush2.msra.mxu0 0.0
    %254 = vmatprep.subr.mxu0 0.0
    %255 = vmatpush2.msra.mxu0 0.0
    %256 = vmatprep.subr.mxu0 0.0
    %257 = vmatpush2.msra.mxu0 0.0
    %258 = vmatprep.subr.mxu0 0.0
    %259 = vmatpush2.msra.mxu0 0.0
    %260 = vmatprep.subr.mxu0 0.0
    %261 = vmatpush2.msra.mxu0 0.0
    %262 = vmatprep.subr.mxu0 0.0
    %263 = vmatpush2.msra.mxu0 0.0
    %264 = vmatprep.subr.mxu0 0.0
    %265 = vmatpush2.msra.mxu0 0.0
    %266 = vmatprep.subr.mxu0 0.0
    %267 = vmatpush2.msra.mxu0 0.0
    %268 = vmatprep.subr.mxu0 0.0
    %269 = vmatpush2.msra.mxu0 0.0
    %270 = vmatprep.subr.mxu0 0.0
    %271 = vmatpush2.msra.mxu0 0.0
    %272 = vmatprep.subr.mxu0 0.0
    %273 = vmatpush2.msra.mxu0 0.0
    %274 = vmatprep.subr.mxu0 0.0
    %275 = vmatpush2.msra.mxu0 0.0
    %276 = vmatprep.subr.mxu0 0.0
    %277 = vmatpush2.msra.mxu0 0.0
    %278 = vmatprep.mubr.f32.mxu0 0.0
    %279 = vmatmul.mubr.f32.gmra.mxu0 %v212
    %v280 = vpop.f32.mrf.mxu0
    %v281 = vadd.f32 0.0, %v280
    %v282 = vpop.f32.mrf.mxu0
    %283 = vdwg.mxu0
    %v284 = vlaneseq
    %v285 = vshrl.u32 %v284, 7
    %v286 = vsub.s32 0, %v285
    %v287 = vrot.slane %v281, %v286
    %v288 = vsub.f32 %v60, %v287
    %v289 = vsub.f32 %v61, %v287
    %v290 = vsub.f32 %v62, %v287
    %v291 = vsub.f32 %v63, %v287
    %v292 = vsub.f32 %v64, %v287
    %v293 = vsub.f32 %v65, %v287
    %v294 = vsub.f32 %v66, %v287
    %v295 = vsub.f32 %v67, %v287
    %v296 = vsub.f32 %v68, %v287
    %v297 = vsub.f32 %v69, %v287
    %v298 = vsub.f32 %v70, %v287
    %v299 = vsub.f32 %v71, %v287
    %v300 = vsub.f32 %v72, %v287
    %v301 = vsub.f32 %v73, %v287
    %v302 = vsub.f32 %v74, %v287
    %v303 = vsub.f32 %v75, %v287
    %v304 = vmul.f32 %v288, %v288
    %v305 = vmul.f32 %v289, %v289
    %v306 = vmul.f32 %v290, %v290
    %v307 = vmul.f32 %v291, %v291
    %v308 = vmul.f32 %v292, %v292
    %v309 = vmul.f32 %v293, %v293
    %v310 = vmul.f32 %v294, %v294
    %v311 = vmul.f32 %v295, %v295
    %v312 = vmul.f32 %v296, %v296
    %v313 = vmul.f32 %v297, %v297
    %v314 = vmul.f32 %v298, %v298
    %v315 = vmul.f32 %v299, %v299
    %v316 = vmul.f32 %v300, %v300
    %v317 = vmul.f32 %v301, %v301
    %v318 = vmul.f32 %v302, %v302
    %v319 = vmul.f32 %v303, %v303
    %v320 = vsel %vm92, %v304, 0.0
    %v321 = vsel %vm92, %v308, 0.0
    %v322 = vadd.f32 %v320, %v321
    %v323 = vsel %vm92, %v312, 0.0
    %v324 = vadd.f32 %v322, %v323
    %v325 = vsel %vm92, %v316, 0.0
    %v326 = vadd.f32 %v324, %v325
    %v327 = vsel %vm92, %v305, 0.0
    %v328 = vsel %vm92, %v309, 0.0
    %v329 = vadd.f32 %v327, %v328
    %v330 = vsel %vm92, %v313, 0.0
    %v331 = vadd.f32 %v329, %v330
    %v332 = vsel %vm92, %v317, 0.0
    %v333 = vadd.f32 %v331, %v332
    %v334 = vsel %vm92, %v306, 0.0
    %v335 = vsel %vm92, %v310, 0.0
    %v336 = vadd.f32 %v334, %v335
    %v337 = vsel %vm92, %v314, 0.0
    %v338 = vadd.f32 %v336, %v337
    %v339 = vsel %vm92, %v318, 0.0
    %v340 = vadd.f32 %v338, %v339
    %v341 = vsel %vm114, %v307, 0.0
    %v342 = vsel %vm114, %v311, 0.0
    %v343 = vadd.f32 %v341, %v342
    %v344 = vsel %vm114, %v315, 0.0
    %v345 = vadd.f32 %v343, %v344
    %v346 = vsel %vm114, %v319, 0.0
    %v347 = vadd.f32 %v345, %v346
    %v348 = vsel %vm92, %v326, 0.0
    %v349 = vsel %vm92, %v333, 0.0
    %v350 = vadd.f32 %v348, %v349
    %v351 = vsel %vm92, %v340, 0.0
    %v352 = vadd.f32 %v350, %v351
    %v353 = vsel %vm114, %v347, 0.0
    %v354 = vadd.f32 %v352, %v353
    %v355 = vrot.slane %v354, 4
    %v356 = vadd.f32 %v354, %v355
    %v357 = vrot.slane %v356, 2
    %v358 = vadd.f32 %v356, %v357
    %v359 = vrot.slane %v358, 1
    %v360 = vadd.f32 %v358, %v359
    %v362 = vsel %vm92, %v360, 0
    %364 = vmatprep.subr.mxu0 0.0
    %365 = vmatpush1.msra.mxu0 0.0
    %366 = vmatprep.subr.mxu0 0.0
    %367 = vmatpush1.msra.mxu0 0.0
    %368 = vmatprep.subr.mxu0 0.0
    %369 = vmatpush1.msra.mxu0 %v89
    %370 = vmatprep.subr.mxu0 0.0
    %371 = vmatpush1.msra.mxu0 %v88
    %372 = vmatprep.subr.mxu0 0.0
    %373 = vmatpush1.msra.mxu0 %v87
    %374 = vmatprep.subr.mxu0 0.0
    %375 = vmatpush1.msra.mxu0 %v86
    %376 = vmatprep.subr.mxu0 0.0
    %377 = vmatpush1.msra.mxu0 %v85
    %378 = vmatprep.subr.mxu0 0.0
    %379 = vmatpush1.msra.mxu0 %v84
    %380 = vmatprep.subr.mxu0 0.0
    %381 = vmatpush1.msra.mxu0 %v83
    %382 = vmatprep.subr.mxu0 0.0
    %383 = vmatpush1.msra.mxu0 %v82
    %384 = vmatprep.subr.mxu0 0.0
    %385 = vmatpush1.msra.mxu0 %v81
    %386 = vmatprep.subr.mxu0 0.0
    %387 = vmatpush1.msra.mxu0 %v80
    %388 = vmatprep.subr.mxu0 0.0
    %389 = vmatpush1.msra.mxu0 %v79
    %390 = vmatprep.subr.mxu0 0.0
    %391 = vmatpush1.msra.mxu0 %v78
    %392 = vmatprep.subr.mxu0 0.0
    %393 = vmatpush1.msra.mxu0 %v77
    %394 = vmatprep.subr.mxu0 0.0
    %395 = vmatpush1.msra.mxu0 %v76
    %396 = vmatprep.subr.mxu0 0.0
    %397 = vmatpush2.msra.mxu0 0.0
    %398 = vmatprep.subr.mxu0 0.0
    %399 = vmatpush2.msra.mxu0 0.0
    %400 = vmatprep.subr.mxu0 0.0
    %401 = vmatpush2.msra.mxu0 0.0
    %402 = vmatprep.subr.mxu0 0.0
    %403 = vmatpush2.msra.mxu0 0.0
    %404 = vmatprep.subr.mxu0 0.0
    %405 = vmatpush2.msra.mxu0 0.0
    %406 = vmatprep.subr.mxu0 0.0
    %407 = vmatpush2.msra.mxu0 0.0
    %408 = vmatprep.subr.mxu0 0.0
    %409 = vmatpush2.msra.mxu0 0.0
    %410 = vmatprep.subr.mxu0 0.0
    %411 = vmatpush2.msra.mxu0 0.0
    %412 = vmatprep.subr.mxu0 0.0
    %413 = vmatpush2.msra.mxu0 0.0
    %414 = vmatprep.subr.mxu0 0.0
    %415 = vmatpush2.msra.mxu0 0.0
    %416 = vmatprep.subr.mxu0 0.0
    %417 = vmatpush2.msra.mxu0 0.0
    %418 = vmatprep.subr.mxu0 0.0
    %419 = vmatpush2.msra.mxu0 0.0
    %420 = vmatprep.subr.mxu0 0.0
    %421 = vmatpush2.msra.mxu0 0.0
    %422 = vmatprep.subr.mxu0 0.0
    %423 = vmatpush2.msra.mxu0 0.0
    %424 = vmatprep.subr.mxu0 0.0
    %425 = vmatpush2.msra.mxu0 0.0
    %426 = vmatprep.subr.mxu0 0.0
    %427 = vmatpush2.msra.mxu0 0.0
    %428 = vmatprep.mubr.f32.mxu0 0.0
    %429 = vmatmul.mubr.f32.gmra.mxu0 %v362
    %v430 = vpop.f32.mrf.mxu0
    %v431 = vadd.f32 0.0, %v430
    %v432 = vpop.f32.mrf.mxu0
    %433 = vdwg.mxu0
    %v434 = vmul.f32 %v431, %v208
    %v436 = vsel %vm210, %v434, 0
    %438 = vmatprep.subr.mxu0 0.0
    %439 = vmatpush1.msra.mxu0 0.0
    %440 = vmatprep.subr.mxu0 0.0
    %441 = vmatpush1.msra.mxu0 0.0
    %442 = vmatprep.subr.mxu0 0.0
    %443 = vmatpush1.msra.mxu0 0.0
    %444 = vmatprep.subr.mxu0 0.0
    %445 = vmatpush1.msra.mxu0 0.0
    %446 = vmatprep.subr.mxu0 0.0
    %447 = vmatpush1.msra.mxu0 0.0
    %448 = vmatprep.subr.mxu0 0.0
    %449 = vmatpush1.msra.mxu0 0.0
    %450 = vmatprep.subr.mxu0 0.0
    %451 = vmatpush1.msra.mxu0 0.0
    %452 = vmatprep.subr.mxu0 0.0
    %453 = vmatpush1.msra.mxu0 0.0
    %454 = vmatprep.subr.mxu0 0.0
    %455 = vmatpush1.msra.mxu0 0.0
    %456 = vmatprep.subr.mxu0 0.0
    %457 = vmatpush1.msra.mxu0 0.0
    %458 = vmatprep.subr.mxu0 0.0
    %459 = vmatpush1.msra.mxu0 0.0
    %460 = vmatprep.subr.mxu0 0.0
    %461 = vmatpush1.msra.mxu0 0.0
    %462 = vmatprep.subr.mxu0 0.0
    %463 = vmatpush1.msra.mxu0 0.0
    %464 = vmatprep.subr.mxu0 0.0
    %465 = vmatpush1.msra.mxu0 0.0
    %466 = vmatprep.subr.mxu0 0.0
    %467 = vmatpush1.msra.mxu0 0.0
    %468 = vmatprep.subr.mxu0 0.0
    %469 = vmatpush1.msra.mxu0 %v90
    %470 = vmatprep.subr.mxu0 0.0
    %471 = vmatpush2.msra.mxu0 0.0
    %472 = vmatprep.subr.mxu0 0.0
    %473 = vmatpush2.msra.mxu0 0.0
    %474 = vmatprep.subr.mxu0 0.0
    %475 = vmatpush2.msra.mxu0 0.0
    %476 = vmatprep.subr.mxu0 0.0
    %477 = vmatpush2.msra.mxu0 0.0
    %478 = vmatprep.subr.mxu0 0.0
    %479 = vmatpush2.msra.mxu0 0.0
    %480 = vmatprep.subr.mxu0 0.0
    %481 = vmatpush2.msra.mxu0 0.0
    %482 = vmatprep.subr.mxu0 0.0
    %483 = vmatpush2.msra.mxu0 0.0
    %484 = vmatprep.subr.mxu0 0.0
    %485 = vmatpush2.msra.mxu0 0.0
    %486 = vmatprep.subr.mxu0 0.0
    %487 = vmatpush2.msra.mxu0 0.0
    %488 = vmatprep.subr.mxu0 0.0
    %489 = vmatpush2.msra.mxu0 0.0
    %490 = vmatprep.subr.mxu0 0.0
    %491 = vmatpush2.msra.mxu0 0.0
    %492 = vmatprep.subr.mxu0 0.0
    %493 = vmatpush2.msra.mxu0 0.0
    %494 = vmatprep.subr.mxu0 0.0
    %495 = vmatpush2.msra.mxu0 0.0
    %496 = vmatprep.subr.mxu0 0.0
    %497 = vmatpush2.msra.mxu0 0.0
    %498 = vmatprep.subr.mxu0 0.0
    %499 = vmatpush2.msra.mxu0 0.0
    %500 = vmatprep.subr.mxu0 0.0
    %501 = vmatpush2.msra.mxu0 0.0
    %502 = vmatprep.mubr.f32.mxu0 0.0
    %503 = vmatmul.mubr.f32.gmra.mxu0 %v436
    %v504 = vpop.f32.mrf.mxu0
    %v505 = vadd.f32 1e-05, %v504
    %v506 = vpop.f32.mrf.mxu0
    %507 = vdwg.mxu0
    %v508 = vrsqrt.pop %v505
    %v509 = vlaneseq
    %v510 = vshrl.u32 %v509, 7
    %v511 = vsub.s32 0, %v510
    %v512 = vrot.slane %v508, %v511
    %v513 = vmul.f32 %v288, %v512
    %v514 = vmul.f32 %v289, %v512
    %v515 = vmul.f32 %v290, %v512
    %v516 = vmul.f32 %v291, %v512
    %v517 = vmul.f32 %v292, %v512
    %v518 = vmul.f32 %v293, %v512
    %v519 = vmul.f32 %v294, %v512
    %v520 = vmul.f32 %v295, %v512
    %v521 = vmul.f32 %v296, %v512
    %v522 = vmul.f32 %v297, %v512
    %v523 = vmul.f32 %v298, %v512
    %v524 = vmul.f32 %v299, %v512
    %v525 = vmul.f32 %v300, %v512
    %v526 = vmul.f32 %v301, %v512
    %v527 = vmul.f32 %v302, %v512
    %v528 = vmul.f32 %v303, %v512
    %v529 = vlaneseq
    %v530 = vshrl.u32 %v529, 7
    %v531 = vsub.s32 0, %v530
    %v532 = vrot.slane %v91, %v531
    %v533 = vmul.f32 %v513, %v532
    %v534 = vmul.f32 %v514, %v532
    %v535 = vmul.f32 %v515, %v532
    %v536 = vmul.f32 %v516, %v532
    %v537 = vmul.f32 %v517, %v532
    %v538 = vmul.f32 %v518, %v532
    %v539 = vmul.f32 %v519, %v532
    %v540 = vmul.f32 %v520, %v532
    %v541 = vmul.f32 %v521, %v532
    %v542 = vmul.f32 %v522, %v532
    %v543 = vmul.f32 %v523, %v532
    %v544 = vmul.f32 %v524, %v532
    %v545 = vmul.f32 %v525, %v532
    %v546 = vmul.f32 %v526, %v532
    %v547 = vmul.f32 %v527, %v532
    %v548 = vmul.f32 %v528, %v532
    %v549 = vlaneseq
    %v550 = vshrl.u32 %v549, 7
    %v551 = vsub.s32 1, %v550
    %v552 = vrot.slane %v91, %v551
    %v553 = vadd.f32 %v533, %v552
    %v554 = vadd.f32 %v534, %v552
    %v555 = vadd.f32 %v535, %v552
    %v556 = vadd.f32 %v536, %v552
    %v557 = vadd.f32 %v537, %v552
    %v558 = vadd.f32 %v538, %v552
    %v559 = vadd.f32 %v539, %v552
    %v560 = vadd.f32 %v540, %v552
    %v561 = vadd.f32 %v541, %v552
    %v562 = vadd.f32 %v542, %v552
    %v563 = vadd.f32 %v543, %v552
    %v564 = vadd.f32 %v544, %v552
    %v565 = vadd.f32 %v545, %v552
    %v566 = vadd.f32 %v546, %v552
    %v567 = vadd.f32 %v547, %v552
    %v568 = vadd.f32 %v548, %v552
    %v569 = vmax.f32 %v553, 0.0
    %v570 = vmax.f32 %v554, 0.0
    %v571 = vmax.f32 %v555, 0.0
    %v572 = vmax.f32 %v556, 0.0
    %v573 = vmax.f32 %v557, 0.0
    %v574 = vmax.f32 %v558, 0.0
    %v575 = vmax.f32 %v559, 0.0
    %v576 = vmax.f32 %v560, 0.0
    %v577 = vmax.f32 %v561, 0.0
    %v578 = vmax.f32 %v562, 0.0
    %v579 = vmax.f32 %v563, 0.0
    %v580 = vmax.f32 %v564, 0.0
    %v581 = vmax.f32 %v565, 0.0
    %v582 = vmax.f32 %v566, 0.0
    %v583 = vmax.f32 %v567, 0.0
    %v584 = vmax.f32 %v568, 0.0
    %v585 = vsel %vm92, %v569, -inf
    %v586 = vsel %vm92, %v573, -inf
    %v587 = vmax.f32 %v585, %v586
    %v588 = vsel %vm92, %v577, -inf
    %v589 = vmax.f32 %v587, %v588
    %v590 = vsel %vm92, %v581, -inf
    %v591 = vmax.f32 %v589, %v590
    %v592 = vsel %vm92, %v570, -inf
    %v593 = vsel %vm92, %v574, -inf
    %v594 = vmax.f32 %v592, %v593
    %v595 = vsel %vm92, %v578, -inf
    %v596 = vmax.f32 %v594, %v595
    %v597 = vsel %vm92, %v582, -inf
    %v598 = vmax.f32 %v596, %v597
    %v599 = vsel %vm92, %v571, -inf
    %v600 = vsel %vm92, %v575, -inf
    %v601 = vmax.f32 %v599, %v600
    %v602 = vsel %vm92, %v579, -inf
    %v603 = vmax.f32 %v601, %v602
    %v604 = vsel %vm92, %v583, -inf
    %v605 = vmax.f32 %v603, %v604
    %v606 = vsel %vm114, %v572, -inf
    %v607 = vsel %vm114, %v576, -inf
    %v608 = vmax.f32 %v606, %v607
    %v609 = vsel %vm114, %v580, -inf
    %v610 = vmax.f32 %v608, %v609
    %v611 = vsel %vm114, %v584, -inf
    %v612 = vmax.f32 %v610, %v611
    %v613 = vld [vmem:[%s4] sm:$0xff]
    %v614 = vld [vmem:[%s4 + $0x8] sm:$0xff]
    %v615 = vld [vmem:[%s4 + $0x10] sm:$0xf]
    %vm616 = vcmask 228352
    %v618 = vsel %vm616, %v613, 0
    %v621 = vsel %vm616, %v614, 0
    %v624 = vsel %vm616, %v615, 0
    %vm626 = vcmask 1043456
    %v628 = vsel %vm626, %v612, 0
    %630 = vmatprep.subr.mxu0 0.0
    %631 = vmatpush1.msra.mxu0 0.0
    %632 = vmatprep.subr.mxu0 0.0
    %633 = vmatpush1.msra.mxu0 0.0
    %634 = vmatprep.subr.mxu0 0.0
    %635 = vmatpush1.msra.mxu0 0.0
    %636 = vmatprep.subr.mxu0 0.0
    %637 = vmatpush1.msra.mxu0 0.0
    %638 = vmatprep.subr.mxu0 0.0
    %639 = vmatpush1.msra.mxu0 0.0
    %640 = vmatprep.subr.mxu0 0.0
    %641 = vmatpush1.msra.mxu0 0.0
    %642 = vmatprep.subr.mxu0 0.0
    %643 = vmatpush1.msra.mxu0 0.0
    %644 = vmatprep.subr.mxu0 0.0
    %645 = vmatpush1.msra.mxu0 0.0
    %646 = vmatprep.subr.mxu0 0.0
    %647 = vmatpush1.msra.mxu0 0.0
    %648 = vmatprep.subr.mxu0 0.0
    %649 = vmatpush1.msra.mxu0 0.0
    %650 = vmatprep.subr.mxu0 0.0
    %651 = vmatpush1.msra.mxu0 0.0
    %652 = vmatprep.subr.mxu0 0.0
    %653 = vmatpush1.msra.mxu0 0.0
    %654 = vmatprep.subr.mxu0 0.0
    %655 = vmatpush1.msra.mxu0 %v628
    %656 = vmatprep.subr.mxu0 0.0
    %657 = vmatpush1.msra.mxu0 %v605
    %658 = vmatprep.subr.mxu0 0.0
    %659 = vmatpush1.msra.mxu0 %v598
    %660 = vmatprep.subr.mxu0 0.0
    %661 = vmatpush1.msra.mxu0 %v591
    %662 = vmatprep.subr.mxu0 0.0
    %663 = vmatpush2.msra.mxu0 0.0
    %664 = vmatprep.subr.mxu0 0.0
    %665 = vmatpush2.msra.mxu0 0.0
    %666 = vmatprep.subr.mxu0 0.0
    %667 = vmatpush2.msra.mxu0 0.0
    %668 = vmatprep.subr.mxu0 0.0
    %669 = vmatpush2.msra.mxu0 0.0
    %670 = vmatprep.subr.mxu0 0.0
    %671 = vmatpush2.msra.mxu0 0.0
    %672 = vmatprep.subr.mxu0 0.0
    %673 = vmatpush2.msra.mxu0 0.0
    %674 = vmatprep.subr.mxu0 0.0
    %675 = vmatpush2.msra.mxu0 0.0
    %676 = vmatprep.subr.mxu0 0.0
    %677 = vmatpush2.msra.mxu0 0.0
    %678 = vmatprep.subr.mxu0 0.0
    %679 = vmatpush2.msra.mxu0 0.0
    %680 = vmatprep.subr.mxu0 0.0
    %681 = vmatpush2.msra.mxu0 0.0
    %682 = vmatprep.subr.mxu0 0.0
    %683 = vmatpush2.msra.mxu0 0.0
    %684 = vmatprep.subr.mxu0 0.0
    %685 = vmatpush2.msra.mxu0 0.0
    %686 = vmatprep.subr.mxu0 0.0
    %687 = vmatpush2.msra.mxu0 0.0
    %688 = vmatprep.subr.mxu0 0.0
    %689 = vmatpush2.msra.mxu0 0.0
    %690 = vmatprep.subr.mxu0 0.0
    %691 = vmatpush2.msra.mxu0 0.0
    %692 = vmatprep.subr.mxu0 0.0
    %693 = vmatpush2.msra.mxu0 0.0
    %694 = vmatprep.mubr.f32.mxu0 0.0
    %695 = vmatmul.mubr.f32.gmra.mxu0 %v618
    %v696 = vpop.f32.mrf.mxu0
    %v697 = vadd.f32 0.0, %v696
    %v698 = vpop.f32.mrf.mxu0
    %699 = vmatprep.mubr.f32.mxu0 0.0
    %700 = vmatmul.mubr.f32.gmra.mxu0 %v621
    %v701 = vpop.f32.mrf.mxu0
    %v702 = vadd.f32 0.0, %v701
    %v703 = vpop.f32.mrf.mxu0
    %704 = vmatprep.mubr.f32.mxu0 0.0
    %705 = vmatmul.mubr.f32.gmra.mxu0 %v624
    %v706 = vpop.f32.mrf.mxu0
    %v707 = vadd.f32 0.0, %v706
    %v708 = vpop.f32.mrf.mxu0
    %709 = vdwg.mxu0
    %v710 = vld [vmem:[%s5] sm:$0xff]
    %v711 = vld [vmem:[%s5 + $0x8] sm:$0xff]
    %v712 = vld [vmem:[%s5 + $0x10] sm:$0xff]
    %v713 = vld [vmem:[%s5 + $0x18] sm:$0xff]
    %v714 = vld [vmem:[%s5 + $0x20] sm:$0xff]
    %v715 = vld [vmem:[%s5 + $0x28] sm:$0xff]
    %v716 = vld [vmem:[%s5 + $0x30] sm:$0xff]
    %v717 = vld [vmem:[%s5 + $0x38] sm:$0xff]
    %v718 = vld [vmem:[%s5 + $0x40] sm:$0xff]
    %v719 = vld [vmem:[%s5 + $0x48] sm:$0xff]
    %v720 = vld [vmem:[%s5 + $0x50] sm:$0xff]
    %v721 = vld [vmem:[%s5 + $0x58] sm:$0xff]
    %v722 = vld [vmem:[%s5 + $0x60] sm:$0xff]
    %v723 = vld [vmem:[%s5 + $0x68] sm:$0xff]
    %v724 = vld [vmem:[%s5 + $0x70] sm:$0xff]
    %v725 = vld [vmem:[%s5 + $0x78] sm:$0xff]
    %v726 = vld [vmem:[%s5 + $0x80] sm:$0xff]
    %v727 = vld [vmem:[%s5 + $0x88] sm:$0xff]
    %v728 = vld [vmem:[%s5 + $0x90] sm:$0xff]
    %v729 = vld [vmem:[%s5 + $0x98] sm:$0xff]
    %v730 = vld [vmem:[%s5 + $0xa0] sm:$0xff]
    %v731 = vld [vmem:[%s5 + $0xa8] sm:$0xff]
    %v732 = vld [vmem:[%s5 + $0xb0] sm:$0xff]
    %v733 = vld [vmem:[%s5 + $0xb8] sm:$0xff]
    %v734 = vld [vmem:[%s5 + $0xc0] sm:$0xff]
    %v735 = vld [vmem:[%s5 + $0xc8] sm:$0xff]
    %v736 = vld [vmem:[%s5 + $0xd0] sm:$0xff]
    %v737 = vld [vmem:[%s5 + $0xd8] sm:$0xff]
    %s738 = scalar_lea.vmem %s4, 24
    %v739 = vld [vmem:[%s738] sm:$0xff]
    %v740 = vld [vmem:[%s738 + $0x8] sm:$0xff]
    %v741 = vld [vmem:[%s738 + $0x10] sm:$0xf]
    %v743 = vsel %vm616, %v739, 0
    %v746 = vsel %vm616, %v740, 0
    %v749 = vsel %vm616, %v741, 0
    %751 = vmatprep.subr.mxu0 0.0
    %752 = vmatpush1.msra.mxu0 0.0
    %753 = vmatprep.subr.mxu0 0.0
    %754 = vmatpush1.msra.mxu0 0.0
    %755 = vmatprep.subr.mxu0 0.0
    %756 = vmatpush1.msra.mxu0 0.0
    %757 = vmatprep.subr.mxu0 0.0
    %758 = vmatpush1.msra.mxu0 0.0
    %759 = vmatprep.subr.mxu0 0.0
    %760 = vmatpush1.msra.mxu0 0.0
    %761 = vmatprep.subr.mxu0 0.0
    %762 = vmatpush1.msra.mxu0 0.0
    %763 = vmatprep.subr.mxu0 0.0
    %764 = vmatpush1.msra.mxu0 0.0
    %765 = vmatprep.subr.mxu0 0.0
    %766 = vmatpush1.msra.mxu0 0.0
    %767 = vmatprep.subr.mxu0 0.0
    %768 = vmatpush1.msra.mxu0 0.0
    %769 = vmatprep.subr.mxu0 0.0
    %770 = vmatpush1.msra.mxu0 0.0
    %771 = vmatprep.subr.mxu0 0.0
    %772 = vmatpush1.msra.mxu0 0.0
    %773 = vmatprep.subr.mxu0 0.0
    %774 = vmatpush1.msra.mxu0 0.0
    %775 = vmatprep.subr.mxu0 0.0
    %776 = vmatpush1.msra.mxu0 %v628
    %777 = vmatprep.subr.mxu0 0.0
    %778 = vmatpush1.msra.mxu0 %v605
    %779 = vmatprep.subr.mxu0 0.0
    %780 = vmatpush1.msra.mxu0 %v598
    %781 = vmatprep.subr.mxu0 0.0
    %782 = vmatpush1.msra.mxu0 %v591
    %783 = vmatprep.subr.mxu0 0.0
    %784 = vmatpush2.msra.mxu0 0.0
    %785 = vmatprep.subr.mxu0 0.0
    %786 = vmatpush2.msra.mxu0 0.0
    %787 = vmatprep.subr.mxu0 0.0
    %788 = vmatpush2.msra.mxu0 0.0
    %789 = vmatprep.subr.mxu0 0.0
    %790 = vmatpush2.msra.mxu0 0.0
    %791 = vmatprep.subr.mxu0 0.0
    %792 = vmatpush2.msra.mxu0 0.0
    %793 = vmatprep.subr.mxu0 0.0
    %794 = vmatpush2.msra.mxu0 0.0
    %795 = vmatprep.subr.mxu0 0.0
    %796 = vmatpush2.msra.mxu0 0.0
    %797 = vmatprep.subr.mxu0 0.0
    %798 = vmatpush2.msra.mxu0 0.0
    %799 = vmatprep.subr.mxu0 0.0
    %800 = vmatpush2.msra.mxu0 0.0
    %801 = vmatprep.subr.mxu0 0.0
    %802 = vmatpush2.msra.mxu0 0.0
    %803 = vmatprep.subr.mxu0 0.0
    %804 = vmatpush2.msra.mxu0 0.0
    %805 = vmatprep.subr.mxu0 0.0
    %806 = vmatpush2.msra.mxu0 0.0
    %807 = vmatprep.subr.mxu0 0.0
    %808 = vmatpush2.msra.mxu0 0.0
    %809 = vmatprep.subr.mxu0 0.0
    %810 = vmatpush2.msra.mxu0 0.0
    %811 = vmatprep.subr.mxu0 0.0
    %812 = vmatpush2.msra.mxu0 0.0
    %813 = vmatprep.subr.mxu0 0.0
    %814 = vmatpush2.msra.mxu0 0.0
    %815 = vmatprep.mubr.f32.mxu0 0.0
    %816 = vmatmul.mubr.f32.gmra.mxu0 %v743
    %v817 = vpop.f32.mrf.mxu0
    %v818 = vadd.f32 0.0, %v817
    %v819 = vpop.f32.mrf.mxu0
    %820 = vmatprep.mubr.f32.mxu0 0.0
    %821 = vmatmul.mubr.f32.gmra.mxu0 %v746
    %v822 = vpop.f32.mrf.mxu0
    %v823 = vadd.f32 0.0, %v822
    %v824 = vpop.f32.mrf.mxu0
    %825 = vmatprep.mubr.f32.mxu0 0.0
    %826 = vmatmul.mubr.f32.gmra.mxu0 %v749
    %v827 = vpop.f32.mrf.mxu0
    %v828 = vadd.f32 0.0, %v827
    %v829 = vpop.f32.mrf.mxu0
    %830 = vdwg.mxu0
    %s831 = scalar_lea.vmem %s5, 224
    %v832 = vld [vmem:[%s831] sm:$0xff]
    %v833 = vld [vmem:[%s831 + $0x8] sm:$0xff]
    %v834 = vld [vmem:[%s831 + $0x10] sm:$0xff]
    %v835 = vld [vmem:[%s831 + $0x18] sm:$0xff]
    %v836 = vld [vmem:[%s831 + $0x20] sm:$0xff]
    %v837 = vld [vmem:[%s831 + $0x28] sm:$0xff]
    %v838 = vld [vmem:[%s831 + $0x30] sm:$0xff]
    %v839 = vld [vmem:[%s831 + $0x38] sm:$0xff]
    %v840 = vld [vmem:[%s831 + $0x40] sm:$0xff]
    %v841 = vld [vmem:[%s831 + $0x48] sm:$0xff]
    %v842 = vld [vmem:[%s831 + $0x50] sm:$0xff]
    %v843 = vld [vmem:[%s831 + $0x58] sm:$0xff]
    %v844 = vld [vmem:[%s831 + $0x60] sm:$0xff]
    %v845 = vld [vmem:[%s831 + $0x68] sm:$0xff]
    %v846 = vld [vmem:[%s831 + $0x70] sm:$0xff]
    %v847 = vld [vmem:[%s831 + $0x78] sm:$0xff]
    %v848 = vld [vmem:[%s831 + $0x80] sm:$0xff]
    %v849 = vld [vmem:[%s831 + $0x88] sm:$0xff]
    %v850 = vld [vmem:[%s831 + $0x90] sm:$0xff]
    %v851 = vld [vmem:[%s831 + $0x98] sm:$0xff]
    %v852 = vld [vmem:[%s831 + $0xa0] sm:$0xff]
    %v853 = vld [vmem:[%s831 + $0xa8] sm:$0xff]
    %v854 = vld [vmem:[%s831 + $0xb0] sm:$0xff]
    %v855 = vld [vmem:[%s831 + $0xb8] sm:$0xff]
    %v856 = vld [vmem:[%s831 + $0xc0] sm:$0xff]
    %v857 = vld [vmem:[%s831 + $0xc8] sm:$0xff]
    %v858 = vld [vmem:[%s831 + $0xd0] sm:$0xff]
    %v859 = vld [vmem:[%s831 + $0xd8] sm:$0xff]
    %v861 = vsel %vm92, %v818, 0
    %v864 = vsel %vm92, %v823, 0
    %v867 = vsel %vm92, %v828, 0
    %869 = vmatprep.subr.mxu0 0.0
    %870 = vmatpush1.msra.mxu0 0.0
    %871 = vmatprep.subr.mxu0 0.0
    %872 = vmatpush1.msra.mxu0 0.0
    %873 = vmatprep.subr.mxu0 %v859
    %874 = vmatpush1.msra.mxu0 %v858
    %875 = vmatprep.subr.mxu0 %v857
    %876 = vmatpush1.msra.mxu0 %v856
    %877 = vmatprep.subr.mxu0 %v855
    %878 = vmatpush1.msra.mxu0 %v854
    %879 = vmatprep.subr.mxu0 %v853
    %880 = vmatpush1.msra.mxu0 %v852
    %881 = vmatprep.subr.mxu0 %v851
    %882 = vmatpush1.msra.mxu0 %v850
    %883 = vmatprep.subr.mxu0 %v849
    %884 = vmatpush1.msra.mxu0 %v848
    %885 = vmatprep.subr.mxu0 %v847
    %886 = vmatpush1.msra.mxu0 %v846
    %887 = vmatprep.subr.mxu0 %v845
    %888 = vmatpush1.msra.mxu0 %v844
    %889 = vmatprep.subr.mxu0 %v843
    %890 = vmatpush1.msra.mxu0 %v842
    %891 = vmatprep.subr.mxu0 %v841
    %892 = vmatpush1.msra.mxu0 %v840
    %893 = vmatprep.subr.mxu0 %v839
    %894 = vmatpush1.msra.mxu0 %v838
    %895 = vmatprep.subr.mxu0 %v837
    %896 = vmatpush1.msra.mxu0 %v836
    %897 = vmatprep.subr.mxu0 %v835
    %898 = vmatpush1.msra.mxu0 %v834
    %899 = vmatprep.subr.mxu0 %v833
    %900 = vmatpush1.msra.mxu0 %v832
    %901 = vmatprep.subr.mxu0 0.0
    %902 = vmatpush2.msra.mxu0 0.0
    %903 = vmatprep.subr.mxu0 0.0
    %904 = vmatpush2.msra.mxu0 0.0
    %905 = vmatprep.subr.mxu0 0.0
    %906 = vmatpush2.msra.mxu0 0.0
    %907 = vmatprep.subr.mxu0 0.0
    %908 = vmatpush2.msra.mxu0 0.0
    %909 = vmatprep.subr.mxu0 0.0
    %910 = vmatpush2.msra.mxu0 0.0
    %911 = vmatprep.subr.mxu0 0.0
    %912 = vmatpush2.msra.mxu0 0.0
    %913 = vmatprep.subr.mxu0 0.0
    %914 = vmatpush2.msra.mxu0 0.0
    %915 = vmatprep.subr.mxu0 0.0
    %916 = vmatpush2.msra.mxu0 0.0
    %917 = vmatprep.subr.mxu0 0.0
    %918 = vmatpush2.msra.mxu0 0.0
    %919 = vmatprep.subr.mxu0 0.0
    %920 = vmatpush2.msra.mxu0 0.0
    %921 = vmatprep.subr.mxu0 0.0
    %922 = vmatpush2.msra.mxu0 0.0
    %923 = vmatprep.subr.mxu0 0.0
    %924 = vmatpush2.msra.mxu0 0.0
    %925 = vmatprep.subr.mxu0 0.0
    %926 = vmatpush2.msra.mxu0 0.0
    %927 = vmatprep.subr.mxu0 0.0
    %928 = vmatpush2.msra.mxu0 0.0
    %929 = vmatprep.subr.mxu0 0.0
    %930 = vmatpush2.msra.mxu0 0.0
    %931 = vmatprep.subr.mxu0 0.0
    %932 = vmatpush2.msra.mxu0 0.0
    %933 = vmatprep.mubr.f32.mxu0 0.0
    %934 = vmatmul.mubr.f32.gmra.mxu0 %v861
    %v935 = vpop.f32.mrf.mxu0
    %v936 = vadd.f32 0.0, %v935
    %v937 = vpop.f32.mrf.mxu0
    %v938 = vadd.f32 0.0, %v937
    %939 = vmatprep.mubr.f32.mxu0 0.0
    %940 = vmatmul.mubr.f32.gmra.mxu0 %v864
    %v941 = vpop.f32.mrf.mxu0
    %v942 = vadd.f32 0.0, %v941
    %v943 = vpop.f32.mrf.mxu0
    %v944 = vadd.f32 0.0, %v943
    %945 = vmatprep.mubr.f32.mxu0 0.0
    %946 = vmatmul.mubr.f32.gmra.mxu0 %v867
    %v947 = vpop.f32.mrf.mxu0
    %v948 = vadd.f32 0.0, %v947
    %v949 = vpop.f32.mrf.mxu0
    %v950 = vadd.f32 0.0, %v949
    %951 = vdwg.mxu0
    %v953 = vsel %vm92, %v697, 0
    %v956 = vsel %vm92, %v702, 0
    %v959 = vsel %vm92, %v707, 0
    %961 = vmatprep.subr.mxu0 0.0
    %962 = vmatpush1.msra.mxu0 0.0
    %963 = vmatprep.subr.mxu0 0.0
    %964 = vmatpush1.msra.mxu0 0.0
    %965 = vmatprep.subr.mxu0 %v737
    %966 = vmatpush1.msra.mxu0 %v736
    %967 = vmatprep.subr.mxu0 %v735
    %968 = vmatpush1.msra.mxu0 %v734
    %969 = vmatprep.subr.mxu0 %v733
    %970 = vmatpush1.msra.mxu0 %v732
    %971 = vmatprep.subr.mxu0 %v731
    %972 = vmatpush1.msra.mxu0 %v730
    %973 = vmatprep.subr.mxu0 %v729
    %974 = vmatpush1.msra.mxu0 %v728
    %975 = vmatprep.subr.mxu0 %v727
    %976 = vmatpush1.msra.mxu0 %v726
    %977 = vmatprep.subr.mxu0 %v725
    %978 = vmatpush1.msra.mxu0 %v724
    %979 = vmatprep.subr.mxu0 %v723
    %980 = vmatpush1.msra.mxu0 %v722
    %981 = vmatprep.subr.mxu0 %v721
    %982 = vmatpush1.msra.mxu0 %v720
    %983 = vmatprep.subr.mxu0 %v719
    %984 = vmatpush1.msra.mxu0 %v718
    %985 = vmatprep.subr.mxu0 %v717
    %986 = vmatpush1.msra.mxu0 %v716
    %987 = vmatprep.subr.mxu0 %v715
    %988 = vmatpush1.msra.mxu0 %v714
    %989 = vmatprep.subr.mxu0 %v713
    %990 = vmatpush1.msra.mxu0 %v712
    %991 = vmatprep.subr.mxu0 %v711
    %992 = vmatpush1.msra.mxu0 %v710
    %993 = vmatprep.subr.mxu0 0.0
    %994 = vmatpush2.msra.mxu0 0.0
    %995 = vmatprep.subr.mxu0 0.0
    %996 = vmatpush2.msra.mxu0 0.0
    %997 = vmatprep.subr.mxu0 0.0
    %998 = vmatpush2.msra.mxu0 0.0
    %999 = vmatprep.subr.mxu0 0.0
    %1000 = vmatpush2.msra.mxu0 0.0
    %1001 = vmatprep.subr.mxu0 0.0
    %1002 = vmatpush2.msra.mxu0 0.0
    %1003 = vmatprep.subr.mxu0 0.0
    %1004 = vmatpush2.msra.mxu0 0.0
    %1005 = vmatprep.subr.mxu0 0.0
    %1006 = vmatpush2.msra.mxu0 0.0
    %1007 = vmatprep.subr.mxu0 0.0
    %1008 = vmatpush2.msra.mxu0 0.0
    %1009 = vmatprep.subr.mxu0 0.0
    %1010 = vmatpush2.msra.mxu0 0.0
    %1011 = vmatprep.subr.mxu0 0.0
    %1012 = vmatpush2.msra.mxu0 0.0
    %1013 = vmatprep.subr.mxu0 0.0
    %1014 = vmatpush2.msra.mxu0 0.0
    %1015 = vmatprep.subr.mxu0 0.0
    %1016 = vmatpush2.msra.mxu0 0.0
    %1017 = vmatprep.subr.mxu0 0.0
    %1018 = vmatpush2.msra.mxu0 0.0
    %1019 = vmatprep.subr.mxu0 0.0
    %1020 = vmatpush2.msra.mxu0 0.0
    %1021 = vmatprep.subr.mxu0 0.0
    %1022 = vmatpush2.msra.mxu0 0.0
    %1023 = vmatprep.subr.mxu0 0.0
    %1024 = vmatpush2.msra.mxu0 0.0
    %1025 = vmatprep.mubr.f32.mxu0 0.0
    %1026 = vmatmul.mubr.f32.gmra.mxu0 %v953
    %v1027 = vpop.f32.mrf.mxu0
    %v1028 = vadd.f32 %v936, %v1027
    %v1029 = vpop.f32.mrf.mxu0
    %v1030 = vadd.f32 %v938, %v1029
    %1031 = vmatprep.mubr.f32.mxu0 0.0
    %1032 = vmatmul.mubr.f32.gmra.mxu0 %v956
    %v1033 = vpop.f32.mrf.mxu0
    %v1034 = vadd.f32 %v942, %v1033
    %v1035 = vpop.f32.mrf.mxu0
    %v1036 = vadd.f32 %v944, %v1035
    %1037 = vmatprep.mubr.f32.mxu0 0.0
    %1038 = vmatmul.mubr.f32.gmra.mxu0 %v959
    %v1039 = vpop.f32.mrf.mxu0
    %v1040 = vadd.f32 %v948, %v1039
    %v1041 = vpop.f32.mrf.mxu0
    %v1042 = vadd.f32 %v950, %v1041
    %1043 = vdwg.mxu0
    %s1044 = scalar_lea.vmem %s4, 48
    %v1045 = vld [vmem:[%s1044] sm:$0xff]
    %v1046 = vld [vmem:[%s1044 + $0x8] sm:$0xff]
    %v1047 = vld [vmem:[%s1044 + $0x10] sm:$0xf]
    %v1049 = vsel %vm616, %v1045, 0
    %v1052 = vsel %vm616, %v1046, 0
    %v1055 = vsel %vm616, %v1047, 0
    %1057 = vmatprep.subr.mxu0 0.0
    %1058 = vmatpush1.msra.mxu0 0.0
    %1059 = vmatprep.subr.mxu0 0.0
    %1060 = vmatpush1.msra.mxu0 0.0
    %1061 = vmatprep.subr.mxu0 0.0
    %1062 = vmatpush1.msra.mxu0 0.0
    %1063 = vmatprep.subr.mxu0 0.0
    %1064 = vmatpush1.msra.mxu0 0.0
    %1065 = vmatprep.subr.mxu0 0.0
    %1066 = vmatpush1.msra.mxu0 0.0
    %1067 = vmatprep.subr.mxu0 0.0
    %1068 = vmatpush1.msra.mxu0 0.0
    %1069 = vmatprep.subr.mxu0 0.0
    %1070 = vmatpush1.msra.mxu0 0.0
    %1071 = vmatprep.subr.mxu0 0.0
    %1072 = vmatpush1.msra.mxu0 0.0
    %1073 = vmatprep.subr.mxu0 0.0
    %1074 = vmatpush1.msra.mxu0 0.0
    %1075 = vmatprep.subr.mxu0 0.0
    %1076 = vmatpush1.msra.mxu0 0.0
    %1077 = vmatprep.subr.mxu0 0.0
    %1078 = vmatpush1.msra.mxu0 0.0
    %1079 = vmatprep.subr.mxu0 0.0
    %1080 = vmatpush1.msra.mxu0 0.0
    %1081 = vmatprep.subr.mxu0 0.0
    %1082 = vmatpush1.msra.mxu0 %v628
    %1083 = vmatprep.subr.mxu0 0.0
    %1084 = vmatpush1.msra.mxu0 %v605
    %1085 = vmatprep.subr.mxu0 0.0
    %1086 = vmatpush1.msra.mxu0 %v598
    %1087 = vmatprep.subr.mxu0 0.0
    %1088 = vmatpush1.msra.mxu0 %v591
    %1089 = vmatprep.subr.mxu0 0.0
    %1090 = vmatpush2.msra.mxu0 0.0
    %1091 = vmatprep.subr.mxu0 0.0
    %1092 = vmatpush2.msra.mxu0 0.0
    %1093 = vmatprep.subr.mxu0 0.0
    %1094 = vmatpush2.msra.mxu0 0.0
    %1095 = vmatprep.subr.mxu0 0.0
    %1096 = vmatpush2.msra.mxu0 0.0
    %1097 = vmatprep.subr.mxu0 0.0
    %1098 = vmatpush2.msra.mxu0 0.0
    %1099 = vmatprep.subr.mxu0 0.0
    %1100 = vmatpush2.msra.mxu0 0.0
    %1101 = vmatprep.subr.mxu0 0.0
    %1102 = vmatpush2.msra.mxu0 0.0
    %1103 = vmatprep.subr.mxu0 0.0
    %1104 = vmatpush2.msra.mxu0 0.0
    %1105 = vmatprep.subr.mxu0 0.0
    %1106 = vmatpush2.msra.mxu0 0.0
    %1107 = vmatprep.subr.mxu0 0.0
    %1108 = vmatpush2.msra.mxu0 0.0
    %1109 = vmatprep.subr.mxu0 0.0
    %1110 = vmatpush2.msra.mxu0 0.0
    %1111 = vmatprep.subr.mxu0 0.0
    %1112 = vmatpush2.msra.mxu0 0.0
    %1113 = vmatprep.subr.mxu0 0.0
    %1114 = vmatpush2.msra.mxu0 0.0
    %1115 = vmatprep.subr.mxu0 0.0
    %1116 = vmatpush2.msra.mxu0 0.0
    %1117 = vmatprep.subr.mxu0 0.0
    %1118 = vmatpush2.msra.mxu0 0.0
    %1119 = vmatprep.subr.mxu0 0.0
    %1120 = vmatpush2.msra.mxu0 0.0
    %1121 = vmatprep.mubr.f32.mxu0 0.0
    %1122 = vmatmul.mubr.f32.gmra.mxu0 %v1049
    %v1123 = vpop.f32.mrf.mxu0
    %v1124 = vadd.f32 0.0, %v1123
    %v1125 = vpop.f32.mrf.mxu0
    %1126 = vmatprep.mubr.f32.mxu0 0.0
    %1127 = vmatmul.mubr.f32.gmra.mxu0 %v1052
    %v1128 = vpop.f32.mrf.mxu0
    %v1129 = vadd.f32 0.0, %v1128
    %v1130 = vpop.f32.mrf.mxu0
    %1131 = vmatprep.mubr.f32.mxu0 0.0
    %1132 = vmatmul.mubr.f32.gmra.mxu0 %v1055
    %v1133 = vpop.f32.mrf.mxu0
    %v1134 = vadd.f32 0.0, %v1133
    %v1135 = vpop.f32.mrf.mxu0
    %1136 = vdwg.mxu0
    %s1137 = scalar_lea.vmem %s5, 448
    %v1138 = vld [vmem:[%s1137] sm:$0xff]
    %v1139 = vld [vmem:[%s1137 + $0x8] sm:$0xff]
    %v1140 = vld [vmem:[%s1137 + $0x10] sm:$0xff]
    %v1141 = vld [vmem:[%s1137 + $0x18] sm:$0xff]
    %v1142 = vld [vmem:[%s1137 + $0x20] sm:$0xff]
    %v1143 = vld [vmem:[%s1137 + $0x28] sm:$0xff]
    %v1144 = vld [vmem:[%s1137 + $0x30] sm:$0xff]
    %v1145 = vld [vmem:[%s1137 + $0x38] sm:$0xff]
    %v1146 = vld [vmem:[%s1137 + $0x40] sm:$0xff]
    %v1147 = vld [vmem:[%s1137 + $0x48] sm:$0xff]
    %v1148 = vld [vmem:[%s1137 + $0x50] sm:$0xff]
    %v1149 = vld [vmem:[%s1137 + $0x58] sm:$0xff]
    %v1150 = vld [vmem:[%s1137 + $0x60] sm:$0xff]
    %v1151 = vld [vmem:[%s1137 + $0x68] sm:$0xff]
    %v1152 = vld [vmem:[%s1137 + $0x70] sm:$0xff]
    %v1153 = vld [vmem:[%s1137 + $0x78] sm:$0xff]
    %v1154 = vld [vmem:[%s1137 + $0x80] sm:$0xff]
    %v1155 = vld [vmem:[%s1137 + $0x88] sm:$0xff]
    %v1156 = vld [vmem:[%s1137 + $0x90] sm:$0xff]
    %v1157 = vld [vmem:[%s1137 + $0x98] sm:$0xff]
    %v1158 = vld [vmem:[%s1137 + $0xa0] sm:$0xff]
    %v1159 = vld [vmem:[%s1137 + $0xa8] sm:$0xff]
    %v1160 = vld [vmem:[%s1137 + $0xb0] sm:$0xff]
    %v1161 = vld [vmem:[%s1137 + $0xb8] sm:$0xff]
    %v1162 = vld [vmem:[%s1137 + $0xc0] sm:$0xff]
    %v1163 = vld [vmem:[%s1137 + $0xc8] sm:$0xff]
    %v1164 = vld [vmem:[%s1137 + $0xd0] sm:$0xff]
    %v1165 = vld [vmem:[%s1137 + $0xd8] sm:$0xff]
    %v1167 = vsel %vm92, %v1124, 0
    %v1170 = vsel %vm92, %v1129, 0
    %v1173 = vsel %vm92, %v1134, 0
    %1175 = vmatprep.subr.mxu0 0.0
    %1176 = vmatpush1.msra.mxu0 0.0
    %1177 = vmatprep.subr.mxu0 0.0
    %1178 = vmatpush1.msra.mxu0 0.0
    %1179 = vmatprep.subr.mxu0 %v1165
    %1180 = vmatpush1.msra.mxu0 %v1164
    %1181 = vmatprep.subr.mxu0 %v1163
    %1182 = vmatpush1.msra.mxu0 %v1162
    %1183 = vmatprep.subr.mxu0 %v1161
    %1184 = vmatpush1.msra.mxu0 %v1160
    %1185 = vmatprep.subr.mxu0 %v1159
    %1186 = vmatpush1.msra.mxu0 %v1158
    %1187 = vmatprep.subr.mxu0 %v1157
    %1188 = vmatpush1.msra.mxu0 %v1156
    %1189 = vmatprep.subr.mxu0 %v1155
    %1190 = vmatpush1.msra.mxu0 %v1154
    %1191 = vmatprep.subr.mxu0 %v1153
    %1192 = vmatpush1.msra.mxu0 %v1152
    %1193 = vmatprep.subr.mxu0 %v1151
    %1194 = vmatpush1.msra.mxu0 %v1150
    %1195 = vmatprep.subr.mxu0 %v1149
    %1196 = vmatpush1.msra.mxu0 %v1148
    %1197 = vmatprep.subr.mxu0 %v1147
    %1198 = vmatpush1.msra.mxu0 %v1146
    %1199 = vmatprep.subr.mxu0 %v1145
    %1200 = vmatpush1.msra.mxu0 %v1144
    %1201 = vmatprep.subr.mxu0 %v1143
    %1202 = vmatpush1.msra.mxu0 %v1142
    %1203 = vmatprep.subr.mxu0 %v1141
    %1204 = vmatpush1.msra.mxu0 %v1140
    %1205 = vmatprep.subr.mxu0 %v1139
    %1206 = vmatpush1.msra.mxu0 %v1138
    %1207 = vmatprep.subr.mxu0 0.0
    %1208 = vmatpush2.msra.mxu0 0.0
    %1209 = vmatprep.subr.mxu0 0.0
    %1210 = vmatpush2.msra.mxu0 0.0
    %1211 = vmatprep.subr.mxu0 0.0
    %1212 = vmatpush2.msra.mxu0 0.0
    %1213 = vmatprep.subr.mxu0 0.0
    %1214 = vmatpush2.msra.mxu0 0.0
    %1215 = vmatprep.subr.mxu0 0.0
    %1216 = vmatpush2.msra.mxu0 0.0
    %1217 = vmatprep.subr.mxu0 0.0
    %1218 = vmatpush2.msra.mxu0 0.0
    %1219 = vmatprep.subr.mxu0 0.0
    %1220 = vmatpush2.msra.mxu0 0.0
    %1221 = vmatprep.subr.mxu0 0.0
    %1222 = vmatpush2.msra.mxu0 0.0
    %1223 = vmatprep.subr.mxu0 0.0
    %1224 = vmatpush2.msra.mxu0 0.0
    %1225 = vmatprep.subr.mxu0 0.0
    %1226 = vmatpush2.msra.mxu0 0.0
    %1227 = vmatprep.subr.mxu0 0.0
    %1228 = vmatpush2.msra.mxu0 0.0
    %1229 = vmatprep.subr.mxu0 0.0
    %1230 = vmatpush2.msra.mxu0 0.0
    %1231 = vmatprep.subr.mxu0 0.0
    %1232 = vmatpush2.msra.mxu0 0.0
    %1233 = vmatprep.subr.mxu0 0.0
    %1234 = vmatpush2.msra.mxu0 0.0
    %1235 = vmatprep.subr.mxu0 0.0
    %1236 = vmatpush2.msra.mxu0 0.0
    %1237 = vmatprep.subr.mxu0 0.0
    %1238 = vmatpush2.msra.mxu0 0.0
    %1239 = vmatprep.mubr.f32.mxu0 0.0
    %1240 = vmatmul.mubr.f32.gmra.mxu0 %v1167
    %v1241 = vpop.f32.mrf.mxu0
    %v1242 = vadd.f32 0.0, %v1241
    %v1243 = vpop.f32.mrf.mxu0
    %v1244 = vadd.f32 0.0, %v1243
    %1245 = vmatprep.mubr.f32.mxu0 0.0
    %1246 = vmatmul.mubr.f32.gmra.mxu0 %v1170
    %v1247 = vpop.f32.mrf.mxu0
    %v1248 = vadd.f32 0.0, %v1247
    %v1249 = vpop.f32.mrf.mxu0
    %v1250 = vadd.f32 0.0, %v1249
    %1251 = vmatprep.mubr.f32.mxu0 0.0
    %1252 = vmatmul.mubr.f32.gmra.mxu0 %v1173
    %v1253 = vpop.f32.mrf.mxu0
    %v1254 = vadd.f32 0.0, %v1253
    %v1255 = vpop.f32.mrf.mxu0
    %v1256 = vadd.f32 0.0, %v1255
    %1257 = vdwg.mxu0
    %v1258 = vadd.f32 %v1028, %v1242
    %v1259 = vadd.f32 %v1030, %v1244
    %v1260 = vadd.f32 %v1034, %v1248
    %v1261 = vadd.f32 %v1036, %v1250
    %v1262 = vadd.f32 %v1040, %v1254
    %v1263 = vadd.f32 %v1042, %v1256
    %s1264 = scalar_lea.vmem %s4, 72
    %v1265 = vld [vmem:[%s1264] sm:$0xff]
    %v1266 = vld [vmem:[%s1264 + $0x8] sm:$0xff]
    %v1267 = vld [vmem:[%s1264 + $0x10] sm:$0xf]
    %v1269 = vsel %vm616, %v1265, 0
    %v1272 = vsel %vm616, %v1266, 0
    %v1275 = vsel %vm616, %v1267, 0
    %1277 = vmatprep.subr.mxu0 0.0
    %1278 = vmatpush1.msra.mxu0 0.0
    %1279 = vmatprep.subr.mxu0 0.0
    %1280 = vmatpush1.msra.mxu0 0.0
    %1281 = vmatprep.subr.mxu0 0.0
    %1282 = vmatpush1.msra.mxu0 0.0
    %1283 = vmatprep.subr.mxu0 0.0
    %1284 = vmatpush1.msra.mxu0 0.0
    %1285 = vmatprep.subr.mxu0 0.0
    %1286 = vmatpush1.msra.mxu0 0.0
    %1287 = vmatprep.subr.mxu0 0.0
    %1288 = vmatpush1.msra.mxu0 0.0
    %1289 = vmatprep.subr.mxu0 0.0
    %1290 = vmatpush1.msra.mxu0 0.0
    %1291 = vmatprep.subr.mxu0 0.0
    %1292 = vmatpush1.msra.mxu0 0.0
    %1293 = vmatprep.subr.mxu0 0.0
    %1294 = vmatpush1.msra.mxu0 0.0
    %1295 = vmatprep.subr.mxu0 0.0
    %1296 = vmatpush1.msra.mxu0 0.0
    %1297 = vmatprep.subr.mxu0 0.0
    %1298 = vmatpush1.msra.mxu0 0.0
    %1299 = vmatprep.subr.mxu0 0.0
    %1300 = vmatpush1.msra.mxu0 0.0
    %1301 = vmatprep.subr.mxu0 0.0
    %1302 = vmatpush1.msra.mxu0 %v628
    %1303 = vmatprep.subr.mxu0 0.0
    %1304 = vmatpush1.msra.mxu0 %v605
    %1305 = vmatprep.subr.mxu0 0.0
    %1306 = vmatpush1.msra.mxu0 %v598
    %1307 = vmatprep.subr.mxu0 0.0
    %1308 = vmatpush1.msra.mxu0 %v591
    %1309 = vmatprep.subr.mxu0 0.0
    %1310 = vmatpush2.msra.mxu0 0.0
    %1311 = vmatprep.subr.mxu0 0.0
    %1312 = vmatpush2.msra.mxu0 0.0
    %1313 = vmatprep.subr.mxu0 0.0
    %1314 = vmatpush2.msra.mxu0 0.0
    %1315 = vmatprep.subr.mxu0 0.0
    %1316 = vmatpush2.msra.mxu0 0.0
    %1317 = vmatprep.subr.mxu0 0.0
    %1318 = vmatpush2.msra.mxu0 0.0
    %1319 = vmatprep.subr.mxu0 0.0
    %1320 = vmatpush2.msra.mxu0 0.0
    %1321 = vmatprep.subr.mxu0 0.0
    %1322 = vmatpush2.msra.mxu0 0.0
    %1323 = vmatprep.subr.mxu0 0.0
    %1324 = vmatpush2.msra.mxu0 0.0
    %1325 = vmatprep.subr.mxu0 0.0
    %1326 = vmatpush2.msra.mxu0 0.0
    %1327 = vmatprep.subr.mxu0 0.0
    %1328 = vmatpush2.msra.mxu0 0.0
    %1329 = vmatprep.subr.mxu0 0.0
    %1330 = vmatpush2.msra.mxu0 0.0
    %1331 = vmatprep.subr.mxu0 0.0
    %1332 = vmatpush2.msra.mxu0 0.0
    %1333 = vmatprep.subr.mxu0 0.0
    %1334 = vmatpush2.msra.mxu0 0.0
    %1335 = vmatprep.subr.mxu0 0.0
    %1336 = vmatpush2.msra.mxu0 0.0
    %1337 = vmatprep.subr.mxu0 0.0
    %1338 = vmatpush2.msra.mxu0 0.0
    %1339 = vmatprep.subr.mxu0 0.0
    %1340 = vmatpush2.msra.mxu0 0.0
    %1341 = vmatprep.mubr.f32.mxu0 0.0
    %1342 = vmatmul.mubr.f32.gmra.mxu0 %v1269
    %v1343 = vpop.f32.mrf.mxu0
    %v1344 = vadd.f32 0.0, %v1343
    %v1345 = vpop.f32.mrf.mxu0
    %1346 = vmatprep.mubr.f32.mxu0 0.0
    %1347 = vmatmul.mubr.f32.gmra.mxu0 %v1272
    %v1348 = vpop.f32.mrf.mxu0
    %v1349 = vadd.f32 0.0, %v1348
    %v1350 = vpop.f32.mrf.mxu0
    %1351 = vmatprep.mubr.f32.mxu0 0.0
    %1352 = vmatmul.mubr.f32.gmra.mxu0 %v1275
    %v1353 = vpop.f32.mrf.mxu0
    %v1354 = vadd.f32 0.0, %v1353
    %v1355 = vpop.f32.mrf.mxu0
    %1356 = vdwg.mxu0
    %s1357 = scalar_lea.vmem %s5, 672
    %v1358 = vld [vmem:[%s1357] sm:$0xff]
    %v1359 = vld [vmem:[%s1357 + $0x8] sm:$0xff]
    %v1360 = vld [vmem:[%s1357 + $0x10] sm:$0xff]
    %v1361 = vld [vmem:[%s1357 + $0x18] sm:$0xff]
    %v1362 = vld [vmem:[%s1357 + $0x20] sm:$0xff]
    %v1363 = vld [vmem:[%s1357 + $0x28] sm:$0xff]
    %v1364 = vld [vmem:[%s1357 + $0x30] sm:$0xff]
    %v1365 = vld [vmem:[%s1357 + $0x38] sm:$0xff]
    %v1366 = vld [vmem:[%s1357 + $0x40] sm:$0xff]
    %v1367 = vld [vmem:[%s1357 + $0x48] sm:$0xff]
    %v1368 = vld [vmem:[%s1357 + $0x50] sm:$0xff]
    %v1369 = vld [vmem:[%s1357 + $0x58] sm:$0xff]
    %v1370 = vld [vmem:[%s1357 + $0x60] sm:$0xff]
    %v1371 = vld [vmem:[%s1357 + $0x68] sm:$0xff]
    %v1372 = vld [vmem:[%s1357 + $0x70] sm:$0xff]
    %v1373 = vld [vmem:[%s1357 + $0x78] sm:$0xff]
    %v1374 = vld [vmem:[%s1357 + $0x80] sm:$0xff]
    %v1375 = vld [vmem:[%s1357 + $0x88] sm:$0xff]
    %v1376 = vld [vmem:[%s1357 + $0x90] sm:$0xff]
    %v1377 = vld [vmem:[%s1357 + $0x98] sm:$0xff]
    %v1378 = vld [vmem:[%s1357 + $0xa0] sm:$0xff]
    %v1379 = vld [vmem:[%s1357 + $0xa8] sm:$0xff]
    %v1380 = vld [vmem:[%s1357 + $0xb0] sm:$0xff]
    %v1381 = vld [vmem:[%s1357 + $0xb8] sm:$0xff]
    %v1382 = vld [vmem:[%s1357 + $0xc0] sm:$0xff]
    %v1383 = vld [vmem:[%s1357 + $0xc8] sm:$0xff]
    %v1384 = vld [vmem:[%s1357 + $0xd0] sm:$0xff]
    %v1385 = vld [vmem:[%s1357 + $0xd8] sm:$0xff]
    %v1387 = vsel %vm92, %v1344, 0
    %v1390 = vsel %vm92, %v1349, 0
    %v1393 = vsel %vm92, %v1354, 0
    %1395 = vmatprep.subr.mxu0 0.0
    %1396 = vmatpush1.msra.mxu0 0.0
    %1397 = vmatprep.subr.mxu0 0.0
    %1398 = vmatpush1.msra.mxu0 0.0
    %1399 = vmatprep.subr.mxu0 %v1385
    %1400 = vmatpush1.msra.mxu0 %v1384
    %1401 = vmatprep.subr.mxu0 %v1383
    %1402 = vmatpush1.msra.mxu0 %v1382
    %1403 = vmatprep.subr.mxu0 %v1381
    %1404 = vmatpush1.msra.mxu0 %v1380
    %1405 = vmatprep.subr.mxu0 %v1379
    %1406 = vmatpush1.msra.mxu0 %v1378
    %1407 = vmatprep.subr.mxu0 %v1377
    %1408 = vmatpush1.msra.mxu0 %v1376
    %1409 = vmatprep.subr.mxu0 %v1375
    %1410 = vmatpush1.msra.mxu0 %v1374
    %1411 = vmatprep.subr.mxu0 %v1373
    %1412 = vmatpush1.msra.mxu0 %v1372
    %1413 = vmatprep.subr.mxu0 %v1371
    %1414 = vmatpush1.msra.mxu0 %v1370
    %1415 = vmatprep.subr.mxu0 %v1369
    %1416 = vmatpush1.msra.mxu0 %v1368
    %1417 = vmatprep.subr.mxu0 %v1367
    %1418 = vmatpush1.msra.mxu0 %v1366
    %1419 = vmatprep.subr.mxu0 %v1365
    %1420 = vmatpush1.msra.mxu0 %v1364
    %1421 = vmatprep.subr.mxu0 %v1363
    %1422 = vmatpush1.msra.mxu0 %v1362
    %1423 = vmatprep.subr.mxu0 %v1361
    %1424 = vmatpush1.msra.mxu0 %v1360
    %1425 = vmatprep.subr.mxu0 %v1359
    %1426 = vmatpush1.msra.mxu0 %v1358
    %1427 = vmatprep.subr.mxu0 0.0
    %1428 = vmatpush2.msra.mxu0 0.0
    %1429 = vmatprep.subr.mxu0 0.0
    %1430 = vmatpush2.msra.mxu0 0.0
    %1431 = vmatprep.subr.mxu0 0.0
    %1432 = vmatpush2.msra.mxu0 0.0
    %1433 = vmatprep.subr.mxu0 0.0
    %1434 = vmatpush2.msra.mxu0 0.0
    %1435 = vmatprep.subr.mxu0 0.0
    %1436 = vmatpush2.msra.mxu0 0.0
    %1437 = vmatprep.subr.mxu0 0.0
    %1438 = vmatpush2.msra.mxu0 0.0
    %1439 = vmatprep.subr.mxu0 0.0
    %1440 = vmatpush2.msra.mxu0 0.0
    %1441 = vmatprep.subr.mxu0 0.0
    %1442 = vmatpush2.msra.mxu0 0.0
    %1443 = vmatprep.subr.mxu0 0.0
    %1444 = vmatpush2.msra.mxu0 0.0
    %1445 = vmatprep.subr.mxu0 0.0
    %1446 = vmatpush2.msra.mxu0 0.0
    %1447 = vmatprep.subr.mxu0 0.0
    %1448 = vmatpush2.msra.mxu0 0.0
    %1449 = vmatprep.subr.mxu0 0.0
    %1450 = vmatpush2.msra.mxu0 0.0
    %1451 = vmatprep.subr.mxu0 0.0
    %1452 = vmatpush2.msra.mxu0 0.0
    %1453 = vmatprep.subr.mxu0 0.0
    %1454 = vmatpush2.msra.mxu0 0.0
    %1455 = vmatprep.subr.mxu0 0.0
    %1456 = vmatpush2.msra.mxu0 0.0
    %1457 = vmatprep.subr.mxu0 0.0
    %1458 = vmatpush2.msra.mxu0 0.0
    %1459 = vmatprep.mubr.f32.mxu0 0.0
    %1460 = vmatmul.mubr.f32.gmra.mxu0 %v1387
    %v1461 = vpop.f32.mrf.mxu0
    %v1462 = vadd.f32 0.0, %v1461
    %v1463 = vpop.f32.mrf.mxu0
    %v1464 = vadd.f32 0.0, %v1463
    %1465 = vmatprep.mubr.f32.mxu0 0.0
    %1466 = vmatmul.mubr.f32.gmra.mxu0 %v1390
    %v1467 = vpop.f32.mrf.mxu0
    %v1468 = vadd.f32 0.0, %v1467
    %v1469 = vpop.f32.mrf.mxu0
    %v1470 = vadd.f32 0.0, %v1469
    %1471 = vmatprep.mubr.f32.mxu0 0.0
    %1472 = vmatmul.mubr.f32.gmra.mxu0 %v1393
    %v1473 = vpop.f32.mrf.mxu0
    %v1474 = vadd.f32 0.0, %v1473
    %v1475 = vpop.f32.mrf.mxu0
    %v1476 = vadd.f32 0.0, %v1475
    %1477 = vdwg.mxu0
    %v1478 = vadd.f32 %v1258, %v1462
    %v1479 = vadd.f32 %v1259, %v1464
    %v1480 = vadd.f32 %v1260, %v1468
    %v1481 = vadd.f32 %v1261, %v1470
    %v1482 = vadd.f32 %v1262, %v1474
    %v1483 = vadd.f32 %v1263, %v1476
    %s1484 = scalar_lea.vmem %s4, 96
    %v1485 = vld [vmem:[%s1484] sm:$0xff]
    %v1486 = vld [vmem:[%s1484 + $0x8] sm:$0xff]
    %v1487 = vld [vmem:[%s1484 + $0x10] sm:$0xf]
    %v1489 = vsel %vm616, %v1485, 0
    %v1492 = vsel %vm616, %v1486, 0
    %v1495 = vsel %vm616, %v1487, 0
    %1497 = vmatprep.subr.mxu0 0.0
    %1498 = vmatpush1.msra.mxu0 0.0
    %1499 = vmatprep.subr.mxu0 0.0
    %1500 = vmatpush1.msra.mxu0 0.0
    %1501 = vmatprep.subr.mxu0 0.0
    %1502 = vmatpush1.msra.mxu0 0.0
    %1503 = vmatprep.subr.mxu0 0.0
    %1504 = vmatpush1.msra.mxu0 0.0
    %1505 = vmatprep.subr.mxu0 0.0
    %1506 = vmatpush1.msra.mxu0 0.0
    %1507 = vmatprep.subr.mxu0 0.0
    %1508 = vmatpush1.msra.mxu0 0.0
    %1509 = vmatprep.subr.mxu0 0.0
    %1510 = vmatpush1.msra.mxu0 0.0
    %1511 = vmatprep.subr.mxu0 0.0
    %1512 = vmatpush1.msra.mxu0 0.0
    %1513 = vmatprep.subr.mxu0 0.0
    %1514 = vmatpush1.msra.mxu0 0.0
    %1515 = vmatprep.subr.mxu0 0.0
    %1516 = vmatpush1.msra.mxu0 0.0
    %1517 = vmatprep.subr.mxu0 0.0
    %1518 = vmatpush1.msra.mxu0 0.0
    %1519 = vmatprep.subr.mxu0 0.0
    %1520 = vmatpush1.msra.mxu0 0.0
    %1521 = vmatprep.subr.mxu0 0.0
    %1522 = vmatpush1.msra.mxu0 %v628
    %1523 = vmatprep.subr.mxu0 0.0
    %1524 = vmatpush1.msra.mxu0 %v605
    %1525 = vmatprep.subr.mxu0 0.0
    %1526 = vmatpush1.msra.mxu0 %v598
    %1527 = vmatprep.subr.mxu0 0.0
    %1528 = vmatpush1.msra.mxu0 %v591
    %1529 = vmatprep.subr.mxu0 0.0
    %1530 = vmatpush2.msra.mxu0 0.0
    %1531 = vmatprep.subr.mxu0 0.0
    %1532 = vmatpush2.msra.mxu0 0.0
    %1533 = vmatprep.subr.mxu0 0.0
    %1534 = vmatpush2.msra.mxu0 0.0
    %1535 = vmatprep.subr.mxu0 0.0
    %1536 = vmatpush2.msra.mxu0 0.0
    %1537 = vmatprep.subr.mxu0 0.0
    %1538 = vmatpush2.msra.mxu0 0.0
    %1539 = vmatprep.subr.mxu0 0.0
    %1540 = vmatpush2.msra.mxu0 0.0
    %1541 = vmatprep.subr.mxu0 0.0
    %1542 = vmatpush2.msra.mxu0 0.0
    %1543 = vmatprep.subr.mxu0 0.0
    %1544 = vmatpush2.msra.mxu0 0.0
    %1545 = vmatprep.subr.mxu0 0.0
    %1546 = vmatpush2.msra.mxu0 0.0
    %1547 = vmatprep.subr.mxu0 0.0
    %1548 = vmatpush2.msra.mxu0 0.0
    %1549 = vmatprep.subr.mxu0 0.0
    %1550 = vmatpush2.msra.mxu0 0.0
    %1551 = vmatprep.subr.mxu0 0.0
    %1552 = vmatpush2.msra.mxu0 0.0
    %1553 = vmatprep.subr.mxu0 0.0
    %1554 = vmatpush2.msra.mxu0 0.0
    %1555 = vmatprep.subr.mxu0 0.0
    %1556 = vmatpush2.msra.mxu0 0.0
    %1557 = vmatprep.subr.mxu0 0.0
    %1558 = vmatpush2.msra.mxu0 0.0
    %1559 = vmatprep.subr.mxu0 0.0
    %1560 = vmatpush2.msra.mxu0 0.0
    %1561 = vmatprep.mubr.f32.mxu0 0.0
    %1562 = vmatmul.mubr.f32.gmra.mxu0 %v1489
    %v1563 = vpop.f32.mrf.mxu0
    %v1564 = vadd.f32 0.0, %v1563
    %v1565 = vpop.f32.mrf.mxu0
    %1566 = vmatprep.mubr.f32.mxu0 0.0
    %1567 = vmatmul.mubr.f32.gmra.mxu0 %v1492
    %v1568 = vpop.f32.mrf.mxu0
    %v1569 = vadd.f32 0.0, %v1568
    %v1570 = vpop.f32.mrf.mxu0
    %1571 = vmatprep.mubr.f32.mxu0 0.0
    %1572 = vmatmul.mubr.f32.gmra.mxu0 %v1495
    %v1573 = vpop.f32.mrf.mxu0
    %v1574 = vadd.f32 0.0, %v1573
    %v1575 = vpop.f32.mrf.mxu0
    %1576 = vdwg.mxu0
    %s1577 = scalar_lea.vmem %s5, 896
    %v1578 = vld [vmem:[%s1577] sm:$0xff]
    %v1579 = vld [vmem:[%s1577 + $0x8] sm:$0xff]
    %v1580 = vld [vmem:[%s1577 + $0x10] sm:$0xff]
    %v1581 = vld [vmem:[%s1577 + $0x18] sm:$0xff]
    %v1582 = vld [vmem:[%s1577 + $0x20] sm:$0xff]
    %v1583 = vld [vmem:[%s1577 + $0x28] sm:$0xff]
    %v1584 = vld [vmem:[%s1577 + $0x30] sm:$0xff]
    %v1585 = vld [vmem:[%s1577 + $0x38] sm:$0xff]
    %v1586 = vld [vmem:[%s1577 + $0x40] sm:$0xff]
    %v1587 = vld [vmem:[%s1577 + $0x48] sm:$0xff]
    %v1588 = vld [vmem:[%s1577 + $0x50] sm:$0xff]
    %v1589 = vld [vmem:[%s1577 + $0x58] sm:$0xff]
    %v1590 = vld [vmem:[%s1577 + $0x60] sm:$0xff]
    %v1591 = vld [vmem:[%s1577 + $0x68] sm:$0xff]
    %v1592 = vld [vmem:[%s1577 + $0x70] sm:$0xff]
    %v1593 = vld [vmem:[%s1577 + $0x78] sm:$0xff]
    %v1594 = vld [vmem:[%s1577 + $0x80] sm:$0xff]
    %v1595 = vld [vmem:[%s1577 + $0x88] sm:$0xff]
    %v1596 = vld [vmem:[%s1577 + $0x90] sm:$0xff]
    %v1597 = vld [vmem:[%s1577 + $0x98] sm:$0xff]
    %v1598 = vld [vmem:[%s1577 + $0xa0] sm:$0xff]
    %v1599 = vld [vmem:[%s1577 + $0xa8] sm:$0xff]
    %v1600 = vld [vmem:[%s1577 + $0xb0] sm:$0xff]
    %v1601 = vld [vmem:[%s1577 + $0xb8] sm:$0xff]
    %v1602 = vld [vmem:[%s1577 + $0xc0] sm:$0xff]
    %v1603 = vld [vmem:[%s1577 + $0xc8] sm:$0xff]
    %v1604 = vld [vmem:[%s1577 + $0xd0] sm:$0xff]
    %v1605 = vld [vmem:[%s1577 + $0xd8] sm:$0xff]
    %v1607 = vsel %vm92, %v1564, 0
    %v1610 = vsel %vm92, %v1569, 0
    %v1613 = vsel %vm92, %v1574, 0
    %1615 = vmatprep.subr.mxu0 0.0
    %1616 = vmatpush1.msra.mxu0 0.0
    %1617 = vmatprep.subr.mxu0 0.0
    %1618 = vmatpush1.msra.mxu0 0.0
    %1619 = vmatprep.subr.mxu0 %v1605
    %1620 = vmatpush1.msra.mxu0 %v1604
    %1621 = vmatprep.subr.mxu0 %v1603
    %1622 = vmatpush1.msra.mxu0 %v1602
    %1623 = vmatprep.subr.mxu0 %v1601
    %1624 = vmatpush1.msra.mxu0 %v1600
    %1625 = vmatprep.subr.mxu0 %v1599
    %1626 = vmatpush1.msra.mxu0 %v1598
    %1627 = vmatprep.subr.mxu0 %v1597
    %1628 = vmatpush1.msra.mxu0 %v1596
    %1629 = vmatprep.subr.mxu0 %v1595
    %1630 = vmatpush1.msra.mxu0 %v1594
    %1631 = vmatprep.subr.mxu0 %v1593
    %1632 = vmatpush1.msra.mxu0 %v1592
    %1633 = vmatprep.subr.mxu0 %v1591
    %1634 = vmatpush1.msra.mxu0 %v1590
    %1635 = vmatprep.subr.mxu0 %v1589
    %1636 = vmatpush1.msra.mxu0 %v1588
    %1637 = vmatprep.subr.mxu0 %v1587
    %1638 = vmatpush1.msra.mxu0 %v1586
    %1639 = vmatprep.subr.mxu0 %v1585
    %1640 = vmatpush1.msra.mxu0 %v1584
    %1641 = vmatprep.subr.mxu0 %v1583
    %1642 = vmatpush1.msra.mxu0 %v1582
    %1643 = vmatprep.subr.mxu0 %v1581
    %1644 = vmatpush1.msra.mxu0 %v1580
    %1645 = vmatprep.subr.mxu0 %v1579
    %1646 = vmatpush1.msra.mxu0 %v1578
    %1647 = vmatprep.subr.mxu0 0.0
    %1648 = vmatpush2.msra.mxu0 0.0
    %1649 = vmatprep.subr.mxu0 0.0
    %1650 = vmatpush2.msra.mxu0 0.0
    %1651 = vmatprep.subr.mxu0 0.0
    %1652 = vmatpush2.msra.mxu0 0.0
    %1653 = vmatprep.subr.mxu0 0.0
    %1654 = vmatpush2.msra.mxu0 0.0
    %1655 = vmatprep.subr.mxu0 0.0
    %1656 = vmatpush2.msra.mxu0 0.0
    %1657 = vmatprep.subr.mxu0 0.0
    %1658 = vmatpush2.msra.mxu0 0.0
    %1659 = vmatprep.subr.mxu0 0.0
    %1660 = vmatpush2.msra.mxu0 0.0
    %1661 = vmatprep.subr.mxu0 0.0
    %1662 = vmatpush2.msra.mxu0 0.0
    %1663 = vmatprep.subr.mxu0 0.0
    %1664 = vmatpush2.msra.mxu0 0.0
    %1665 = vmatprep.subr.mxu0 0.0
    %1666 = vmatpush2.msra.mxu0 0.0
    %1667 = vmatprep.subr.mxu0 0.0
    %1668 = vmatpush2.msra.mxu0 0.0
    %1669 = vmatprep.subr.mxu0 0.0
    %1670 = vmatpush2.msra.mxu0 0.0
    %1671 = vmatprep.subr.mxu0 0.0
    %1672 = vmatpush2.msra.mxu0 0.0
    %1673 = vmatprep.subr.mxu0 0.0
    %1674 = vmatpush2.msra.mxu0 0.0
    %1675 = vmatprep.subr.mxu0 0.0
    %1676 = vmatpush2.msra.mxu0 0.0
    %1677 = vmatprep.subr.mxu0 0.0
    %1678 = vmatpush2.msra.mxu0 0.0
    %1679 = vmatprep.mubr.f32.mxu0 0.0
    %1680 = vmatmul.mubr.f32.gmra.mxu0 %v1607
    %v1681 = vpop.f32.mrf.mxu0
    %v1682 = vadd.f32 0.0, %v1681
    %v1683 = vpop.f32.mrf.mxu0
    %v1684 = vadd.f32 0.0, %v1683
    %1685 = vmatprep.mubr.f32.mxu0 0.0
    %1686 = vmatmul.mubr.f32.gmra.mxu0 %v1610
    %v1687 = vpop.f32.mrf.mxu0
    %v1688 = vadd.f32 0.0, %v1687
    %v1689 = vpop.f32.mrf.mxu0
    %v1690 = vadd.f32 0.0, %v1689
    %1691 = vmatprep.mubr.f32.mxu0 0.0
    %1692 = vmatmul.mubr.f32.gmra.mxu0 %v1613
    %v1693 = vpop.f32.mrf.mxu0
    %v1694 = vadd.f32 0.0, %v1693
    %v1695 = vpop.f32.mrf.mxu0
    %v1696 = vadd.f32 0.0, %v1695
    %1697 = vdwg.mxu0
    %v1698 = vadd.f32 %v1478, %v1682
    %v1699 = vadd.f32 %v1479, %v1684
    %v1700 = vadd.f32 %v1480, %v1688
    %v1701 = vadd.f32 %v1481, %v1690
    %v1702 = vadd.f32 %v1482, %v1694
    %v1703 = vadd.f32 %v1483, %v1696
    %v1704 = vld [vmem:[%s6] sm:$0x77]
    %v1706 = vlaneseq
    %v1707 = vshrl.u32 %v1706, 7
    %v1708 = vsub.s32 0, %v1707
    %v1709 = vrot.slane %v1704, %v1708
    %v1710 = vlaneseq
    %v1711 = vshrl.u32 %v1710, 7
    %v1712 = vsub.s32 4, %v1711
    %v1713 = vrot.slane %v1704, %v1712
    %v1716 = vlaneseq
    %v1717 = vshrl.u32 %v1716, 7
    %v1718 = vsub.s32 0, %v1717
    %v1719 = vrot.slane %v1709, %v1718
    %v1720 = vlaneseq
    %v1721 = vshrl.u32 %v1720, 7
    %v1722 = vsub.s32 0, %v1721
    %v1723 = vrot.slane %v1713, %v1722
    %v1724 = vadd.f32 %v1698, %v1719
    %v1725 = vadd.f32 %v1699, %v1723
    %v1726 = vadd.f32 %v1700, %v1719
    %v1727 = vadd.f32 %v1701, %v1723
    %v1728 = vadd.f32 %v1702, %v1719
    %v1729 = vadd.f32 %v1703, %v1723
    %v1730 = vld [vmem:[%s7] sm:$0xff]
    %v1731 = vld [vmem:[%s7 + $0x8] sm:$0xff]
    %v1732 = vld [vmem:[%s7 + $0x10] sm:$0xff]
    %v1733 = vld [vmem:[%s7 + $0x18] sm:$0xff]
    %v1734 = vld [vmem:[%s7 + $0x20] sm:$0xff]
    %v1735 = vld [vmem:[%s7 + $0x28] sm:$0xff]
    %v1736 = vld [vmem:[%s7 + $0x30] sm:$0xff]
    %v1737 = vld [vmem:[%s7 + $0x38] sm:$0xff]
    %v1738 = vld [vmem:[%s7 + $0x40] sm:$0xff]
    %v1739 = vld [vmem:[%s7 + $0x48] sm:$0xff]
    %v1740 = vld [vmem:[%s7 + $0x50] sm:$0xff]
    %v1741 = vld [vmem:[%s7 + $0x58] sm:$0xff]
    %v1742 = vld [vmem:[%s7 + $0x60] sm:$0xff]
    %v1743 = vld [vmem:[%s7 + $0x68] sm:$0xff]
    %v1744 = vld [vmem:[%s7 + $0x70] sm:$0xff]
    %v1745 = vld [vmem:[%s7 + $0x78] sm:$0xff]
    %v1746 = vld [vmem:[%s7 + $0x80] sm:$0xff]
    %v1747 = vld [vmem:[%s7 + $0x88] sm:$0xff]
    %v1748 = vld [vmem:[%s7 + $0x90] sm:$0xff]
    %v1749 = vld [vmem:[%s7 + $0x98] sm:$0xff]
    %v1750 = vld [vmem:[%s8] sm:$0xff]
    %v1751 = vld [vmem:[%s8 + $0x8] sm:$0xff]
    %v1752 = vld [vmem:[%s8 + $0x10] sm:$0xff]
    %v1753 = vld [vmem:[%s8 + $0x18] sm:$0xff]
    %v1754 = vadd.f32 %v1724, %v1726
    %v1755 = vsel %vm626, %v1728, 0.0
    %v1756 = vadd.f32 %v1754, %v1755
    %v1757 = vrot.slane %v1756, 4
    %v1758 = vadd.f32 %v1756, %v1757
    %v1759 = vrot.slane %v1758, 2
    %v1760 = vadd.f32 %v1758, %v1759
    %v1761 = vrot.slane %v1760, 1
    %v1762 = vadd.f32 %v1760, %v1761
    %vm1763 = vcmask 261120
    %v1764 = vsel %vm1763, %v1725, 0.0
    %v1765 = vsel %vm1763, %v1727, 0.0
    %v1766 = vadd.f32 %v1764, %v1765
    %vm1767 = vcmask 257024
    %v1768 = vsel %vm1767, %v1729, 0.0
    %v1769 = vadd.f32 %v1766, %v1768
    %v1770 = vrot.slane %v1769, 4
    %v1771 = vadd.f32 %v1769, %v1770
    %v1772 = vrot.slane %v1771, 2
    %v1773 = vadd.f32 %v1771, %v1772
    %v1774 = vrot.slane %v1773, 1
    %v1775 = vadd.f32 %v1773, %v1774
    %v1777 = vsel %vm1763, %v1775, 0
    %1779 = vmatprep.subr.mxu0 0.0
    %1780 = vmatpush1.msra.mxu0 %v1745
    %1781 = vmatprep.subr.mxu0 0.0
    %1782 = vmatpush1.msra.mxu0 %v1744
    %1783 = vmatprep.subr.mxu0 0.0
    %1784 = vmatpush1.msra.mxu0 %v1743
    %1785 = vmatprep.subr.mxu0 0.0
    %1786 = vmatpush1.msra.mxu0 %v1742
    %1787 = vmatprep.subr.mxu0 0.0
    %1788 = vmatpush1.msra.mxu0 %v1741
    %1789 = vmatprep.subr.mxu0 0.0
    %1790 = vmatpush1.msra.mxu0 %v1740
    %1791 = vmatprep.subr.mxu0 0.0
    %1792 = vmatpush1.msra.mxu0 %v1739
    %1793 = vmatprep.subr.mxu0 0.0
    %1794 = vmatpush1.msra.mxu0 %v1738
    %1795 = vmatprep.subr.mxu0 0.0
    %1796 = vmatpush1.msra.mxu0 %v1737
    %1797 = vmatprep.subr.mxu0 0.0
    %1798 = vmatpush1.msra.mxu0 %v1736
    %1799 = vmatprep.subr.mxu0 0.0
    %1800 = vmatpush1.msra.mxu0 %v1735
    %1801 = vmatprep.subr.mxu0 0.0
    %1802 = vmatpush1.msra.mxu0 %v1734
    %1803 = vmatprep.subr.mxu0 0.0
    %1804 = vmatpush1.msra.mxu0 %v1733
    %1805 = vmatprep.subr.mxu0 0.0
    %1806 = vmatpush1.msra.mxu0 %v1732
    %1807 = vmatprep.subr.mxu0 0.0
    %1808 = vmatpush1.msra.mxu0 %v1731
    %1809 = vmatprep.subr.mxu0 0.0
    %1810 = vmatpush1.msra.mxu0 %v1730
    %1811 = vmatprep.subr.mxu0 0.0
    %1812 = vmatpush2.msra.mxu0 0.0
    %1813 = vmatprep.subr.mxu0 0.0
    %1814 = vmatpush2.msra.mxu0 0.0
    %1815 = vmatprep.subr.mxu0 0.0
    %1816 = vmatpush2.msra.mxu0 0.0
    %1817 = vmatprep.subr.mxu0 0.0
    %1818 = vmatpush2.msra.mxu0 0.0
    %1819 = vmatprep.subr.mxu0 0.0
    %1820 = vmatpush2.msra.mxu0 0.0
    %1821 = vmatprep.subr.mxu0 0.0
    %1822 = vmatpush2.msra.mxu0 0.0
    %1823 = vmatprep.subr.mxu0 0.0
    %1824 = vmatpush2.msra.mxu0 0.0
    %1825 = vmatprep.subr.mxu0 0.0
    %1826 = vmatpush2.msra.mxu0 0.0
    %1827 = vmatprep.subr.mxu0 0.0
    %1828 = vmatpush2.msra.mxu0 0.0
    %1829 = vmatprep.subr.mxu0 0.0
    %1830 = vmatpush2.msra.mxu0 0.0
    %1831 = vmatprep.subr.mxu0 0.0
    %1832 = vmatpush2.msra.mxu0 0.0
    %1833 = vmatprep.subr.mxu0 0.0
    %1834 = vmatpush2.msra.mxu0 0.0
    %1835 = vmatprep.subr.mxu0 0.0
    %1836 = vmatpush2.msra.mxu0 %v1749
    %1837 = vmatprep.subr.mxu0 0.0
    %1838 = vmatpush2.msra.mxu0 %v1748
    %1839 = vmatprep.subr.mxu0 0.0
    %1840 = vmatpush2.msra.mxu0 %v1747
    %1841 = vmatprep.subr.mxu0 0.0
    %1842 = vmatpush2.msra.mxu0 %v1746
    %1843 = vmatprep.mubr.f32.mxu0 %v1777
    %1844 = vmatmul.mubr.f32.gmra.mxu0 %v1762
    %v1845 = vpop.f32.mrf.mxu0
    %v1846 = vadd.f32 0.0, %v1845
    %v1847 = vpop.f32.mrf.mxu0
    %1848 = vdwg.mxu0
    %v1849 = vrcp.pop 200.0
    %v1850 = vmul.f32 %v1846, %v1849
    %vm1851 = vcmask 130048
    %v1853 = vsel %vm1851, %v1850, 0
    %1855 = vmatprep.subr.mxu0 0.0
    %1856 = vmatpush1.msra.mxu0 0.0
    %1857 = vmatprep.subr.mxu0 0.0
    %1858 = vmatpush1.msra.mxu0 0.0
    %1859 = vmatprep.subr.mxu0 0.0
    %1860 = vmatpush1.msra.mxu0 0.0
    %1861 = vmatprep.subr.mxu0 0.0
    %1862 = vmatpush1.msra.mxu0 0.0
    %1863 = vmatprep.subr.mxu0 0.0
    %1864 = vmatpush1.msra.mxu0 0.0
    %1865 = vmatprep.subr.mxu0 0.0
    %1866 = vmatpush1.msra.mxu0 0.0
    %1867 = vmatprep.subr.mxu0 0.0
    %1868 = vmatpush1.msra.mxu0 0.0
    %1869 = vmatprep.subr.mxu0 0.0
    %1870 = vmatpush1.msra.mxu0 0.0
    %1871 = vmatprep.subr.mxu0 0.0
    %1872 = vmatpush1.msra.mxu0 0.0
    %1873 = vmatprep.subr.mxu0 0.0
    %1874 = vmatpush1.msra.mxu0 0.0
    %1875 = vmatprep.subr.mxu0 0.0
    %1876 = vmatpush1.msra.mxu0 0.0
    %1877 = vmatprep.subr.mxu0 0.0
    %1878 = vmatpush1.msra.mxu0 0.0
    %1879 = vmatprep.subr.mxu0 0.0
    %1880 = vmatpush1.msra.mxu0 0.0
    %1881 = vmatprep.subr.mxu0 0.0
    %1882 = vmatpush1.msra.mxu0 0.0
    %1883 = vmatprep.subr.mxu0 %v1753
    %1884 = vmatpush1.msra.mxu0 %v1752
    %1885 = vmatprep.subr.mxu0 %v1751
    %1886 = vmatpush1.msra.mxu0 %v1750
    %1887 = vmatprep.subr.mxu0 0.0
    %1888 = vmatpush2.msra.mxu0 0.0
    %1889 = vmatprep.subr.mxu0 0.0
    %1890 = vmatpush2.msra.mxu0 0.0
    %1891 = vmatprep.subr.mxu0 0.0
    %1892 = vmatpush2.msra.mxu0 0.0
    %1893 = vmatprep.subr.mxu0 0.0
    %1894 = vmatpush2.msra.mxu0 0.0
    %1895 = vmatprep.subr.mxu0 0.0
    %1896 = vmatpush2.msra.mxu0 0.0
    %1897 = vmatprep.subr.mxu0 0.0
    %1898 = vmatpush2.msra.mxu0 0.0
    %1899 = vmatprep.subr.mxu0 0.0
    %1900 = vmatpush2.msra.mxu0 0.0
    %1901 = vmatprep.subr.mxu0 0.0
    %1902 = vmatpush2.msra.mxu0 0.0
    %1903 = vmatprep.subr.mxu0 0.0
    %1904 = vmatpush2.msra.mxu0 0.0
    %1905 = vmatprep.subr.mxu0 0.0
    %1906 = vmatpush2.msra.mxu0 0.0
    %1907 = vmatprep.subr.mxu0 0.0
    %1908 = vmatpush2.msra.mxu0 0.0
    %1909 = vmatprep.subr.mxu0 0.0
    %1910 = vmatpush2.msra.mxu0 0.0
    %1911 = vmatprep.subr.mxu0 0.0
    %1912 = vmatpush2.msra.mxu0 0.0
    %1913 = vmatprep.subr.mxu0 0.0
    %1914 = vmatpush2.msra.mxu0 0.0
    %1915 = vmatprep.subr.mxu0 0.0
    %1916 = vmatpush2.msra.mxu0 0.0
    %1917 = vmatprep.subr.mxu0 0.0
    %1918 = vmatpush2.msra.mxu0 0.0
    %1919 = vmatprep.mubr.f32.mxu0 0.0
    %1920 = vmatmul.mubr.f32.gmra.mxu0 %v1853
    %v1921 = vpop.f32.mrf.mxu0
    %v1922 = vadd.f32 0.0, %v1921
    %v1923 = vpop.f32.mrf.mxu0
    %v1924 = vadd.f32 0.0, %v1923
    %1925 = vdwg.mxu0
    %v1926 = vlaneseq
    %v1927 = vshrl.u32 %v1926, 7
    %v1928 = vsub.s32 0, %v1927
    %v1929 = vrot.slane %v1922, %v1928
    %v1930 = vlaneseq
    %v1931 = vshrl.u32 %v1930, 7
    %v1932 = vsub.s32 0, %v1931
    %v1933 = vrot.slane %v1924, %v1932
    %v1934 = vsub.f32 %v1724, %v1929
    %v1935 = vsub.f32 %v1725, %v1933
    %v1936 = vsub.f32 %v1726, %v1929
    %v1937 = vsub.f32 %v1727, %v1933
    %v1938 = vsub.f32 %v1728, %v1929
    %v1939 = vsub.f32 %v1729, %v1933
    %v1940 = vmul.f32 %v1934, %v1934
    %v1941 = vmul.f32 %v1935, %v1935
    %v1942 = vmul.f32 %v1936, %v1936
    %v1943 = vmul.f32 %v1937, %v1937
    %v1944 = vmul.f32 %v1938, %v1938
    %v1945 = vmul.f32 %v1939, %v1939
    %v1946 = vadd.f32 %v1940, %v1942
    %v1947 = vsel %vm626, %v1944, 0.0
    %v1948 = vadd.f32 %v1946, %v1947
    %v1949 = vrot.slane %v1948, 4
    %v1950 = vadd.f32 %v1948, %v1949
    %v1951 = vrot.slane %v1950, 2
    %v1952 = vadd.f32 %v1950, %v1951
    %v1953 = vrot.slane %v1952, 1
    %v1954 = vadd.f32 %v1952, %v1953
    %v1955 = vsel %vm1763, %v1941, 0.0
    %v1956 = vsel %vm1763, %v1943, 0.0
    %v1957 = vadd.f32 %v1955, %v1956
    %v1958 = vsel %vm1767, %v1945, 0.0
    %v1959 = vadd.f32 %v1957, %v1958
    %v1960 = vrot.slane %v1959, 4
    %v1961 = vadd.f32 %v1959, %v1960
    %v1962 = vrot.slane %v1961, 2
    %v1963 = vadd.f32 %v1961, %v1962
    %v1964 = vrot.slane %v1963, 1
    %v1965 = vadd.f32 %v1963, %v1964
    %v1967 = vsel %vm1763, %v1965, 0
    %1969 = vmatprep.subr.mxu0 0.0
    %1970 = vmatpush1.msra.mxu0 %v1745
    %1971 = vmatprep.subr.mxu0 0.0
    %1972 = vmatpush1.msra.mxu0 %v1744
    %1973 = vmatprep.subr.mxu0 0.0
    %1974 = vmatpush1.msra.mxu0 %v1743
    %1975 = vmatprep.subr.mxu0 0.0
    %1976 = vmatpush1.msra.mxu0 %v1742
    %1977 = vmatprep.subr.mxu0 0.0
    %1978 = vmatpush1.msra.mxu0 %v1741
    %1979 = vmatprep.subr.mxu0 0.0
    %1980 = vmatpush1.msra.mxu0 %v1740
    %1981 = vmatprep.subr.mxu0 0.0
    %1982 = vmatpush1.msra.mxu0 %v1739
    %1983 = vmatprep.subr.mxu0 0.0
    %1984 = vmatpush1.msra.mxu0 %v1738
    %1985 = vmatprep.subr.mxu0 0.0
    %1986 = vmatpush1.msra.mxu0 %v1737
    %1987 = vmatprep.subr.mxu0 0.0
    %1988 = vmatpush1.msra.mxu0 %v1736
    %1989 = vmatprep.subr.mxu0 0.0
    %1990 = vmatpush1.msra.mxu0 %v1735
    %1991 = vmatprep.subr.mxu0 0.0
    %1992 = vmatpush1.msra.mxu0 %v1734
    %1993 = vmatprep.subr.mxu0 0.0
    %1994 = vmatpush1.msra.mxu0 %v1733
    %1995 = vmatprep.subr.mxu0 0.0
    %1996 = vmatpush1.msra.mxu0 %v1732
    %1997 = vmatprep.subr.mxu0 0.0
    %1998 = vmatpush1.msra.mxu0 %v1731
    %1999 = vmatprep.subr.mxu0 0.0
    %2000 = vmatpush1.msra.mxu0 %v1730
    %2001 = vmatprep.subr.mxu0 0.0
    %2002 = vmatpush2.msra.mxu0 0.0
    %2003 = vmatprep.subr.mxu0 0.0
    %2004 = vmatpush2.msra.mxu0 0.0
    %2005 = vmatprep.subr.mxu0 0.0
    %2006 = vmatpush2.msra.mxu0 0.0
    %2007 = vmatprep.subr.mxu0 0.0
    %2008 = vmatpush2.msra.mxu0 0.0
    %2009 = vmatprep.subr.mxu0 0.0
    %2010 = vmatpush2.msra.mxu0 0.0
    %2011 = vmatprep.subr.mxu0 0.0
    %2012 = vmatpush2.msra.mxu0 0.0
    %2013 = vmatprep.subr.mxu0 0.0
    %2014 = vmatpush2.msra.mxu0 0.0
    %2015 = vmatprep.subr.mxu0 0.0
    %2016 = vmatpush2.msra.mxu0 0.0
    %2017 = vmatprep.subr.mxu0 0.0
    %2018 = vmatpush2.msra.mxu0 0.0
    %2019 = vmatprep.subr.mxu0 0.0
    %2020 = vmatpush2.msra.mxu0 0.0
    %2021 = vmatprep.subr.mxu0 0.0
    %2022 = vmatpush2.msra.mxu0 0.0
    %2023 = vmatprep.subr.mxu0 0.0
    %2024 = vmatpush2.msra.mxu0 0.0
    %2025 = vmatprep.subr.mxu0 0.0
    %2026 = vmatpush2.msra.mxu0 %v1749
    %2027 = vmatprep.subr.mxu0 0.0
    %2028 = vmatpush2.msra.mxu0 %v1748
    %2029 = vmatprep.subr.mxu0 0.0
    %2030 = vmatpush2.msra.mxu0 %v1747
    %2031 = vmatprep.subr.mxu0 0.0
    %2032 = vmatpush2.msra.mxu0 %v1746
    %2033 = vmatprep.mubr.f32.mxu0 %v1967
    %2034 = vmatmul.mubr.f32.gmra.mxu0 %v1954
    %v2035 = vpop.f32.mrf.mxu0
    %v2036 = vadd.f32 0.0, %v2035
    %v2037 = vpop.f32.mrf.mxu0
    %2038 = vdwg.mxu0
    %v2039 = vmul.f32 %v2036, %v1849
    %v2041 = vsel %vm1851, %v2039, 0
    %2043 = vmatprep.subr.mxu0 0.0
    %2044 = vmatpush1.msra.mxu0 0.0
    %2045 = vmatprep.subr.mxu0 0.0
    %2046 = vmatpush1.msra.mxu0 0.0
    %2047 = vmatprep.subr.mxu0 0.0
    %2048 = vmatpush1.msra.mxu0 0.0
    %2049 = vmatprep.subr.mxu0 0.0
    %2050 = vmatpush1.msra.mxu0 0.0
    %2051 = vmatprep.subr.mxu0 0.0
    %2052 = vmatpush1.msra.mxu0 0.0
    %2053 = vmatprep.subr.mxu0 0.0
    %2054 = vmatpush1.msra.mxu0 0.0
    %2055 = vmatprep.subr.mxu0 0.0
    %2056 = vmatpush1.msra.mxu0 0.0
    %2057 = vmatprep.subr.mxu0 0.0
    %2058 = vmatpush1.msra.mxu0 0.0
    %2059 = vmatprep.subr.mxu0 0.0
    %2060 = vmatpush1.msra.mxu0 0.0
    %2061 = vmatprep.subr.mxu0 0.0
    %2062 = vmatpush1.msra.mxu0 0.0
    %2063 = vmatprep.subr.mxu0 0.0
    %2064 = vmatpush1.msra.mxu0 0.0
    %2065 = vmatprep.subr.mxu0 0.0
    %2066 = vmatpush1.msra.mxu0 0.0
    %2067 = vmatprep.subr.mxu0 0.0
    %2068 = vmatpush1.msra.mxu0 0.0
    %2069 = vmatprep.subr.mxu0 0.0
    %2070 = vmatpush1.msra.mxu0 0.0
    %2071 = vmatprep.subr.mxu0 %v1753
    %2072 = vmatpush1.msra.mxu0 %v1752
    %2073 = vmatprep.subr.mxu0 %v1751
    %2074 = vmatpush1.msra.mxu0 %v1750
    %2075 = vmatprep.subr.mxu0 0.0
    %2076 = vmatpush2.msra.mxu0 0.0
    %2077 = vmatprep.subr.mxu0 0.0
    %2078 = vmatpush2.msra.mxu0 0.0
    %2079 = vmatprep.subr.mxu0 0.0
    %2080 = vmatpush2.msra.mxu0 0.0
    %2081 = vmatprep.subr.mxu0 0.0
    %2082 = vmatpush2.msra.mxu0 0.0
    %2083 = vmatprep.subr.mxu0 0.0
    %2084 = vmatpush2.msra.mxu0 0.0
    %2085 = vmatprep.subr.mxu0 0.0
    %2086 = vmatpush2.msra.mxu0 0.0
    %2087 = vmatprep.subr.mxu0 0.0
    %2088 = vmatpush2.msra.mxu0 0.0
    %2089 = vmatprep.subr.mxu0 0.0
    %2090 = vmatpush2.msra.mxu0 0.0
    %2091 = vmatprep.subr.mxu0 0.0
    %2092 = vmatpush2.msra.mxu0 0.0
    %2093 = vmatprep.subr.mxu0 0.0
    %2094 = vmatpush2.msra.mxu0 0.0
    %2095 = vmatprep.subr.mxu0 0.0
    %2096 = vmatpush2.msra.mxu0 0.0
    %2097 = vmatprep.subr.mxu0 0.0
    %2098 = vmatpush2.msra.mxu0 0.0
    %2099 = vmatprep.subr.mxu0 0.0
    %2100 = vmatpush2.msra.mxu0 0.0
    %2101 = vmatprep.subr.mxu0 0.0
    %2102 = vmatpush2.msra.mxu0 0.0
    %2103 = vmatprep.subr.mxu0 0.0
    %2104 = vmatpush2.msra.mxu0 0.0
    %2105 = vmatprep.subr.mxu0 0.0
    %2106 = vmatpush2.msra.mxu0 0.0
    %2107 = vmatprep.mubr.f32.mxu0 0.0
    %2108 = vmatmul.mubr.f32.gmra.mxu0 %v2041
    %v2109 = vpop.f32.mrf.mxu0
    %v2110 = vadd.f32 1e-05, %v2109
    %v2111 = vpop.f32.mrf.mxu0
    %v2112 = vadd.f32 1e-05, %v2111
    %2113 = vdwg.mxu0
    %v2114 = vrsqrt.pop %v2110
    %v2115 = vrsqrt.pop %v2112
    %v2116 = vlaneseq
    %v2117 = vshrl.u32 %v2116, 7
    %v2118 = vsub.s32 0, %v2117
    %v2119 = vrot.slane %v2114, %v2118
    %v2120 = vlaneseq
    %v2121 = vshrl.u32 %v2120, 7
    %v2122 = vsub.s32 0, %v2121
    %v2123 = vrot.slane %v2115, %v2122
    %v2124 = vmul.f32 %v1934, %v2119
    %v2125 = vmul.f32 %v1935, %v2123
    %v2126 = vmul.f32 %v1936, %v2119
    %v2127 = vmul.f32 %v1937, %v2123
    %v2128 = vmul.f32 %v1938, %v2119
    %v2129 = vmul.f32 %v1939, %v2123
    %v2130 = vlaneseq
    %v2131 = vshrl.u32 %v2130, 7
    %v2132 = vsub.s32 1, %v2131
    %v2133 = vrot.slane %v1704, %v2132
    %v2134 = vlaneseq
    %v2135 = vshrl.u32 %v2134, 7
    %v2136 = vsub.s32 5, %v2135
    %v2137 = vrot.slane %v1704, %v2136
    %v2140 = vlaneseq
    %v2141 = vshrl.u32 %v2140, 7
    %v2142 = vsub.s32 1, %v2141
    %v2143 = vrot.slane %v2133, %v2142
    %v2144 = vlaneseq
    %v2145 = vshrl.u32 %v2144, 7
    %v2146 = vsub.s32 1, %v2145
    %v2147 = vrot.slane %v2137, %v2146
    %v2148 = vmul.f32 %v2124, %v2143
    %v2149 = vmul.f32 %v2125, %v2147
    %v2150 = vmul.f32 %v2126, %v2143
    %v2151 = vmul.f32 %v2127, %v2147
    %v2152 = vmul.f32 %v2128, %v2143
    %v2153 = vmul.f32 %v2129, %v2147
    %v2154 = vlaneseq
    %v2155 = vshrl.u32 %v2154, 7
    %v2156 = vsub.s32 2, %v2155
    %v2157 = vrot.slane %v1704, %v2156
    %v2158 = vlaneseq
    %v2159 = vshrl.u32 %v2158, 7
    %v2160 = vsub.s32 6, %v2159
    %v2161 = vrot.slane %v1704, %v2160
    %v2164 = vlaneseq
    %v2165 = vshrl.u32 %v2164, 7
    %v2166 = vsub.s32 2, %v2165
    %v2167 = vrot.slane %v2157, %v2166
    %v2168 = vlaneseq
    %v2169 = vshrl.u32 %v2168, 7
    %v2170 = vsub.s32 2, %v2169
    %v2171 = vrot.slane %v2161, %v2170
    %v2172 = vadd.f32 %v2148, %v2167
    %v2173 = vadd.f32 %v2149, %v2171
    %v2174 = vadd.f32 %v2150, %v2167
    %v2175 = vadd.f32 %v2151, %v2171
    %v2176 = vadd.f32 %v2152, %v2167
    %v2177 = vadd.f32 %v2153, %v2171
    %v2178 = vmax.f32 %v2172, 0.0
    %v2179 = vmax.f32 %v2173, 0.0
    %v2180 = vmax.f32 %v2174, 0.0
    %v2181 = vmax.f32 %v2175, 0.0
    %v2182 = vmax.f32 %v2176, 0.0
    %v2183 = vmax.f32 %v2177, 0.0
    %v2184 = vld [vmem:[%s9] sm:$0xff]
    %v2185 = vld [vmem:[%s9 + $0x8] sm:$0x3]
    %vm2186 = vcmask 162816
    %v2188 = vsel %vm2186, %v2184, 0
    %v2191 = vsel %vm2186, %v2185, 0
    %v2194 = vsel %vm626, %v2182, 0
    %v2197 = vsel %vm626, %v2183, 0
    %2199 = vmatprep.subr.mxu0 0.0
    %2200 = vmatpush1.msra.mxu0 0.0
    %2201 = vmatprep.subr.mxu0 0.0
    %2202 = vmatpush1.msra.mxu0 0.0
    %2203 = vmatprep.subr.mxu0 0.0
    %2204 = vmatpush1.msra.mxu0 0.0
    %2205 = vmatprep.subr.mxu0 0.0
    %2206 = vmatpush1.msra.mxu0 0.0
    %2207 = vmatprep.subr.mxu0 0.0
    %2208 = vmatpush1.msra.mxu0 0.0
    %2209 = vmatprep.subr.mxu0 0.0
    %2210 = vmatpush1.msra.mxu0 0.0
    %2211 = vmatprep.subr.mxu0 0.0
    %2212 = vmatpush1.msra.mxu0 0.0
    %2213 = vmatprep.subr.mxu0 0.0
    %2214 = vmatpush1.msra.mxu0 0.0
    %2215 = vmatprep.subr.mxu0 0.0
    %2216 = vmatpush1.msra.mxu0 0.0
    %2217 = vmatprep.subr.mxu0 0.0
    %2218 = vmatpush1.msra.mxu0 0.0
    %2219 = vmatprep.subr.mxu0 0.0
    %2220 = vmatpush1.msra.mxu0 0.0
    %2221 = vmatprep.subr.mxu0 0.0
    %2222 = vmatpush1.msra.mxu0 0.0
    %2223 = vmatprep.subr.mxu0 0.0
    %2224 = vmatpush1.msra.mxu0 0.0
    %2225 = vmatprep.subr.mxu0 %v2197
    %2226 = vmatpush1.msra.mxu0 %v2194
    %2227 = vmatprep.subr.mxu0 %v2181
    %2228 = vmatpush1.msra.mxu0 %v2180
    %2229 = vmatprep.subr.mxu0 %v2179
    %2230 = vmatpush1.msra.mxu0 %v2178
    %2231 = vmatprep.subr.mxu0 0.0
    %2232 = vmatpush2.msra.mxu0 0.0
    %2233 = vmatprep.subr.mxu0 0.0
    %2234 = vmatpush2.msra.mxu0 0.0
    %2235 = vmatprep.subr.mxu0 0.0
    %2236 = vmatpush2.msra.mxu0 0.0
    %2237 = vmatprep.subr.mxu0 0.0
    %2238 = vmatpush2.msra.mxu0 0.0
    %2239 = vmatprep.subr.mxu0 0.0
    %2240 = vmatpush2.msra.mxu0 0.0
    %2241 = vmatprep.subr.mxu0 0.0
    %2242 = vmatpush2.msra.mxu0 0.0
    %2243 = vmatprep.subr.mxu0 0.0
    %2244 = vmatpush2.msra.mxu0 0.0
    %2245 = vmatprep.subr.mxu0 0.0
    %2246 = vmatpush2.msra.mxu0 0.0
    %2247 = vmatprep.subr.mxu0 0.0
    %2248 = vmatpush2.msra.mxu0 0.0
    %2249 = vmatprep.subr.mxu0 0.0
    %2250 = vmatpush2.msra.mxu0 0.0
    %2251 = vmatprep.subr.mxu0 0.0
    %2252 = vmatpush2.msra.mxu0 0.0
    %2253 = vmatprep.subr.mxu0 0.0
    %2254 = vmatpush2.msra.mxu0 0.0
    %2255 = vmatprep.subr.mxu0 0.0
    %2256 = vmatpush2.msra.mxu0 0.0
    %2257 = vmatprep.subr.mxu0 0.0
    %2258 = vmatpush2.msra.mxu0 0.0
    %2259 = vmatprep.subr.mxu0 0.0
    %2260 = vmatpush2.msra.mxu0 0.0
    %2261 = vmatprep.subr.mxu0 0.0
    %2262 = vmatpush2.msra.mxu0 0.0
    %2263 = vmatprep.mubr.f32.mxu0 0.0
    %2264 = vmatmul.mubr.f32.gmra.mxu0 %v2188
    %v2265 = vpop.f32.mrf.mxu0
    %v2266 = vadd.f32 0.0, %v2265
    %v2267 = vpop.f32.mrf.mxu0
    %v2268 = vadd.f32 0.0, %v2267
    %2269 = vmatprep.mubr.f32.mxu0 0.0
    %2270 = vmatmul.mubr.f32.gmra.mxu0 %v2191
    %v2271 = vpop.f32.mrf.mxu0
    %v2272 = vadd.f32 0.0, %v2271
    %v2273 = vpop.f32.mrf.mxu0
    %v2274 = vadd.f32 0.0, %v2273
    %2275 = vdwg.mxu0
    %s2276 = scalar_lea.vmem %s9, 16
    %v2277 = vld [vmem:[%s2276] sm:$0xff]
    %v2278 = vld [vmem:[%s2276 + $0x8] sm:$0x3]
    %v2280 = vsel %vm2186, %v2277, 0
    %v2283 = vsel %vm2186, %v2278, 0
    %2285 = vmatprep.subr.mxu0 0.0
    %2286 = vmatpush1.msra.mxu0 0.0
    %2287 = vmatprep.subr.mxu0 0.0
    %2288 = vmatpush1.msra.mxu0 0.0
    %2289 = vmatprep.subr.mxu0 0.0
    %2290 = vmatpush1.msra.mxu0 0.0
    %2291 = vmatprep.subr.mxu0 0.0
    %2292 = vmatpush1.msra.mxu0 0.0
    %2293 = vmatprep.subr.mxu0 0.0
    %2294 = vmatpush1.msra.mxu0 0.0
    %2295 = vmatprep.subr.mxu0 0.0
    %2296 = vmatpush1.msra.mxu0 0.0
    %2297 = vmatprep.subr.mxu0 0.0
    %2298 = vmatpush1.msra.mxu0 0.0
    %2299 = vmatprep.subr.mxu0 0.0
    %2300 = vmatpush1.msra.mxu0 0.0
    %2301 = vmatprep.subr.mxu0 0.0
    %2302 = vmatpush1.msra.mxu0 0.0
    %2303 = vmatprep.subr.mxu0 0.0
    %2304 = vmatpush1.msra.mxu0 0.0
    %2305 = vmatprep.subr.mxu0 0.0
    %2306 = vmatpush1.msra.mxu0 0.0
    %2307 = vmatprep.subr.mxu0 0.0
    %2308 = vmatpush1.msra.mxu0 0.0
    %2309 = vmatprep.subr.mxu0 0.0
    %2310 = vmatpush1.msra.mxu0 0.0
    %2311 = vmatprep.subr.mxu0 %v2197
    %2312 = vmatpush1.msra.mxu0 %v2194
    %2313 = vmatprep.subr.mxu0 %v2181
    %2314 = vmatpush1.msra.mxu0 %v2180
    %2315 = vmatprep.subr.mxu0 %v2179
    %2316 = vmatpush1.msra.mxu0 %v2178
    %2317 = vmatprep.subr.mxu0 0.0
    %2318 = vmatpush2.msra.mxu0 0.0
    %2319 = vmatprep.subr.mxu0 0.0
    %2320 = vmatpush2.msra.mxu0 0.0
    %2321 = vmatprep.subr.mxu0 0.0
    %2322 = vmatpush2.msra.mxu0 0.0
    %2323 = vmatprep.subr.mxu0 0.0
    %2324 = vmatpush2.msra.mxu0 0.0
    %2325 = vmatprep.subr.mxu0 0.0
    %2326 = vmatpush2.msra.mxu0 0.0
    %2327 = vmatprep.subr.mxu0 0.0
    %2328 = vmatpush2.msra.mxu0 0.0
    %2329 = vmatprep.subr.mxu0 0.0
    %2330 = vmatpush2.msra.mxu0 0.0
    %2331 = vmatprep.subr.mxu0 0.0
    %2332 = vmatpush2.msra.mxu0 0.0
    %2333 = vmatprep.subr.mxu0 0.0
    %2334 = vmatpush2.msra.mxu0 0.0
    %2335 = vmatprep.subr.mxu0 0.0
    %2336 = vmatpush2.msra.mxu0 0.0
    %2337 = vmatprep.subr.mxu0 0.0
    %2338 = vmatpush2.msra.mxu0 0.0
    %2339 = vmatprep.subr.mxu0 0.0
    %2340 = vmatpush2.msra.mxu0 0.0
    %2341 = vmatprep.subr.mxu0 0.0
    %2342 = vmatpush2.msra.mxu0 0.0
    %2343 = vmatprep.subr.mxu0 0.0
    %2344 = vmatpush2.msra.mxu0 0.0
    %2345 = vmatprep.subr.mxu0 0.0
    %2346 = vmatpush2.msra.mxu0 0.0
    %2347 = vmatprep.subr.mxu0 0.0
    %2348 = vmatpush2.msra.mxu0 0.0
    %2349 = vmatprep.mubr.f32.mxu0 0.0
    %2350 = vmatmul.mubr.f32.gmra.mxu0 %v2280
    %v2351 = vpop.f32.mrf.mxu0
    %v2352 = vadd.f32 0.0, %v2351
    %v2353 = vpop.f32.mrf.mxu0
    %v2354 = vadd.f32 0.0, %v2353
    %2355 = vmatprep.mubr.f32.mxu0 0.0
    %2356 = vmatmul.mubr.f32.gmra.mxu0 %v2283
    %v2357 = vpop.f32.mrf.mxu0
    %v2358 = vadd.f32 0.0, %v2357
    %v2359 = vpop.f32.mrf.mxu0
    %v2360 = vadd.f32 0.0, %v2359
    %2361 = vdwg.mxu0
    %v2362 = vmax.f32 %v2266, %v2352
    %v2363 = vmax.f32 %v2268, %v2354
    %v2364 = vmax.f32 %v2272, %v2358
    %v2365 = vmax.f32 %v2274, %v2360
    %v2366 = vld [vmem:[%s10] sm:$0xff]
    %v2367 = vld [vmem:[%s10 + $0x8] sm:$0xff]
    %v2368 = vld [vmem:[%s10 + $0x10] sm:$0xff]
    %v2369 = vld [vmem:[%s10 + $0x18] sm:$0xff]
    %v2370 = vld [vmem:[%s10 + $0x20] sm:$0xff]
    %v2371 = vld [vmem:[%s10 + $0x28] sm:$0xff]
    %v2372 = vld [vmem:[%s10 + $0x30] sm:$0xff]
    %v2373 = vld [vmem:[%s10 + $0x38] sm:$0xff]
    %v2374 = vld [vmem:[%s10 + $0x40] sm:$0xff]
    %v2375 = vld [vmem:[%s10 + $0x48] sm:$0xff]
    %v2376 = vld [vmem:[%s10 + $0x50] sm:$0xff]
    %v2377 = vld [vmem:[%s10 + $0x58] sm:$0xff]
    %v2378 = vld [vmem:[%s10 + $0x60] sm:$0xff]
    %v2379 = vld [vmem:[%s10 + $0x68] sm:$0xff]
    %v2380 = vld [vmem:[%s10 + $0x70] sm:$0xff]
    %v2381 = vld [vmem:[%s10 + $0x78] sm:$0xff]
    %v2382 = vld [vmem:[%s10 + $0x80] sm:$0xff]
    %v2383 = vld [vmem:[%s10 + $0x88] sm:$0xff]
    %v2384 = vld [vmem:[%s10 + $0x90] sm:$0xff]
    %v2385 = vld [vmem:[%s10 + $0x98] sm:$0xff]
    %v2387 = vsel %vm1763, %v2363, 0
    %v2390 = vsel %vm1763, %v2365, 0
    %2392 = vmatprep.subr.mxu0 0.0
    %2393 = vmatpush1.msra.mxu0 %v2381
    %2394 = vmatprep.subr.mxu0 0.0
    %2395 = vmatpush1.msra.mxu0 %v2380
    %2396 = vmatprep.subr.mxu0 0.0
    %2397 = vmatpush1.msra.mxu0 %v2379
    %2398 = vmatprep.subr.mxu0 0.0
    %2399 = vmatpush1.msra.mxu0 %v2378
    %2400 = vmatprep.subr.mxu0 0.0
    %2401 = vmatpush1.msra.mxu0 %v2377
    %2402 = vmatprep.subr.mxu0 0.0
    %2403 = vmatpush1.msra.mxu0 %v2376
    %2404 = vmatprep.subr.mxu0 0.0
    %2405 = vmatpush1.msra.mxu0 %v2375
    %2406 = vmatprep.subr.mxu0 0.0
    %2407 = vmatpush1.msra.mxu0 %v2374
    %2408 = vmatprep.subr.mxu0 0.0
    %2409 = vmatpush1.msra.mxu0 %v2373
    %2410 = vmatprep.subr.mxu0 0.0
    %2411 = vmatpush1.msra.mxu0 %v2372
    %2412 = vmatprep.subr.mxu0 0.0
    %2413 = vmatpush1.msra.mxu0 %v2371
    %2414 = vmatprep.subr.mxu0 0.0
    %2415 = vmatpush1.msra.mxu0 %v2370
    %2416 = vmatprep.subr.mxu0 0.0
    %2417 = vmatpush1.msra.mxu0 %v2369
    %2418 = vmatprep.subr.mxu0 0.0
    %2419 = vmatpush1.msra.mxu0 %v2368
    %2420 = vmatprep.subr.mxu0 0.0
    %2421 = vmatpush1.msra.mxu0 %v2367
    %2422 = vmatprep.subr.mxu0 0.0
    %2423 = vmatpush1.msra.mxu0 %v2366
    %2424 = vmatprep.subr.mxu0 0.0
    %2425 = vmatpush2.msra.mxu0 0.0
    %2426 = vmatprep.subr.mxu0 0.0
    %2427 = vmatpush2.msra.mxu0 0.0
    %2428 = vmatprep.subr.mxu0 0.0
    %2429 = vmatpush2.msra.mxu0 0.0
    %2430 = vmatprep.subr.mxu0 0.0
    %2431 = vmatpush2.msra.mxu0 0.0
    %2432 = vmatprep.subr.mxu0 0.0
    %2433 = vmatpush2.msra.mxu0 0.0
    %2434 = vmatprep.subr.mxu0 0.0
    %2435 = vmatpush2.msra.mxu0 0.0
    %2436 = vmatprep.subr.mxu0 0.0
    %2437 = vmatpush2.msra.mxu0 0.0
    %2438 = vmatprep.subr.mxu0 0.0
    %2439 = vmatpush2.msra.mxu0 0.0
    %2440 = vmatprep.subr.mxu0 0.0
    %2441 = vmatpush2.msra.mxu0 0.0
    %2442 = vmatprep.subr.mxu0 0.0
    %2443 = vmatpush2.msra.mxu0 0.0
    %2444 = vmatprep.subr.mxu0 0.0
    %2445 = vmatpush2.msra.mxu0 0.0
    %2446 = vmatprep.subr.mxu0 0.0
    %2447 = vmatpush2.msra.mxu0 0.0
    %2448 = vmatprep.subr.mxu0 0.0
    %2449 = vmatpush2.msra.mxu0 %v2385
    %2450 = vmatprep.subr.mxu0 0.0
    %2451 = vmatpush2.msra.mxu0 %v2384
    %2452 = vmatprep.subr.mxu0 0.0
    %2453 = vmatpush2.msra.mxu0 %v2383
    %2454 = vmatprep.subr.mxu0 0.0
    %2455 = vmatpush2.msra.mxu0 %v2382
    %2456 = vmatprep.mubr.f32.mxu0 %v2387
    %2457 = vmatmul.mubr.f32.gmra.mxu0 %v2362
    %v2458 = vpop.f32.mrf.mxu0
    %v2459 = vadd.f32 0.0, %v2458
    %v2460 = vpop.f32.mrf.mxu0
    %2461 = vmatprep.mubr.f32.mxu0 %v2390
    %2462 = vmatmul.mubr.f32.gmra.mxu0 %v2364
    %v2463 = vpop.f32.mrf.mxu0
    %v2464 = vadd.f32 0.0, %v2463
    %v2465 = vpop.f32.mrf.mxu0
    %2466 = vdwg.mxu0
    %s2467 = scalar_lea.vmem %s10, 160
    %v2468 = vld [vmem:[%s2467] sm:$0xff]
    %v2469 = vld [vmem:[%s2467 + $0x8] sm:$0xff]
    %v2470 = vld [vmem:[%s2467 + $0x10] sm:$0xff]
    %v2471 = vld [vmem:[%s2467 + $0x18] sm:$0xff]
    %v2472 = vld [vmem:[%s2467 + $0x20] sm:$0xff]
    %v2473 = vld [vmem:[%s2467 + $0x28] sm:$0xff]
    %v2474 = vld [vmem:[%s2467 + $0x30] sm:$0xff]
    %v2475 = vld [vmem:[%s2467 + $0x38] sm:$0xff]
    %v2476 = vld [vmem:[%s2467 + $0x40] sm:$0xff]
    %v2477 = vld [vmem:[%s2467 + $0x48] sm:$0xff]
    %v2478 = vld [vmem:[%s2467 + $0x50] sm:$0xff]
    %v2479 = vld [vmem:[%s2467 + $0x58] sm:$0xff]
    %v2480 = vld [vmem:[%s2467 + $0x60] sm:$0xff]
    %v2481 = vld [vmem:[%s2467 + $0x68] sm:$0xff]
    %v2482 = vld [vmem:[%s2467 + $0x70] sm:$0xff]
    %v2483 = vld [vmem:[%s2467 + $0x78] sm:$0xff]
    %v2484 = vld [vmem:[%s2467 + $0x80] sm:$0xff]
    %v2485 = vld [vmem:[%s2467 + $0x88] sm:$0xff]
    %v2486 = vld [vmem:[%s2467 + $0x90] sm:$0xff]
    %v2487 = vld [vmem:[%s2467 + $0x98] sm:$0xff]
    %2488 = vmatprep.subr.mxu0 0.0
    %2489 = vmatpush1.msra.mxu0 %v2483
    %2490 = vmatprep.subr.mxu0 0.0
    %2491 = vmatpush1.msra.mxu0 %v2482
    %2492 = vmatprep.subr.mxu0 0.0
    %2493 = vmatpush1.msra.mxu0 %v2481
    %2494 = vmatprep.subr.mxu0 0.0
    %2495 = vmatpush1.msra.mxu0 %v2480
    %2496 = vmatprep.subr.mxu0 0.0
    %2497 = vmatpush1.msra.mxu0 %v2479
    %2498 = vmatprep.subr.mxu0 0.0
    %2499 = vmatpush1.msra.mxu0 %v2478
    %2500 = vmatprep.subr.mxu0 0.0
    %2501 = vmatpush1.msra.mxu0 %v2477
    %2502 = vmatprep.subr.mxu0 0.0
    %2503 = vmatpush1.msra.mxu0 %v2476
    %2504 = vmatprep.subr.mxu0 0.0
    %2505 = vmatpush1.msra.mxu0 %v2475
    %2506 = vmatprep.subr.mxu0 0.0
    %2507 = vmatpush1.msra.mxu0 %v2474
    %2508 = vmatprep.subr.mxu0 0.0
    %2509 = vmatpush1.msra.mxu0 %v2473
    %2510 = vmatprep.subr.mxu0 0.0
    %2511 = vmatpush1.msra.mxu0 %v2472
    %2512 = vmatprep.subr.mxu0 0.0
    %2513 = vmatpush1.msra.mxu0 %v2471
    %2514 = vmatprep.subr.mxu0 0.0
    %2515 = vmatpush1.msra.mxu0 %v2470
    %2516 = vmatprep.subr.mxu0 0.0
    %2517 = vmatpush1.msra.mxu0 %v2469
    %2518 = vmatprep.subr.mxu0 0.0
    %2519 = vmatpush1.msra.mxu0 %v2468
    %2520 = vmatprep.subr.mxu0 0.0
    %2521 = vmatpush2.msra.mxu0 0.0
    %2522 = vmatprep.subr.mxu0 0.0
    %2523 = vmatpush2.msra.mxu0 0.0
    %2524 = vmatprep.subr.mxu0 0.0
    %2525 = vmatpush2.msra.mxu0 0.0
    %2526 = vmatprep.subr.mxu0 0.0
    %2527 = vmatpush2.msra.mxu0 0.0
    %2528 = vmatprep.subr.mxu0 0.0
    %2529 = vmatpush2.msra.mxu0 0.0
    %2530 = vmatprep.subr.mxu0 0.0
    %2531 = vmatpush2.msra.mxu0 0.0
    %2532 = vmatprep.subr.mxu0 0.0
    %2533 = vmatpush2.msra.mxu0 0.0
    %2534 = vmatprep.subr.mxu0 0.0
    %2535 = vmatpush2.msra.mxu0 0.0
    %2536 = vmatprep.subr.mxu0 0.0
    %2537 = vmatpush2.msra.mxu0 0.0
    %2538 = vmatprep.subr.mxu0 0.0
    %2539 = vmatpush2.msra.mxu0 0.0
    %2540 = vmatprep.subr.mxu0 0.0
    %2541 = vmatpush2.msra.mxu0 0.0
    %2542 = vmatprep.subr.mxu0 0.0
    %2543 = vmatpush2.msra.mxu0 0.0
    %2544 = vmatprep.subr.mxu0 0.0
    %2545 = vmatpush2.msra.mxu0 %v2487
    %2546 = vmatprep.subr.mxu0 0.0
    %2547 = vmatpush2.msra.mxu0 %v2486
    %2548 = vmatprep.subr.mxu0 0.0
    %2549 = vmatpush2.msra.mxu0 %v2485
    %2550 = vmatprep.subr.mxu0 0.0
    %2551 = vmatpush2.msra.mxu0 %v2484
    %2552 = vmatprep.mubr.f32.mxu0 %v2387
    %2553 = vmatmul.mubr.f32.gmra.mxu0 %v2362
    %v2554 = vpop.f32.mrf.mxu0
    %v2555 = vadd.f32 0.0, %v2554
    %v2556 = vpop.f32.mrf.mxu0
    %2557 = vmatprep.mubr.f32.mxu0 %v2390
    %2558 = vmatmul.mubr.f32.gmra.mxu0 %v2364
    %v2559 = vpop.f32.mrf.mxu0
    %v2560 = vadd.f32 0.0, %v2559
    %v2561 = vpop.f32.mrf.mxu0
    %2562 = vdwg.mxu0
    %v2563 = vmax.f32 %v2459, %v2555
    %v2564 = vmax.f32 %v2464, %v2560
    %v2565 = vld [vmem:[%s11] sm:$0x3]
    %vm2566 = vcmask 80896
    %v2568 = vsel %vm2566, %v2565, 0
    %vm2570 = vcmask 1041408
    %v2572 = vsel %vm2570, %v2564, 0
    %2574 = vmatprep.subr.mxu0 0.0
    %2575 = vmatpush1.msra.mxu0 0.0
    %2576 = vmatprep.subr.mxu0 0.0
    %2577 = vmatpush1.msra.mxu0 0.0
    %2578 = vmatprep.subr.mxu0 0.0
    %2579 = vmatpush1.msra.mxu0 0.0
    %2580 = vmatprep.subr.mxu0 0.0
    %2581 = vmatpush1.msra.mxu0 0.0
    %2582 = vmatprep.subr.mxu0 0.0
    %2583 = vmatpush1.msra.mxu0 0.0
    %2584 = vmatprep.subr.mxu0 0.0
    %2585 = vmatpush1.msra.mxu0 0.0
    %2586 = vmatprep.subr.mxu0 0.0
    %2587 = vmatpush1.msra.mxu0 0.0
    %2588 = vmatprep.subr.mxu0 0.0
    %2589 = vmatpush1.msra.mxu0 0.0
    %2590 = vmatprep.subr.mxu0 0.0
    %2591 = vmatpush1.msra.mxu0 0.0
    %2592 = vmatprep.subr.mxu0 0.0
    %2593 = vmatpush1.msra.mxu0 0.0
    %2594 = vmatprep.subr.mxu0 0.0
    %2595 = vmatpush1.msra.mxu0 0.0
    %2596 = vmatprep.subr.mxu0 0.0
    %2597 = vmatpush1.msra.mxu0 0.0
    %2598 = vmatprep.subr.mxu0 0.0
    %2599 = vmatpush1.msra.mxu0 0.0
    %2600 = vmatprep.subr.mxu0 0.0
    %2601 = vmatpush1.msra.mxu0 0.0
    %2602 = vmatprep.subr.mxu0 0.0
    %2603 = vmatpush1.msra.mxu0 %v2572
    %2604 = vmatprep.subr.mxu0 0.0
    %2605 = vmatpush1.msra.mxu0 %v2563
    %2606 = vmatprep.subr.mxu0 0.0
    %2607 = vmatpush2.msra.mxu0 0.0
    %2608 = vmatprep.subr.mxu0 0.0
    %2609 = vmatpush2.msra.mxu0 0.0
    %2610 = vmatprep.subr.mxu0 0.0
    %2611 = vmatpush2.msra.mxu0 0.0
    %2612 = vmatprep.subr.mxu0 0.0
    %2613 = vmatpush2.msra.mxu0 0.0
    %2614 = vmatprep.subr.mxu0 0.0
    %2615 = vmatpush2.msra.mxu0 0.0
    %2616 = vmatprep.subr.mxu0 0.0
    %2617 = vmatpush2.msra.mxu0 0.0
    %2618 = vmatprep.subr.mxu0 0.0
    %2619 = vmatpush2.msra.mxu0 0.0
    %2620 = vmatprep.subr.mxu0 0.0
    %2621 = vmatpush2.msra.mxu0 0.0
    %2622 = vmatprep.subr.mxu0 0.0
    %2623 = vmatpush2.msra.mxu0 0.0
    %2624 = vmatprep.subr.mxu0 0.0
    %2625 = vmatpush2.msra.mxu0 0.0
    %2626 = vmatprep.subr.mxu0 0.0
    %2627 = vmatpush2.msra.mxu0 0.0
    %2628 = vmatprep.subr.mxu0 0.0
    %2629 = vmatpush2.msra.mxu0 0.0
    %2630 = vmatprep.subr.mxu0 0.0
    %2631 = vmatpush2.msra.mxu0 0.0
    %2632 = vmatprep.subr.mxu0 0.0
    %2633 = vmatpush2.msra.mxu0 0.0
    %2634 = vmatprep.subr.mxu0 0.0
    %2635 = vmatpush2.msra.mxu0 0.0
    %2636 = vmatprep.subr.mxu0 0.0
    %2637 = vmatpush2.msra.mxu0 0.0
    %2638 = vmatprep.mubr.f32.mxu0 0.0
    %2639 = vmatmul.mubr.f32.gmra.mxu0 %v2568
    %v2640 = vpop.f32.mrf.mxu0
    %v2641 = vadd.f32 0.0, %v2640
    %v2642 = vpop.f32.mrf.mxu0
    %2643 = vdwg.mxu0
    %v2644 = vld [vmem:[%s12] sm:$0xff]
    %v2645 = vld [vmem:[%s12 + $0x8] sm:$0xff]
    %v2646 = vld [vmem:[%s12 + $0x10] sm:$0xff]
    %v2647 = vld [vmem:[%s12 + $0x18] sm:$0xff]
    %v2648 = vld [vmem:[%s12 + $0x20] sm:$0xff]
    %v2649 = vld [vmem:[%s12 + $0x28] sm:$0xff]
    %v2650 = vld [vmem:[%s12 + $0x30] sm:$0xff]
    %v2651 = vld [vmem:[%s12 + $0x38] sm:$0xff]
    %v2652 = vld [vmem:[%s12 + $0x40] sm:$0xff]
    %v2653 = vld [vmem:[%s12 + $0x48] sm:$0xff]
    %s2654 = scalar_lea.vmem %s11, 2
    %v2655 = vld [vmem:[%s2654] sm:$0x3]
    %v2657 = vsel %vm2566, %v2655, 0
    %2659 = vmatprep.subr.mxu0 0.0
    %2660 = vmatpush1.msra.mxu0 0.0
    %2661 = vmatprep.subr.mxu0 0.0
    %2662 = vmatpush1.msra.mxu0 0.0
    %2663 = vmatprep.subr.mxu0 0.0
    %2664 = vmatpush1.msra.mxu0 0.0
    %2665 = vmatprep.subr.mxu0 0.0
    %2666 = vmatpush1.msra.mxu0 0.0
    %2667 = vmatprep.subr.mxu0 0.0
    %2668 = vmatpush1.msra.mxu0 0.0
    %2669 = vmatprep.subr.mxu0 0.0
    %2670 = vmatpush1.msra.mxu0 0.0
    %2671 = vmatprep.subr.mxu0 0.0
    %2672 = vmatpush1.msra.mxu0 0.0
    %2673 = vmatprep.subr.mxu0 0.0
    %2674 = vmatpush1.msra.mxu0 0.0
    %2675 = vmatprep.subr.mxu0 0.0
    %2676 = vmatpush1.msra.mxu0 0.0
    %2677 = vmatprep.subr.mxu0 0.0
    %2678 = vmatpush1.msra.mxu0 0.0
    %2679 = vmatprep.subr.mxu0 0.0
    %2680 = vmatpush1.msra.mxu0 0.0
    %2681 = vmatprep.subr.mxu0 0.0
    %2682 = vmatpush1.msra.mxu0 0.0
    %2683 = vmatprep.subr.mxu0 0.0
    %2684 = vmatpush1.msra.mxu0 0.0
    %2685 = vmatprep.subr.mxu0 0.0
    %2686 = vmatpush1.msra.mxu0 0.0
    %2687 = vmatprep.subr.mxu0 0.0
    %2688 = vmatpush1.msra.mxu0 %v2572
    %2689 = vmatprep.subr.mxu0 0.0
    %2690 = vmatpush1.msra.mxu0 %v2563
    %2691 = vmatprep.subr.mxu0 0.0
    %2692 = vmatpush2.msra.mxu0 0.0
    %2693 = vmatprep.subr.mxu0 0.0
    %2694 = vmatpush2.msra.mxu0 0.0
    %2695 = vmatprep.subr.mxu0 0.0
    %2696 = vmatpush2.msra.mxu0 0.0
    %2697 = vmatprep.subr.mxu0 0.0
    %2698 = vmatpush2.msra.mxu0 0.0
    %2699 = vmatprep.subr.mxu0 0.0
    %2700 = vmatpush2.msra.mxu0 0.0
    %2701 = vmatprep.subr.mxu0 0.0
    %2702 = vmatpush2.msra.mxu0 0.0
    %2703 = vmatprep.subr.mxu0 0.0
    %2704 = vmatpush2.msra.mxu0 0.0
    %2705 = vmatprep.subr.mxu0 0.0
    %2706 = vmatpush2.msra.mxu0 0.0
    %2707 = vmatprep.subr.mxu0 0.0
    %2708 = vmatpush2.msra.mxu0 0.0
    %2709 = vmatprep.subr.mxu0 0.0
    %2710 = vmatpush2.msra.mxu0 0.0
    %2711 = vmatprep.subr.mxu0 0.0
    %2712 = vmatpush2.msra.mxu0 0.0
    %2713 = vmatprep.subr.mxu0 0.0
    %2714 = vmatpush2.msra.mxu0 0.0
    %2715 = vmatprep.subr.mxu0 0.0
    %2716 = vmatpush2.msra.mxu0 0.0
    %2717 = vmatprep.subr.mxu0 0.0
    %2718 = vmatpush2.msra.mxu0 0.0
    %2719 = vmatprep.subr.mxu0 0.0
    %2720 = vmatpush2.msra.mxu0 0.0
    %2721 = vmatprep.subr.mxu0 0.0
    %2722 = vmatpush2.msra.mxu0 0.0
    %2723 = vmatprep.mubr.f32.mxu0 0.0
    %2724 = vmatmul.mubr.f32.gmra.mxu0 %v2657
    %v2725 = vpop.f32.mrf.mxu0
    %v2726 = vadd.f32 0.0, %v2725
    %v2727 = vpop.f32.mrf.mxu0
    %2728 = vdwg.mxu0
    %s2729 = scalar_lea.vmem %s12, 80
    %v2730 = vld [vmem:[%s2729] sm:$0xff]
    %v2731 = vld [vmem:[%s2729 + $0x8] sm:$0xff]
    %v2732 = vld [vmem:[%s2729 + $0x10] sm:$0xff]
    %v2733 = vld [vmem:[%s2729 + $0x18] sm:$0xff]
    %v2734 = vld [vmem:[%s2729 + $0x20] sm:$0xff]
    %v2735 = vld [vmem:[%s2729 + $0x28] sm:$0xff]
    %v2736 = vld [vmem:[%s2729 + $0x30] sm:$0xff]
    %v2737 = vld [vmem:[%s2729 + $0x38] sm:$0xff]
    %v2738 = vld [vmem:[%s2729 + $0x40] sm:$0xff]
    %v2739 = vld [vmem:[%s2729 + $0x48] sm:$0xff]
    %vm2740 = vcmask 654336
    %v2742 = vsel %vm2740, %v2726, 0
    %2744 = vmatprep.subr.mxu0 0.0
    %2745 = vmatpush1.msra.mxu0 0.0
    %2746 = vmatprep.subr.mxu0 0.0
    %2747 = vmatpush1.msra.mxu0 0.0
    %2748 = vmatprep.subr.mxu0 0.0
    %2749 = vmatpush1.msra.mxu0 0.0
    %2750 = vmatprep.subr.mxu0 0.0
    %2751 = vmatpush1.msra.mxu0 0.0
    %2752 = vmatprep.subr.mxu0 0.0
    %2753 = vmatpush1.msra.mxu0 0.0
    %2754 = vmatprep.subr.mxu0 0.0
    %2755 = vmatpush1.msra.mxu0 0.0
    %2756 = vmatprep.subr.mxu0 0.0
    %2757 = vmatpush1.msra.mxu0 %v2739
    %2758 = vmatprep.subr.mxu0 0.0
    %2759 = vmatpush1.msra.mxu0 %v2738
    %2760 = vmatprep.subr.mxu0 0.0
    %2761 = vmatpush1.msra.mxu0 %v2737
    %2762 = vmatprep.subr.mxu0 0.0
    %2763 = vmatpush1.msra.mxu0 %v2736
    %2764 = vmatprep.subr.mxu0 0.0
    %2765 = vmatpush1.msra.mxu0 %v2735
    %2766 = vmatprep.subr.mxu0 0.0
    %2767 = vmatpush1.msra.mxu0 %v2734
    %2768 = vmatprep.subr.mxu0 0.0
    %2769 = vmatpush1.msra.mxu0 %v2733
    %2770 = vmatprep.subr.mxu0 0.0
    %2771 = vmatpush1.msra.mxu0 %v2732
    %2772 = vmatprep.subr.mxu0 0.0
    %2773 = vmatpush1.msra.mxu0 %v2731
    %2774 = vmatprep.subr.mxu0 0.0
    %2775 = vmatpush1.msra.mxu0 %v2730
    %2776 = vmatprep.subr.mxu0 0.0
    %2777 = vmatpush2.msra.mxu0 0.0
    %2778 = vmatprep.subr.mxu0 0.0
    %2779 = vmatpush2.msra.mxu0 0.0
    %2780 = vmatprep.subr.mxu0 0.0
    %2781 = vmatpush2.msra.mxu0 0.0
    %2782 = vmatprep.subr.mxu0 0.0
    %2783 = vmatpush2.msra.mxu0 0.0
    %2784 = vmatprep.subr.mxu0 0.0
    %2785 = vmatpush2.msra.mxu0 0.0
    %2786 = vmatprep.subr.mxu0 0.0
    %2787 = vmatpush2.msra.mxu0 0.0
    %2788 = vmatprep.subr.mxu0 0.0
    %2789 = vmatpush2.msra.mxu0 0.0
    %2790 = vmatprep.subr.mxu0 0.0
    %2791 = vmatpush2.msra.mxu0 0.0
    %2792 = vmatprep.subr.mxu0 0.0
    %2793 = vmatpush2.msra.mxu0 0.0
    %2794 = vmatprep.subr.mxu0 0.0
    %2795 = vmatpush2.msra.mxu0 0.0
    %2796 = vmatprep.subr.mxu0 0.0
    %2797 = vmatpush2.msra.mxu0 0.0
    %2798 = vmatprep.subr.mxu0 0.0
    %2799 = vmatpush2.msra.mxu0 0.0
    %2800 = vmatprep.subr.mxu0 0.0
    %2801 = vmatpush2.msra.mxu0 0.0
    %2802 = vmatprep.subr.mxu0 0.0
    %2803 = vmatpush2.msra.mxu0 0.0
    %2804 = vmatprep.subr.mxu0 0.0
    %2805 = vmatpush2.msra.mxu0 0.0
    %2806 = vmatprep.subr.mxu0 0.0
    %2807 = vmatpush2.msra.mxu0 0.0
    %2808 = vmatprep.mubr.f32.mxu0 0.0
    %2809 = vmatmul.mubr.f32.gmra.mxu0 %v2742
    %v2810 = vpop.f32.mrf.mxu0
    %v2811 = vadd.f32 0.0, %v2810
    %v2812 = vpop.f32.mrf.mxu0
    %2813 = vdwg.mxu0
    %v2815 = vsel %vm2740, %v2641, 0
    %2817 = vmatprep.subr.mxu0 0.0
    %2818 = vmatpush1.msra.mxu0 0.0
    %2819 = vmatprep.subr.mxu0 0.0
    %2820 = vmatpush1.msra.mxu0 0.0
    %2821 = vmatprep.subr.mxu0 0.0
    %2822 = vmatpush1.msra.mxu0 0.0
    %2823 = vmatprep.subr.mxu0 0.0
    %2824 = vmatpush1.msra.mxu0 0.0
    %2825 = vmatprep.subr.mxu0 0.0
    %2826 = vmatpush1.msra.mxu0 0.0
    %2827 = vmatprep.subr.mxu0 0.0
    %2828 = vmatpush1.msra.mxu0 0.0
    %2829 = vmatprep.subr.mxu0 0.0
    %2830 = vmatpush1.msra.mxu0 %v2653
    %2831 = vmatprep.subr.mxu0 0.0
    %2832 = vmatpush1.msra.mxu0 %v2652
    %2833 = vmatprep.subr.mxu0 0.0
    %2834 = vmatpush1.msra.mxu0 %v2651
    %2835 = vmatprep.subr.mxu0 0.0
    %2836 = vmatpush1.msra.mxu0 %v2650
    %2837 = vmatprep.subr.mxu0 0.0
    %2838 = vmatpush1.msra.mxu0 %v2649
    %2839 = vmatprep.subr.mxu0 0.0
    %2840 = vmatpush1.msra.mxu0 %v2648
    %2841 = vmatprep.subr.mxu0 0.0
    %2842 = vmatpush1.msra.mxu0 %v2647
    %2843 = vmatprep.subr.mxu0 0.0
    %2844 = vmatpush1.msra.mxu0 %v2646
    %2845 = vmatprep.subr.mxu0 0.0
    %2846 = vmatpush1.msra.mxu0 %v2645
    %2847 = vmatprep.subr.mxu0 0.0
    %2848 = vmatpush1.msra.mxu0 %v2644
    %2849 = vmatprep.subr.mxu0 0.0
    %2850 = vmatpush2.msra.mxu0 0.0
    %2851 = vmatprep.subr.mxu0 0.0
    %2852 = vmatpush2.msra.mxu0 0.0
    %2853 = vmatprep.subr.mxu0 0.0
    %2854 = vmatpush2.msra.mxu0 0.0
    %2855 = vmatprep.subr.mxu0 0.0
    %2856 = vmatpush2.msra.mxu0 0.0
    %2857 = vmatprep.subr.mxu0 0.0
    %2858 = vmatpush2.msra.mxu0 0.0
    %2859 = vmatprep.subr.mxu0 0.0
    %2860 = vmatpush2.msra.mxu0 0.0
    %2861 = vmatprep.subr.mxu0 0.0
    %2862 = vmatpush2.msra.mxu0 0.0
    %2863 = vmatprep.subr.mxu0 0.0
    %2864 = vmatpush2.msra.mxu0 0.0
    %2865 = vmatprep.subr.mxu0 0.0
    %2866 = vmatpush2.msra.mxu0 0.0
    %2867 = vmatprep.subr.mxu0 0.0
    %2868 = vmatpush2.msra.mxu0 0.0
    %2869 = vmatprep.subr.mxu0 0.0
    %2870 = vmatpush2.msra.mxu0 0.0
    %2871 = vmatprep.subr.mxu0 0.0
    %2872 = vmatpush2.msra.mxu0 0.0
    %2873 = vmatprep.subr.mxu0 0.0
    %2874 = vmatpush2.msra.mxu0 0.0
    %2875 = vmatprep.subr.mxu0 0.0
    %2876 = vmatpush2.msra.mxu0 0.0
    %2877 = vmatprep.subr.mxu0 0.0
    %2878 = vmatpush2.msra.mxu0 0.0
    %2879 = vmatprep.subr.mxu0 0.0
    %2880 = vmatpush2.msra.mxu0 0.0
    %2881 = vmatprep.mubr.f32.mxu0 0.0
    %2882 = vmatmul.mubr.f32.gmra.mxu0 %v2815
    %v2883 = vpop.f32.mrf.mxu0
    %v2884 = vadd.f32 %v2811, %v2883
    %v2885 = vpop.f32.mrf.mxu0
    %2886 = vdwg.mxu0
    %s2887 = scalar_lea.vmem %s11, 4
    %v2888 = vld [vmem:[%s2887] sm:$0x3]
    %v2890 = vsel %vm2566, %v2888, 0
    %2892 = vmatprep.subr.mxu0 0.0
    %2893 = vmatpush1.msra.mxu0 0.0
    %2894 = vmatprep.subr.mxu0 0.0
    %2895 = vmatpush1.msra.mxu0 0.0
    %2896 = vmatprep.subr.mxu0 0.0
    %2897 = vmatpush1.msra.mxu0 0.0
    %2898 = vmatprep.subr.mxu0 0.0
    %2899 = vmatpush1.msra.mxu0 0.0
    %2900 = vmatprep.subr.mxu0 0.0
    %2901 = vmatpush1.msra.mxu0 0.0
    %2902 = vmatprep.subr.mxu0 0.0
    %2903 = vmatpush1.msra.mxu0 0.0
    %2904 = vmatprep.subr.mxu0 0.0
    %2905 = vmatpush1.msra.mxu0 0.0
    %2906 = vmatprep.subr.mxu0 0.0
    %2907 = vmatpush1.msra.mxu0 0.0
    %2908 = vmatprep.subr.mxu0 0.0
    %2909 = vmatpush1.msra.mxu0 0.0
    %2910 = vmatprep.subr.mxu0 0.0
    %2911 = vmatpush1.msra.mxu0 0.0
    %2912 = vmatprep.subr.mxu0 0.0
    %2913 = vmatpush1.msra.mxu0 0.0
    %2914 = vmatprep.subr.mxu0 0.0
    %2915 = vmatpush1.msra.mxu0 0.0
    %2916 = vmatprep.subr.mxu0 0.0
    %2917 = vmatpush1.msra.mxu0 0.0
    %2918 = vmatprep.subr.mxu0 0.0
    %2919 = vmatpush1.msra.mxu0 0.0
    %2920 = vmatprep.subr.mxu0 0.0
    %2921 = vmatpush1.msra.mxu0 %v2572
    %2922 = vmatprep.subr.mxu0 0.0
    %2923 = vmatpush1.msra.mxu0 %v2563
    %2924 = vmatprep.subr.mxu0 0.0
    %2925 = vmatpush2.msra.mxu0 0.0
    %2926 = vmatprep.subr.mxu0 0.0
    %2927 = vmatpush2.msra.mxu0 0.0
    %2928 = vmatprep.subr.mxu0 0.0
    %2929 = vmatpush2.msra.mxu0 0.0
    %2930 = vmatprep.subr.mxu0 0.0
    %2931 = vmatpush2.msra.mxu0 0.0
    %2932 = vmatprep.subr.mxu0 0.0
    %2933 = vmatpush2.msra.mxu0 0.0
    %2934 = vmatprep.subr.mxu0 0.0
    %2935 = vmatpush2.msra.mxu0 0.0
    %2936 = vmatprep.subr.mxu0 0.0
    %2937 = vmatpush2.msra.mxu0 0.0
    %2938 = vmatprep.subr.mxu0 0.0
    %2939 = vmatpush2.msra.mxu0 0.0
    %2940 = vmatprep.subr.mxu0 0.0
    %2941 = vmatpush2.msra.mxu0 0.0
    %2942 = vmatprep.subr.mxu0 0.0
    %2943 = vmatpush2.msra.mxu0 0.0
    %2944 = vmatprep.subr.mxu0 0.0
    %2945 = vmatpush2.msra.mxu0 0.0
    %2946 = vmatprep.subr.mxu0 0.0
    %2947 = vmatpush2.msra.mxu0 0.0
    %2948 = vmatprep.subr.mxu0 0.0
    %2949 = vmatpush2.msra.mxu0 0.0
    %2950 = vmatprep.subr.mxu0 0.0
    %2951 = vmatpush2.msra.mxu0 0.0
    %2952 = vmatprep.subr.mxu0 0.0
    %2953 = vmatpush2.msra.mxu0 0.0
    %2954 = vmatprep.subr.mxu0 0.0
    %2955 = vmatpush2.msra.mxu0 0.0
    %2956 = vmatprep.mubr.f32.mxu0 0.0
    %2957 = vmatmul.mubr.f32.gmra.mxu0 %v2890
    %v2958 = vpop.f32.mrf.mxu0
    %v2959 = vadd.f32 0.0, %v2958
    %v2960 = vpop.f32.mrf.mxu0
    %2961 = vdwg.mxu0
    %s2962 = scalar_lea.vmem %s12, 160
    %v2963 = vld [vmem:[%s2962] sm:$0xff]
    %v2964 = vld [vmem:[%s2962 + $0x8] sm:$0xff]
    %v2965 = vld [vmem:[%s2962 + $0x10] sm:$0xff]
    %v2966 = vld [vmem:[%s2962 + $0x18] sm:$0xff]
    %v2967 = vld [vmem:[%s2962 + $0x20] sm:$0xff]
    %v2968 = vld [vmem:[%s2962 + $0x28] sm:$0xff]
    %v2969 = vld [vmem:[%s2962 + $0x30] sm:$0xff]
    %v2970 = vld [vmem:[%s2962 + $0x38] sm:$0xff]
    %v2971 = vld [vmem:[%s2962 + $0x40] sm:$0xff]
    %v2972 = vld [vmem:[%s2962 + $0x48] sm:$0xff]
    %v2974 = vsel %vm2740, %v2959, 0
    %2976 = vmatprep.subr.mxu0 0.0
    %2977 = vmatpush1.msra.mxu0 0.0
    %2978 = vmatprep.subr.mxu0 0.0
    %2979 = vmatpush1.msra.mxu0 0.0
    %2980 = vmatprep.subr.mxu0 0.0
    %2981 = vmatpush1.msra.mxu0 0.0
    %2982 = vmatprep.subr.mxu0 0.0
    %2983 = vmatpush1.msra.mxu0 0.0
    %2984 = vmatprep.subr.mxu0 0.0
    %2985 = vmatpush1.msra.mxu0 0.0
    %2986 = vmatprep.subr.mxu0 0.0
    %2987 = vmatpush1.msra.mxu0 0.0
    %2988 = vmatprep.subr.mxu0 0.0
    %2989 = vmatpush1.msra.mxu0 %v2972
    %2990 = vmatprep.subr.mxu0 0.0
    %2991 = vmatpush1.msra.mxu0 %v2971
    %2992 = vmatprep.subr.mxu0 0.0
    %2993 = vmatpush1.msra.mxu0 %v2970
    %2994 = vmatprep.subr.mxu0 0.0
    %2995 = vmatpush1.msra.mxu0 %v2969
    %2996 = vmatprep.subr.mxu0 0.0
    %2997 = vmatpush1.msra.mxu0 %v2968
    %2998 = vmatprep.subr.mxu0 0.0
    %2999 = vmatpush1.msra.mxu0 %v2967
    %3000 = vmatprep.subr.mxu0 0.0
    %3001 = vmatpush1.msra.mxu0 %v2966
    %3002 = vmatprep.subr.mxu0 0.0
    %3003 = vmatpush1.msra.mxu0 %v2965
    %3004 = vmatprep.subr.mxu0 0.0
    %3005 = vmatpush1.msra.mxu0 %v2964
    %3006 = vmatprep.subr.mxu0 0.0
    %3007 = vmatpush1.msra.mxu0 %v2963
    %3008 = vmatprep.subr.mxu0 0.0
    %3009 = vmatpush2.msra.mxu0 0.0
    %3010 = vmatprep.subr.mxu0 0.0
    %3011 = vmatpush2.msra.mxu0 0.0
    %3012 = vmatprep.subr.mxu0 0.0
    %3013 = vmatpush2.msra.mxu0 0.0
    %3014 = vmatprep.subr.mxu0 0.0
    %3015 = vmatpush2.msra.mxu0 0.0
    %3016 = vmatprep.subr.mxu0 0.0
    %3017 = vmatpush2.msra.mxu0 0.0
    %3018 = vmatprep.subr.mxu0 0.0
    %3019 = vmatpush2.msra.mxu0 0.0
    %3020 = vmatprep.subr.mxu0 0.0
    %3021 = vmatpush2.msra.mxu0 0.0
    %3022 = vmatprep.subr.mxu0 0.0
    %3023 = vmatpush2.msra.mxu0 0.0
    %3024 = vmatprep.subr.mxu0 0.0
    %3025 = vmatpush2.msra.mxu0 0.0
    %3026 = vmatprep.subr.mxu0 0.0
    %3027 = vmatpush2.msra.mxu0 0.0
    %3028 = vmatprep.subr.mxu0 0.0
    %3029 = vmatpush2.msra.mxu0 0.0
    %3030 = vmatprep.subr.mxu0 0.0
    %3031 = vmatpush2.msra.mxu0 0.0
    %3032 = vmatprep.subr.mxu0 0.0
    %3033 = vmatpush2.msra.mxu0 0.0
    %3034 = vmatprep.subr.mxu0 0.0
    %3035 = vmatpush2.msra.mxu0 0.0
    %3036 = vmatprep.subr.mxu0 0.0
    %3037 = vmatpush2.msra.mxu0 0.0
    %3038 = vmatprep.subr.mxu0 0.0
    %3039 = vmatpush2.msra.mxu0 0.0
    %3040 = vmatprep.mubr.f32.mxu0 0.0
    %3041 = vmatmul.mubr.f32.gmra.mxu0 %v2974
    %v3042 = vpop.f32.mrf.mxu0
    %v3043 = vadd.f32 0.0, %v3042
    %v3044 = vpop.f32.mrf.mxu0
    %3045 = vdwg.mxu0
    %v3046 = vadd.f32 %v2884, %v3043
    %s3047 = scalar_lea.vmem %s11, 6
    %v3048 = vld [vmem:[%s3047] sm:$0x3]
    %v3050 = vsel %vm2566, %v3048, 0
    %3052 = vmatprep.subr.mxu0 0.0
    %3053 = vmatpush1.msra.mxu0 0.0
    %3054 = vmatprep.subr.mxu0 0.0
    %3055 = vmatpush1.msra.mxu0 0.0
    %3056 = vmatprep.subr.mxu0 0.0
    %3057 = vmatpush1.msra.mxu0 0.0
    %3058 = vmatprep.subr.mxu0 0.0
    %3059 = vmatpush1.msra.mxu0 0.0
    %3060 = vmatprep.subr.mxu0 0.0
    %3061 = vmatpush1.msra.mxu0 0.0
    %3062 = vmatprep.subr.mxu0 0.0
    %3063 = vmatpush1.msra.mxu0 0.0
    %3064 = vmatprep.subr.mxu0 0.0
    %3065 = vmatpush1.msra.mxu0 0.0
    %3066 = vmatprep.subr.mxu0 0.0
    %3067 = vmatpush1.msra.mxu0 0.0
    %3068 = vmatprep.subr.mxu0 0.0
    %3069 = vmatpush1.msra.mxu0 0.0
    %3070 = vmatprep.subr.mxu0 0.0
    %3071 = vmatpush1.msra.mxu0 0.0
    %3072 = vmatprep.subr.mxu0 0.0
    %3073 = vmatpush1.msra.mxu0 0.0
    %3074 = vmatprep.subr.mxu0 0.0
    %3075 = vmatpush1.msra.mxu0 0.0
    %3076 = vmatprep.subr.mxu0 0.0
    %3077 = vmatpush1.msra.mxu0 0.0
    %3078 = vmatprep.subr.mxu0 0.0
    %3079 = vmatpush1.msra.mxu0 0.0
    %3080 = vmatprep.subr.mxu0 0.0
    %3081 = vmatpush1.msra.mxu0 %v2572
    %3082 = vmatprep.subr.mxu0 0.0
    %3083 = vmatpush1.msra.mxu0 %v2563
    %3084 = vmatprep.subr.mxu0 0.0
    %3085 = vmatpush2.msra.mxu0 0.0
    %3086 = vmatprep.subr.mxu0 0.0
    %3087 = vmatpush2.msra.mxu0 0.0
    %3088 = vmatprep.subr.mxu0 0.0
    %3089 = vmatpush2.msra.mxu0 0.0
    %3090 = vmatprep.subr.mxu0 0.0
    %3091 = vmatpush2.msra.mxu0 0.0
    %3092 = vmatprep.subr.mxu0 0.0
    %3093 = vmatpush2.msra.mxu0 0.0
    %3094 = vmatprep.subr.mxu0 0.0
    %3095 = vmatpush2.msra.mxu0 0.0
    %3096 = vmatprep.subr.mxu0 0.0
    %3097 = vmatpush2.msra.mxu0 0.0
    %3098 = vmatprep.subr.mxu0 0.0
    %3099 = vmatpush2.msra.mxu0 0.0
    %3100 = vmatprep.subr.mxu0 0.0
    %3101 = vmatpush2.msra.mxu0 0.0
    %3102 = vmatprep.subr.mxu0 0.0
    %3103 = vmatpush2.msra.mxu0 0.0
    %3104 = vmatprep.subr.mxu0 0.0
    %3105 = vmatpush2.msra.mxu0 0.0
    %3106 = vmatprep.subr.mxu0 0.0
    %3107 = vmatpush2.msra.mxu0 0.0
    %3108 = vmatprep.subr.mxu0 0.0
    %3109 = vmatpush2.msra.mxu0 0.0
    %3110 = vmatprep.subr.mxu0 0.0
    %3111 = vmatpush2.msra.mxu0 0.0
    %3112 = vmatprep.subr.mxu0 0.0
    %3113 = vmatpush2.msra.mxu0 0.0
    %3114 = vmatprep.subr.mxu0 0.0
    %3115 = vmatpush2.msra.mxu0 0.0
    %3116 = vmatprep.mubr.f32.mxu0 0.0
    %3117 = vmatmul.mubr.f32.gmra.mxu0 %v3050
    %v3118 = vpop.f32.mrf.mxu0
    %v3119 = vadd.f32 0.0, %v3118
    %v3120 = vpop.f32.mrf.mxu0
    %3121 = vdwg.mxu0
    %s3122 = scalar_lea.vmem %s12, 240
    %v3123 = vld [vmem:[%s3122] sm:$0xff]
    %v3124 = vld [vmem:[%s3122 + $0x8] sm:$0xff]
    %v3125 = vld [vmem:[%s3122 + $0x10] sm:$0xff]
    %v3126 = vld [vmem:[%s3122 + $0x18] sm:$0xff]
    %v3127 = vld [vmem:[%s3122 + $0x20] sm:$0xff]
    %v3128 = vld [vmem:[%s3122 + $0x28] sm:$0xff]
    %v3129 = vld [vmem:[%s3122 + $0x30] sm:$0xff]
    %v3130 = vld [vmem:[%s3122 + $0x38] sm:$0xff]
    %v3131 = vld [vmem:[%s3122 + $0x40] sm:$0xff]
    %v3132 = vld [vmem:[%s3122 + $0x48] sm:$0xff]
    %v3134 = vsel %vm2740, %v3119, 0
    %3136 = vmatprep.subr.mxu0 0.0
    %3137 = vmatpush1.msra.mxu0 0.0
    %3138 = vmatprep.subr.mxu0 0.0
    %3139 = vmatpush1.msra.mxu0 0.0
    %3140 = vmatprep.subr.mxu0 0.0
    %3141 = vmatpush1.msra.mxu0 0.0
    %3142 = vmatprep.subr.mxu0 0.0
    %3143 = vmatpush1.msra.mxu0 0.0
    %3144 = vmatprep.subr.mxu0 0.0
    %3145 = vmatpush1.msra.mxu0 0.0
    %3146 = vmatprep.subr.mxu0 0.0
    %3147 = vmatpush1.msra.mxu0 0.0
    %3148 = vmatprep.subr.mxu0 0.0
    %3149 = vmatpush1.msra.mxu0 %v3132
    %3150 = vmatprep.subr.mxu0 0.0
    %3151 = vmatpush1.msra.mxu0 %v3131
    %3152 = vmatprep.subr.mxu0 0.0
    %3153 = vmatpush1.msra.mxu0 %v3130
    %3154 = vmatprep.subr.mxu0 0.0
    %3155 = vmatpush1.msra.mxu0 %v3129
    %3156 = vmatprep.subr.mxu0 0.0
    %3157 = vmatpush1.msra.mxu0 %v3128
    %3158 = vmatprep.subr.mxu0 0.0
    %3159 = vmatpush1.msra.mxu0 %v3127
    %3160 = vmatprep.subr.mxu0 0.0
    %3161 = vmatpush1.msra.mxu0 %v3126
    %3162 = vmatprep.subr.mxu0 0.0
    %3163 = vmatpush1.msra.mxu0 %v3125
    %3164 = vmatprep.subr.mxu0 0.0
    %3165 = vmatpush1.msra.mxu0 %v3124
    %3166 = vmatprep.subr.mxu0 0.0
    %3167 = vmatpush1.msra.mxu0 %v3123
    %3168 = vmatprep.subr.mxu0 0.0
    %3169 = vmatpush2.msra.mxu0 0.0
    %3170 = vmatprep.subr.mxu0 0.0
    %3171 = vmatpush2.msra.mxu0 0.0
    %3172 = vmatprep.subr.mxu0 0.0
    %3173 = vmatpush2.msra.mxu0 0.0
    %3174 = vmatprep.subr.mxu0 0.0
    %3175 = vmatpush2.msra.mxu0 0.0
    %3176 = vmatprep.subr.mxu0 0.0
    %3177 = vmatpush2.msra.mxu0 0.0
    %3178 = vmatprep.subr.mxu0 0.0
    %3179 = vmatpush2.msra.mxu0 0.0
    %3180 = vmatprep.subr.mxu0 0.0
    %3181 = vmatpush2.msra.mxu0 0.0
    %3182 = vmatprep.subr.mxu0 0.0
    %3183 = vmatpush2.msra.mxu0 0.0
    %3184 = vmatprep.subr.mxu0 0.0
    %3185 = vmatpush2.msra.mxu0 0.0
    %3186 = vmatprep.subr.mxu0 0.0
    %3187 = vmatpush2.msra.mxu0 0.0
    %3188 = vmatprep.subr.mxu0 0.0
    %3189 = vmatpush2.msra.mxu0 0.0
    %3190 = vmatprep.subr.mxu0 0.0
    %3191 = vmatpush2.msra.mxu0 0.0
    %3192 = vmatprep.subr.mxu0 0.0
    %3193 = vmatpush2.msra.mxu0 0.0
    %3194 = vmatprep.subr.mxu0 0.0
    %3195 = vmatpush2.msra.mxu0 0.0
    %3196 = vmatprep.subr.mxu0 0.0
    %3197 = vmatpush2.msra.mxu0 0.0
    %3198 = vmatprep.subr.mxu0 0.0
    %3199 = vmatpush2.msra.mxu0 0.0
    %3200 = vmatprep.mubr.f32.mxu0 0.0
    %3201 = vmatmul.mubr.f32.gmra.mxu0 %v3134
    %v3202 = vpop.f32.mrf.mxu0
    %v3203 = vadd.f32 0.0, %v3202
    %v3204 = vpop.f32.mrf.mxu0
    %3205 = vdwg.mxu0
    %v3206 = vadd.f32 %v3046, %v3203
    %s3207 = scalar_lea.vmem %s11, 8
    %v3208 = vld [vmem:[%s3207] sm:$0x3]
    %v3210 = vsel %vm2566, %v3208, 0
    %3212 = vmatprep.subr.mxu0 0.0
    %3213 = vmatpush1.msra.mxu0 0.0
    %3214 = vmatprep.subr.mxu0 0.0
    %3215 = vmatpush1.msra.mxu0 0.0
    %3216 = vmatprep.subr.mxu0 0.0
    %3217 = vmatpush1.msra.mxu0 0.0
    %3218 = vmatprep.subr.mxu0 0.0
    %3219 = vmatpush1.msra.mxu0 0.0
    %3220 = vmatprep.subr.mxu0 0.0
    %3221 = vmatpush1.msra.mxu0 0.0
    %3222 = vmatprep.subr.mxu0 0.0
    %3223 = vmatpush1.msra.mxu0 0.0
    %3224 = vmatprep.subr.mxu0 0.0
    %3225 = vmatpush1.msra.mxu0 0.0
    %3226 = vmatprep.subr.mxu0 0.0
    %3227 = vmatpush1.msra.mxu0 0.0
    %3228 = vmatprep.subr.mxu0 0.0
    %3229 = vmatpush1.msra.mxu0 0.0
    %3230 = vmatprep.subr.mxu0 0.0
    %3231 = vmatpush1.msra.mxu0 0.0
    %3232 = vmatprep.subr.mxu0 0.0
    %3233 = vmatpush1.msra.mxu0 0.0
    %3234 = vmatprep.subr.mxu0 0.0
    %3235 = vmatpush1.msra.mxu0 0.0
    %3236 = vmatprep.subr.mxu0 0.0
    %3237 = vmatpush1.msra.mxu0 0.0
    %3238 = vmatprep.subr.mxu0 0.0
    %3239 = vmatpush1.msra.mxu0 0.0
    %3240 = vmatprep.subr.mxu0 0.0
    %3241 = vmatpush1.msra.mxu0 %v2572
    %3242 = vmatprep.subr.mxu0 0.0
    %3243 = vmatpush1.msra.mxu0 %v2563
    %3244 = vmatprep.subr.mxu0 0.0
    %3245 = vmatpush2.msra.mxu0 0.0
    %3246 = vmatprep.subr.mxu0 0.0
    %3247 = vmatpush2.msra.mxu0 0.0
    %3248 = vmatprep.subr.mxu0 0.0
    %3249 = vmatpush2.msra.mxu0 0.0
    %3250 = vmatprep.subr.mxu0 0.0
    %3251 = vmatpush2.msra.mxu0 0.0
    %3252 = vmatprep.subr.mxu0 0.0
    %3253 = vmatpush2.msra.mxu0 0.0
    %3254 = vmatprep.subr.mxu0 0.0
    %3255 = vmatpush2.msra.mxu0 0.0
    %3256 = vmatprep.subr.mxu0 0.0
    %3257 = vmatpush2.msra.mxu0 0.0
    %3258 = vmatprep.subr.mxu0 0.0
    %3259 = vmatpush2.msra.mxu0 0.0
    %3260 = vmatprep.subr.mxu0 0.0
    %3261 = vmatpush2.msra.mxu0 0.0
    %3262 = vmatprep.subr.mxu0 0.0
    %3263 = vmatpush2.msra.mxu0 0.0
    %3264 = vmatprep.subr.mxu0 0.0
    %3265 = vmatpush2.msra.mxu0 0.0
    %3266 = vmatprep.subr.mxu0 0.0
    %3267 = vmatpush2.msra.mxu0 0.0
    %3268 = vmatprep.subr.mxu0 0.0
    %3269 = vmatpush2.msra.mxu0 0.0
    %3270 = vmatprep.subr.mxu0 0.0
    %3271 = vmatpush2.msra.mxu0 0.0
    %3272 = vmatprep.subr.mxu0 0.0
    %3273 = vmatpush2.msra.mxu0 0.0
    %3274 = vmatprep.subr.mxu0 0.0
    %3275 = vmatpush2.msra.mxu0 0.0
    %3276 = vmatprep.mubr.f32.mxu0 0.0
    %3277 = vmatmul.mubr.f32.gmra.mxu0 %v3210
    %v3278 = vpop.f32.mrf.mxu0
    %v3279 = vadd.f32 0.0, %v3278
    %v3280 = vpop.f32.mrf.mxu0
    %3281 = vdwg.mxu0
    %s3282 = scalar_lea.vmem %s12, 320
    %v3283 = vld [vmem:[%s3282] sm:$0xff]
    %v3284 = vld [vmem:[%s3282 + $0x8] sm:$0xff]
    %v3285 = vld [vmem:[%s3282 + $0x10] sm:$0xff]
    %v3286 = vld [vmem:[%s3282 + $0x18] sm:$0xff]
    %v3287 = vld [vmem:[%s3282 + $0x20] sm:$0xff]
    %v3288 = vld [vmem:[%s3282 + $0x28] sm:$0xff]
    %v3289 = vld [vmem:[%s3282 + $0x30] sm:$0xff]
    %v3290 = vld [vmem:[%s3282 + $0x38] sm:$0xff]
    %v3291 = vld [vmem:[%s3282 + $0x40] sm:$0xff]
    %v3292 = vld [vmem:[%s3282 + $0x48] sm:$0xff]
    %v3294 = vsel %vm2740, %v3279, 0
    %3296 = vmatprep.subr.mxu0 0.0
    %3297 = vmatpush1.msra.mxu0 0.0
    %3298 = vmatprep.subr.mxu0 0.0
    %3299 = vmatpush1.msra.mxu0 0.0
    %3300 = vmatprep.subr.mxu0 0.0
    %3301 = vmatpush1.msra.mxu0 0.0
    %3302 = vmatprep.subr.mxu0 0.0
    %3303 = vmatpush1.msra.mxu0 0.0
    %3304 = vmatprep.subr.mxu0 0.0
    %3305 = vmatpush1.msra.mxu0 0.0
    %3306 = vmatprep.subr.mxu0 0.0
    %3307 = vmatpush1.msra.mxu0 0.0
    %3308 = vmatprep.subr.mxu0 0.0
    %3309 = vmatpush1.msra.mxu0 %v3292
    %3310 = vmatprep.subr.mxu0 0.0
    %3311 = vmatpush1.msra.mxu0 %v3291
    %3312 = vmatprep.subr.mxu0 0.0
    %3313 = vmatpush1.msra.mxu0 %v3290
    %3314 = vmatprep.subr.mxu0 0.0
    %3315 = vmatpush1.msra.mxu0 %v3289
    %3316 = vmatprep.subr.mxu0 0.0
    %3317 = vmatpush1.msra.mxu0 %v3288
    %3318 = vmatprep.subr.mxu0 0.0
    %3319 = vmatpush1.msra.mxu0 %v3287
    %3320 = vmatprep.subr.mxu0 0.0
    %3321 = vmatpush1.msra.mxu0 %v3286
    %3322 = vmatprep.subr.mxu0 0.0
    %3323 = vmatpush1.msra.mxu0 %v3285
    %3324 = vmatprep.subr.mxu0 0.0
    %3325 = vmatpush1.msra.mxu0 %v3284
    %3326 = vmatprep.subr.mxu0 0.0
    %3327 = vmatpush1.msra.mxu0 %v3283
    %3328 = vmatprep.subr.mxu0 0.0
    %3329 = vmatpush2.msra.mxu0 0.0
    %3330 = vmatprep.subr.mxu0 0.0
    %3331 = vmatpush2.msra.mxu0 0.0
    %3332 = vmatprep.subr.mxu0 0.0
    %3333 = vmatpush2.msra.mxu0 0.0
    %3334 = vmatprep.subr.mxu0 0.0
    %3335 = vmatpush2.msra.mxu0 0.0
    %3336 = vmatprep.subr.mxu0 0.0
    %3337 = vmatpush2.msra.mxu0 0.0
    %3338 = vmatprep.subr.mxu0 0.0
    %3339 = vmatpush2.msra.mxu0 0.0
    %3340 = vmatprep.subr.mxu0 0.0
    %3341 = vmatpush2.msra.mxu0 0.0
    %3342 = vmatprep.subr.mxu0 0.0
    %3343 = vmatpush2.msra.mxu0 0.0
    %3344 = vmatprep.subr.mxu0 0.0
    %3345 = vmatpush2.msra.mxu0 0.0
    %3346 = vmatprep.subr.mxu0 0.0
    %3347 = vmatpush2.msra.mxu0 0.0
    %3348 = vmatprep.subr.mxu0 0.0
    %3349 = vmatpush2.msra.mxu0 0.0
    %3350 = vmatprep.subr.mxu0 0.0
    %3351 = vmatpush2.msra.mxu0 0.0
    %3352 = vmatprep.subr.mxu0 0.0
    %3353 = vmatpush2.msra.mxu0 0.0
    %3354 = vmatprep.subr.mxu0 0.0
    %3355 = vmatpush2.msra.mxu0 0.0
    %3356 = vmatprep.subr.mxu0 0.0
    %3357 = vmatpush2.msra.mxu0 0.0
    %3358 = vmatprep.subr.mxu0 0.0
    %3359 = vmatpush2.msra.mxu0 0.0
    %3360 = vmatprep.mubr.f32.mxu0 0.0
    %3361 = vmatmul.mubr.f32.gmra.mxu0 %v3294
    %v3362 = vpop.f32.mrf.mxu0
    %v3363 = vadd.f32 0.0, %v3362
    %v3364 = vpop.f32.mrf.mxu0
    %3365 = vdwg.mxu0
    %v3366 = vadd.f32 %v3206, %v3363
    %v3367 = vld [vmem:[%s13] sm:$0x1]
    %v3369 = vlaneseq
    %v3370 = vshrl.u32 %v3369, 7
    %v3371 = vsub.s32 0, %v3370
    %v3372 = vrot.slane %v3367, %v3371
    %v3374 = vadd.f32 %v3366, %v3372
    %v3375 = vmax.f32 %v3374, 0.0
    %v3376 = vld [vmem:[%s14] sm:$0xff]
    %v3377 = vld [vmem:[%s14 + $0x8] sm:$0xff]
    %v3378 = vld [vmem:[%s14 + $0x10] sm:$0xff]
    %v3379 = vld [vmem:[%s14 + $0x18] sm:$0xff]
    %v3380 = vld [vmem:[%s14 + $0x20] sm:$0xff]
    %v3381 = vld [vmem:[%s14 + $0x28] sm:$0xff]
    %v3382 = vld [vmem:[%s14 + $0x30] sm:$0xff]
    %v3383 = vld [vmem:[%s14 + $0x38] sm:$0xff]
    %v3384 = vld [vmem:[%s14 + $0x40] sm:$0xff]
    %v3385 = vld [vmem:[%s14 + $0x48] sm:$0xff]
    %v3386 = vld [vmem:[%s14 + $0x50] sm:$0xff]
    %v3387 = vld [vmem:[%s14 + $0x58] sm:$0xff]
    %v3388 = vld [vmem:[%s14 + $0x60] sm:$0xff]
    %v3389 = vld [vmem:[%s14 + $0x68] sm:$0xff]
    %v3390 = vld [vmem:[%s14 + $0x70] sm:$0xff]
    %v3391 = vld [vmem:[%s15] sm:$0x1]
    %v3393 = vlaneseq
    %v3394 = vshrl.u32 %v3393, 7
    %v3395 = vsub.s32 0, %v3394
    %v3396 = vrot.slane %v3391, %v3395
    %vm3398 = vcmask 982016
    %v3400 = vsel %vm3398, %v3375, 0
    %3402 = vmatprep.subr.mxu0 0.0
    %3403 = vmatpush1.msra.mxu0 0.0
    %3404 = vmatprep.subr.mxu0 0.0
    %3405 = vmatpush1.msra.mxu0 %v3390
    %3406 = vmatprep.subr.mxu0 0.0
    %3407 = vmatpush1.msra.mxu0 %v3389
    %3408 = vmatprep.subr.mxu0 0.0
    %3409 = vmatpush1.msra.mxu0 %v3388
    %3410 = vmatprep.subr.mxu0 0.0
    %3411 = vmatpush1.msra.mxu0 %v3387
    %3412 = vmatprep.subr.mxu0 0.0
    %3413 = vmatpush1.msra.mxu0 %v3386
    %3414 = vmatprep.subr.mxu0 0.0
    %3415 = vmatpush1.msra.mxu0 %v3385
    %3416 = vmatprep.subr.mxu0 0.0
    %3417 = vmatpush1.msra.mxu0 %v3384
    %3418 = vmatprep.subr.mxu0 0.0
    %3419 = vmatpush1.msra.mxu0 %v3383
    %3420 = vmatprep.subr.mxu0 0.0
    %3421 = vmatpush1.msra.mxu0 %v3382
    %3422 = vmatprep.subr.mxu0 0.0
    %3423 = vmatpush1.msra.mxu0 %v3381
    %3424 = vmatprep.subr.mxu0 0.0
    %3425 = vmatpush1.msra.mxu0 %v3380
    %3426 = vmatprep.subr.mxu0 0.0
    %3427 = vmatpush1.msra.mxu0 %v3379
    %3428 = vmatprep.subr.mxu0 0.0
    %3429 = vmatpush1.msra.mxu0 %v3378
    %3430 = vmatprep.subr.mxu0 0.0
    %3431 = vmatpush1.msra.mxu0 %v3377
    %3432 = vmatprep.subr.mxu0 0.0
    %3433 = vmatpush1.msra.mxu0 %v3376
    %3434 = vmatprep.subr.mxu0 0.0
    %3435 = vmatpush2.msra.mxu0 0.0
    %3436 = vmatprep.subr.mxu0 0.0
    %3437 = vmatpush2.msra.mxu0 0.0
    %3438 = vmatprep.subr.mxu0 0.0
    %3439 = vmatpush2.msra.mxu0 0.0
    %3440 = vmatprep.subr.mxu0 0.0
    %3441 = vmatpush2.msra.mxu0 0.0
    %3442 = vmatprep.subr.mxu0 0.0
    %3443 = vmatpush2.msra.mxu0 0.0
    %3444 = vmatprep.subr.mxu0 0.0
    %3445 = vmatpush2.msra.mxu0 0.0
    %3446 = vmatprep.subr.mxu0 0.0
    %3447 = vmatpush2.msra.mxu0 0.0
    %3448 = vmatprep.subr.mxu0 0.0
    %3449 = vmatpush2.msra.mxu0 0.0
    %3450 = vmatprep.subr.mxu0 0.0
    %3451 = vmatpush2.msra.mxu0 0.0
    %3452 = vmatprep.subr.mxu0 0.0
    %3453 = vmatpush2.msra.mxu0 0.0
    %3454 = vmatprep.subr.mxu0 0.0
    %3455 = vmatpush2.msra.mxu0 0.0
    %3456 = vmatprep.subr.mxu0 0.0
    %3457 = vmatpush2.msra.mxu0 0.0
    %3458 = vmatprep.subr.mxu0 0.0
    %3459 = vmatpush2.msra.mxu0 0.0
    %3460 = vmatprep.subr.mxu0 0.0
    %3461 = vmatpush2.msra.mxu0 0.0
    %3462 = vmatprep.subr.mxu0 0.0
    %3463 = vmatpush2.msra.mxu0 0.0
    %3464 = vmatprep.subr.mxu0 0.0
    %3465 = vmatpush2.msra.mxu0 0.0
    %3466 = vmatprep.mubr.f32.mxu0 0.0
    %3467 = vmatmul.mubr.f32.gmra.mxu0 %v3400
    %v3468 = vpop.f32.mrf.mxu0
    %v3469 = vadd.f32 %v3396, %v3468
    %v3470 = vpop.f32.mrf.mxu0
    %3471 = vdwg.mxu0
    %v3472 = vmax.f32 %v3469, 0.0
    %v3473 = vld [vmem:[%s16] sm:$0xff]
    %v3474 = vld [vmem:[%s16 + $0x8] sm:$0xff]
    %v3475 = vld [vmem:[%s16 + $0x10] sm:$0xff]
    %v3476 = vld [vmem:[%s16 + $0x18] sm:$0xff]
    %v3477 = vld [vmem:[%s16 + $0x20] sm:$0xff]
    %v3478 = vld [vmem:[%s16 + $0x28] sm:$0xff]
    %v3479 = vld [vmem:[%s16 + $0x30] sm:$0xff]
    %v3480 = vld [vmem:[%s16 + $0x38] sm:$0xff]
    %v3481 = vld [vmem:[%s16 + $0x40] sm:$0xff]
    %v3482 = vld [vmem:[%s16 + $0x48] sm:$0xff]
    %v3483 = vld [vmem:[%s16 + $0x50] sm:$0xf]
    %v3484 = vld [vmem:[%s17] sm:$0x1]
    %v3486 = vlaneseq
    %v3487 = vshrl.u32 %v3486, 7
    %v3488 = vsub.s32 0, %v3487
    %v3489 = vrot.slane %v3484, %v3488
    %vm3491 = vcmask 687104
    %v3493 = vsel %vm3491, %v3472, 0
    %v3496 = vsel %vm626, %v3483, 0
    %3498 = vmatprep.subr.mxu0 0.0
    %3499 = vmatpush1.msra.mxu0 0.0
    %3500 = vmatprep.subr.mxu0 0.0
    %3501 = vmatpush1.msra.mxu0 0.0
    %3502 = vmatprep.subr.mxu0 0.0
    %3503 = vmatpush1.msra.mxu0 0.0
    %3504 = vmatprep.subr.mxu0 0.0
    %3505 = vmatpush1.msra.mxu0 0.0
    %3506 = vmatprep.subr.mxu0 0.0
    %3507 = vmatpush1.msra.mxu0 0.0
    %3508 = vmatprep.subr.mxu0 0.0
    %3509 = vmatpush1.msra.mxu0 %v3496
    %3510 = vmatprep.subr.mxu0 0.0
    %3511 = vmatpush1.msra.mxu0 %v3482
    %3512 = vmatprep.subr.mxu0 0.0
    %3513 = vmatpush1.msra.mxu0 %v3481
    %3514 = vmatprep.subr.mxu0 0.0
    %3515 = vmatpush1.msra.mxu0 %v3480
    %3516 = vmatprep.subr.mxu0 0.0
    %3517 = vmatpush1.msra.mxu0 %v3479
    %3518 = vmatprep.subr.mxu0 0.0
    %3519 = vmatpush1.msra.mxu0 %v3478
    %3520 = vmatprep.subr.mxu0 0.0
    %3521 = vmatpush1.msra.mxu0 %v3477
    %3522 = vmatprep.subr.mxu0 0.0
    %3523 = vmatpush1.msra.mxu0 %v3476
    %3524 = vmatprep.subr.mxu0 0.0
    %3525 = vmatpush1.msra.mxu0 %v3475
    %3526 = vmatprep.subr.mxu0 0.0
    %3527 = vmatpush1.msra.mxu0 %v3474
    %3528 = vmatprep.subr.mxu0 0.0
    %3529 = vmatpush1.msra.mxu0 %v3473
    %3530 = vmatprep.subr.mxu0 0.0
    %3531 = vmatpush2.msra.mxu0 0.0
    %3532 = vmatprep.subr.mxu0 0.0
    %3533 = vmatpush2.msra.mxu0 0.0
    %3534 = vmatprep.subr.mxu0 0.0
    %3535 = vmatpush2.msra.mxu0 0.0
    %3536 = vmatprep.subr.mxu0 0.0
    %3537 = vmatpush2.msra.mxu0 0.0
    %3538 = vmatprep.subr.mxu0 0.0
    %3539 = vmatpush2.msra.mxu0 0.0
    %3540 = vmatprep.subr.mxu0 0.0
    %3541 = vmatpush2.msra.mxu0 0.0
    %3542 = vmatprep.subr.mxu0 0.0
    %3543 = vmatpush2.msra.mxu0 0.0
    %3544 = vmatprep.subr.mxu0 0.0
    %3545 = vmatpush2.msra.mxu0 0.0
    %3546 = vmatprep.subr.mxu0 0.0
    %3547 = vmatpush2.msra.mxu0 0.0
    %3548 = vmatprep.subr.mxu0 0.0
    %3549 = vmatpush2.msra.mxu0 0.0
    %3550 = vmatprep.subr.mxu0 0.0
    %3551 = vmatpush2.msra.mxu0 0.0
    %3552 = vmatprep.subr.mxu0 0.0
    %3553 = vmatpush2.msra.mxu0 0.0
    %3554 = vmatprep.subr.mxu0 0.0
    %3555 = vmatpush2.msra.mxu0 0.0
    %3556 = vmatprep.subr.mxu0 0.0
    %3557 = vmatpush2.msra.mxu0 0.0
    %3558 = vmatprep.subr.mxu0 0.0
    %3559 = vmatpush2.msra.mxu0 0.0
    %3560 = vmatprep.subr.mxu0 0.0
    %3561 = vmatpush2.msra.mxu0 0.0
    %3562 = vmatprep.mubr.f32.mxu0 0.0
    %3563 = vmatmul.mubr.f32.gmra.mxu0 %v3493
    %v3564 = vpop.f32.mrf.mxu0
    %v3565 = vadd.f32 %v3489, %v3564
    %v3566 = vpop.f32.mrf.mxu0
    %3567 = vdwg.mxu0
    %vm3568 = vcmask 74752
    %v3569 = vsel %vm3568, %v3565, -inf
    %3570 = vmax.xlane.f32.xlu0 %v3569
    %v3571 = vpop.xlane.xlu0 %3570
    %v3572 = vsub.f32 %v3565, %v3571
    %v3573 = vmul.f32 %v3572, 1.442695
    %v3574 = vpow.pop %v3573
    %v3575 = vsel %vm3568, %v3574, 0.0
    %3576 = vadd.xlane.f32.xlu0 %v3575
    %v3577 = vpop.xlane.xlu0 %3576
    %v3578 = vlog2.pop %v3577
    %v3579 = vmul.f32 %v3578, 0.6931472
    %v3580 = vsub.f32 %v3572, %v3579
    %3581 = vst.msk [vmem:[#allocation2] sm:$0x3] %vm3568, %v3580
    // Predicated region
    $region74: #{lenet_forward.1} parent=1 // pred_check
      _
    $region75: #{lenet_forward.1} parent=1 // pred_check_branch
      %3583 = sbr.rel (0) target = $region77
    $region76: #{lenet_forward.1} parent=1 // pred_region
      %s3585 = ssub.s32 32, 32
      %3586 = vsyncadd [#allocation3], %s3585
      %s3588 = sshll.u32 [#allocation2], 4
      %s3589 = int_to_ptr.vmem [resolvable:$true] %s3588
      %3591 = dma.vmem_to_hbm [thread:$0]  %s3589, 32, %s18, [#allocation3]
    $region77: #{lenet_forward.1} parent=1 // pred_fallthru
      _
    // Predicated region
    $region78: #{lenet_forward.1} parent=1 // pred_check
      _
    $region79: #{lenet_forward.1} parent=1 // pred_check_branch
      %3593 = sbr.rel (0) target = $region81
    $region80: #{lenet_forward.1} parent=1 // pred_region
      %3594 = dma.done [#allocation3], 32
    $region81: #{lenet_forward.1} parent=1 // pred_fallthru
      _
    %3595 = vsyncpa [#allocation3], 1

</llo_original>
